<compile_context>
chip_gen: v5e
topology: v5e:2x2
jax: 0.10.0
libtpu: 0.0.40
codegen_flags: <defaults>
</compile_context>

<pallas_src>
import functools
import math

import jax
import jax.numpy as jnp
from jax.experimental import pallas as pl
from jax.experimental.pallas import tpu as pltpu


def _round_up(x, m):
    return (x + m - 1) // m * m


# ----------------------------------------------------------------------------
# Kernel 1: tiled GEMM with fused bias + (optional) ReLU epilogue.
# ----------------------------------------------------------------------------
def _gemm_bias_act_kernel(a_ref, w_ref, b_ref, o_ref, acc_ref, *, apply_relu):
    k = pl.program_id(2)

    @pl.when(k == 0)
    def _():
        acc_ref[...] = jnp.zeros_like(acc_ref)

    acc_ref[...] += jnp.dot(a_ref[...], w_ref[...],
                            preferred_element_type=jnp.float32)

    @pl.when(k == pl.num_programs(2) - 1)
    def _():
        out = acc_ref[...] + b_ref[...].astype(jnp.float32)
        if apply_relu:
            out = jnp.maximum(out, 0.0)
        o_ref[...] = out.astype(o_ref.dtype)


def _matmul_bias_act(a, w, b, *, apply_relu, tm=256, tn=256, tk=512):
    """out = act(a @ w + b); a:(M,K) f32, w:(K,N) f32, b:(N,) f32."""
    M, K = a.shape
    K2, N = w.shape
    assert K == K2
    tm = int(min(tm, _round_up(M, 8)))
    tn = int(min(tn, _round_up(N, 128)))
    tk = int(min(tk, _round_up(K, 128)))
    Mp, Kp, Np = _round_up(M, tm), _round_up(K, tk), _round_up(N, tn)

    a_p = jnp.pad(a, ((0, Mp - M), (0, Kp - K)))
    w_p = jnp.pad(w, ((0, Kp - K), (0, Np - N)))
    b_p = jnp.pad(b.reshape(1, N), ((0, 0), (0, Np - N)))

    grid = (Mp // tm, Np // tn, Kp // tk)
    out = pl.pallas_call(
        functools.partial(_gemm_bias_act_kernel, apply_relu=apply_relu),
        out_shape=jax.ShapeDtypeStruct((Mp, Np), jnp.float32),
        grid=grid,
        in_specs=[
            pl.BlockSpec((tm, tk), lambda i, j, k: (i, k)),
            pl.BlockSpec((tk, tn), lambda i, j, k: (k, j)),
            pl.BlockSpec((1, tn), lambda i, j, k: (0, j)),
        ],
        out_specs=pl.BlockSpec((tm, tn), lambda i, j, k: (i, j)),
        scratch_shapes=[pltpu.VMEM((tm, tn), jnp.float32)],
        compiler_params=pltpu.CompilerParams(
            dimension_semantics=("parallel", "parallel", "arbitrary")),
        cost_estimate=pl.CostEstimate(
            flops=2 * Mp * Kp * Np,
            transcendentals=0,
            bytes_accessed=4 * (Mp * Kp + Kp * Np + Mp * Np)),
    )(a_p, w_p, b_p)
    return out[:M, :N]


# ----------------------------------------------------------------------------
# Kernel 2: fused AdaptiveAvgPool2d(1) + 1x1 conv (linear head).
# ----------------------------------------------------------------------------
def _pool_head_kernel(x_ref, w_ref, b_ref, o_ref, *, inv_hw):
    # x_ref: (N, HW, C), w_ref: (C, S), b_ref: (1, S)
    x = x_ref[...].astype(jnp.float32)
    pooled = jnp.sum(x, axis=1) * inv_hw                   # (N, C), constant mul
    out = jnp.dot(pooled, w_ref[...].astype(jnp.float32),
                  preferred_element_type=jnp.float32)
    o_ref[...] = (out + b_ref[...].astype(jnp.float32)).astype(o_ref.dtype)


def _global_pool_head(feats, w, b):
    N, HW, C = feats.shape
    S = w.shape[1]
    return pl.pallas_call(
        functools.partial(_pool_head_kernel, inv_hw=1.0 / HW),
        out_shape=jax.ShapeDtypeStruct((N, S), jnp.float32),
        grid=(1,),
        in_specs=[
            pl.BlockSpec((N, HW, C), lambda i: (0, 0, 0)),
            pl.BlockSpec((C, S), lambda i: (0, 0)),
            pl.BlockSpec((1, S), lambda i: (0, 0)),
        ],
        out_specs=pl.BlockSpec((N, S), lambda i: (0, 0)),
        compiler_params=pltpu.CompilerParams(
            dimension_semantics=("arbitrary",)),
    )(feats, w, b.reshape(1, S))


# ----------------------------------------------------------------------------
# Conv layer = im2col (layout plumbing) + Pallas GEMM kernel.
# ----------------------------------------------------------------------------
def _conv2d_bias_relu(x_pad, w_hwio, b, *, stride):
    """x_pad: (N, Hp, Wp, Cin) already padded; w_hwio: (KH, KW, Cin, Cout)."""
    Nb, Hp, Wp, Cin = x_pad.shape
    KH, KW, _, Cout = w_hwio.shape
    Ho = (Hp - KH) // stride + 1
    Wo = (Wp - KW) // stride + 1
    cols = []
    for i in range(KH):
        for j in range(KW):
            cols.append(
                x_pad[:, i:i + stride * Ho:stride, j:j + stride * Wo:stride, :])
    patches = jnp.concatenate(cols, axis=-1)               # (N, Ho, Wo, KH*KW*Cin)
    patches = patches.reshape(Nb * Ho * Wo, KH * KW * Cin)
    wmat = w_hwio.reshape(KH * KW * Cin, Cout)
    out = _matmul_bias_act(patches, wmat, b, apply_relu=True)
    return out.reshape(Nb, Ho, Wo, Cout)


def style_encoder_forward(x_nchw, params):
    """x_nchw: (N, C_in, H, W) -> (N, style_dim, 1, 1)."""
    y = jnp.transpose(x_nchw, (0, 2, 3, 1)).astype(jnp.float32)   # NHWC
    for layer in params["convs"]:
        p = layer["pad"]
        y = jnp.pad(y, ((0, 0), (p, p), (p, p), (0, 0)), mode=layer["pad_mode"])
        y = _conv2d_bias_relu(y, layer["w"], layer["b"], stride=layer["stride"])
    Nb, Ho, Wo, C = y.shape
    feats = y.reshape(Nb, Ho * Wo, C)
    out = _global_pool_head(feats, params["head_w"], params["head_b"])
    return out.reshape(Nb, -1, 1, 1)


# ----------------------------------------------------------------------------
# Parameter init mirroring the PyTorch module structure.
# ----------------------------------------------------------------------------
def init_style_encoder_params(key, in_channels=3, dim=64, n_downsample=2,
                              style_dim=8):
    def conv_params(k, kh, kw, cin, cout):
        bound = 1.0 / math.sqrt(kh * kw * cin)
        kw_key, kb_key = jax.random.split(k)
        w = jax.random.uniform(kw_key, (kh, kw, cin, cout), jnp.float32,
                               -bound, bound)
        b = jax.random.uniform(kb_key, (cout,), jnp.float32, -bound, bound)
        return w, b

    n_convs = 1 + 2 + max(n_downsample - 2, 0)
    keys = jax.random.split(key, n_convs + 1)
    ki = 0
    convs = []
    d = dim
    w, b = conv_params(keys[ki], 7, 7, in_channels, d); ki += 1
    convs.append(dict(w=w, b=b, stride=1, pad=3, pad_mode="reflect"))
    for _ in range(2):
        w, b = conv_params(keys[ki], 4, 4, d, d * 2); ki += 1
        convs.append(dict(w=w, b=b, stride=2, pad=1, pad_mode="constant"))
        d *= 2
    for _ in range(n_downsample - 2):
        w, b = conv_params(keys[ki], 4, 4, d, d); ki += 1
        convs.append(dict(w=w, b=b, stride=2, pad=1, pad_mode="constant"))
    hw, hb = conv_params(keys[ki], 1, 1, d, style_dim)
    return dict(convs=convs, head_w=hw.reshape(d, style_dim), head_b=hb)


# ----------------------------------------------------------------------------
# Pure-JAX reference (same math, lax.conv) for correctness checking.
# ----------------------------------------------------------------------------
def style_encoder_ref(x_nchw, params):
    y = jnp.transpose(x_nchw, (0, 2, 3, 1)).astype(jnp.float32)
    for layer in params["convs"]:
        p = layer["pad"]
        y = jnp.pad(y, ((0, 0), (p, p), (p, p), (0, 0)), mode=layer["pad_mode"])
        y = jax.lax.conv_general_dilated(
            y, layer["w"], (layer["stride"], layer["stride"]), "VALID",
            dimension_numbers=("NHWC", "HWIO", "NHWC"),
            precision=jax.lax.Precision.HIGHEST) + layer["b"]
        y = jnp.maximum(y, 0.0)
    pooled = jnp.mean(y, axis=(1, 2))
    out = jnp.dot(pooled, params["head_w"],
                  precision=jax.lax.Precision.HIGHEST) + params["head_b"]
    return out.reshape(out.shape[0], -1, 1, 1)


if __name__ == "__main__":
    key = jax.random.PRNGKey(0)
    kx, kp = jax.random.split(key)

    # Small shapes consistent with the module: batch=2, in_channels=3, 16x16.
    x = jax.random.normal(kx, (2, 3, 16, 16), dtype=jnp.float32)
    params = init_style_encoder_params(kp)

    fwd = jax.jit(lambda inp: style_encoder_forward(inp, params))
    out = jax.block_until_ready(fwd(x))

    ref = jax.block_until_ready(style_encoder_ref(x, params))

    assert out.shape == (2, 8, 1, 1), out.shape
    err = float(jnp.max(jnp.abs(out - ref)))
    assert err < 3e-2, f"max abs err {err}"
    print("KERNEL_OK")
</pallas_src>

<mosaic_0001>
module attributes {stable_mosaic.version = 11 : i64} {
  func.func @_gemm_bias_act_kernel(%arg0: i32, %arg1: i32, %arg2: i32, %arg3: memref<256x256xf32, #tpu.memory_space<vmem>>, %arg4: memref<256x128xf32, #tpu.memory_space<vmem>>, %arg5: memref<1x128xf32, #tpu.memory_space<vmem>>, %arg6: memref<256x128xf32, #tpu.memory_space<vmem>>, %arg7: memref<256x128xf32, #tpu.memory_space<vmem>>) attributes {dimension_semantics = [#tpu.dimension_semantics<parallel>, #tpu.dimension_semantics<parallel>, #tpu.dimension_semantics<arbitrary>], iteration_bounds = array<i64: 2, 1, 1>, scalar_prefetch = 0 : i64, scratch_operands = 1 : i64, tpu.core_type = #tpu.core_type<tc>, window_params = [{transform_indices = @transform_0, window_bounds = array<i64: 256, 256>}, {transform_indices = @transform_1, window_bounds = array<i64: 256, 128>}, {transform_indices = @transform_2, window_bounds = array<i64: 1, 128>}, {transform_indices = @transform_3, window_bounds = array<i64: 256, 128>}]} {
    %c0_i32 = arith.constant 0 : i32
    %0 = arith.cmpi eq, %arg2, %c0_i32 : i32
    %1 = arith.extui %0 : i1 to i32
    %c0_i32_0 = arith.constant 0 : i32
    %2 = arith.cmpi ne, %1, %c0_i32_0 : i32
    scf.if %2 {
      %cst_10 = arith.constant 0.000000e+00 : f32
      %12 = vector.broadcast %cst_10 : f32 to vector<256x128xf32>
      %c0_11 = arith.constant 0 : index
      %c0_12 = arith.constant 0 : index
      %13 = vector.load %arg7[%c0_11, %c0_12] : memref<256x128xf32, #tpu.memory_space<vmem>>, vector<256x128xf32>
      tpu.vector_store %arg7[%c0_11, %c0_12], %12 {strides = array<i32>} : memref<256x128xf32, #tpu.memory_space<vmem>>, vector<256x128xf32>,
    } else {
    }
    %c0 = arith.constant 0 : index
    %c0_1 = arith.constant 0 : index
    %3 = vector.load %arg7[%c0, %c0_1] : memref<256x128xf32, #tpu.memory_space<vmem>>, vector<256x128xf32>
    %c0_2 = arith.constant 0 : index
    %c0_3 = arith.constant 0 : index
    %4 = vector.load %arg3[%c0_2, %c0_3] : memref<256x256xf32, #tpu.memory_space<vmem>>, vector<256x256xf32>
    %c0_4 = arith.constant 0 : index
    %c0_5 = arith.constant 0 : index
    %5 = vector.load %arg4[%c0_4, %c0_5] : memref<256x128xf32, #tpu.memory_space<vmem>>, vector<256x128xf32>
    %cst = arith.constant dense<0.000000e+00> : vector<256x128xf32>
    %6 = tpu.matmul %4, %5, %cst {dimension_numbers = #tpu.dot_dimension_numbers<[1], [0], [0], [1], [0, 0, 1, 1], [], []>} : vector<256x256xf32>, vector<256x128xf32>, vector<256x128xf32> -> vector<256x128xf32>
    %7 = arith.addf %3, %6 : vector<256x128xf32>
    %c0_6 = arith.constant 0 : index
    %c0_7 = arith.constant 0 : index
    %8 = vector.load %arg7[%c0_6, %c0_7] : memref<256x128xf32, #tpu.memory_space<vmem>>, vector<256x128xf32>
    tpu.vector_store %arg7[%c0_6, %c0_7], %7 {strides = array<i32>} : memref<256x128xf32, #tpu.memory_space<vmem>>, vector<256x128xf32>,
    %c0_i32_8 = arith.constant 0 : i32
    %9 = arith.cmpi eq, %arg2, %c0_i32_8 : i32
    %10 = arith.extui %9 : i1 to i32
    %c0_i32_9 = arith.constant 0 : i32
    %11 = arith.cmpi ne, %10, %c0_i32_9 : i32
    scf.if %11 {
      %c0_10 = arith.constant 0 : index
      %c0_11 = arith.constant 0 : index
      %12 = vector.load %arg7[%c0_10, %c0_11] : memref<256x128xf32, #tpu.memory_space<vmem>>, vector<256x128xf32>
      %c0_12 = arith.constant 0 : index
      %c0_13 = arith.constant 0 : index
      %13 = vector.load %arg5[%c0_12, %c0_13] : memref<1x128xf32, #tpu.memory_space<vmem>>, vector<1x128xf32>
      %14 = vector.broadcast %13 : vector<1x128xf32> to vector<256x128xf32>
      %15 = arith.addf %12, %14 : vector<256x128xf32>
      %cst_14 = arith.constant 0.000000e+00 : f32
      %16 = vector.broadcast %cst_14 : f32 to vector<256x128xf32>
      %17 = arith.maximumf %15, %16 : vector<256x128xf32>
      %c0_15 = arith.constant 0 : index
      %c0_16 = arith.constant 0 : index
      %18 = vector.load %arg6[%c0_15, %c0_16] : memref<256x128xf32, #tpu.memory_space<vmem>>, vector<256x128xf32>
      tpu.vector_store %arg6[%c0_15, %c0_16], %17 {strides = array<i32>} : memref<256x128xf32, #tpu.memory_space<vmem>>, vector<256x128xf32>,
    } else {
    }
    return
  }
  func.func @transform_0(%arg0: i32, %arg1: i32, %arg2: i32) -> (i32, i32) {
    %c0_i32 = arith.constant 0 : i32
    return %arg0, %arg2 : i32, i32
  }
  func.func @transform_1(%arg0: i32, %arg1: i32, %arg2: i32) -> (i32, i32) {
    %c0_i32 = arith.constant 0 : i32
    return %arg2, %arg1 : i32, i32
  }
  func.func @transform_2(%arg0: i32, %arg1: i32, %arg2: i32) -> (i32, i32) {
    %c0_i32 = arith.constant 0 : i32
    %c0_i32_0 = arith.constant 0 : i32
    return %c0_i32, %arg1 : i32, i32
  }
  func.func @transform_3(%arg0: i32, %arg1: i32, %arg2: i32) -> (i32, i32) {
    %c0_i32 = arith.constant 0 : i32
    return %arg0, %arg1 : i32, i32
  }
}

module attributes {stable_mosaic.version = 11 : i64} {
  func.func @_gemm_bias_act_kernel(%arg0: i32, %arg1: i32, %arg2: i32, %arg3: memref<128x512xf32, #tpu.memory_space<vmem>>, %arg4: memref<512x128xf32, #tpu.memory_space<vmem>>, %arg5: memref<1x128xf32, #tpu.memory_space<vmem>>, %arg6: memref<128x128xf32, #tpu.memory_space<vmem>>, %arg7: memref<128x128xf32, #tpu.memory_space<vmem>>) attributes {dimension_semantics = [#tpu.dimension_semantics<parallel>, #tpu.dimension_semantics<parallel>, #tpu.dimension_semantics<arbitrary>], iteration_bounds = array<i64: 1, 1, 2>, scalar_prefetch = 0 : i64, scratch_operands = 1 : i64, tpu.core_type = #tpu.core_type<tc>, window_params = [{transform_indices = @transform_0, window_bounds = array<i64: 128, 512>}, {transform_indices = @transform_1, window_bounds = array<i64: 512, 128>}, {transform_indices = @transform_2, window_bounds = array<i64: 1, 128>}, {transform_indices = @transform_3, window_bounds = array<i64: 128, 128>}]} {
    %c0_i32 = arith.constant 0 : i32
    %0 = arith.cmpi eq, %arg2, %c0_i32 : i32
    %1 = arith.extui %0 : i1 to i32
    %c0_i32_0 = arith.constant 0 : i32
    %2 = arith.cmpi ne, %1, %c0_i32_0 : i32
    scf.if %2 {
      %cst_9 = arith.constant 0.000000e+00 : f32
      %12 = vector.broadcast %cst_9 : f32 to vector<128x128xf32>
      %c0_10 = arith.constant 0 : index
      %c0_11 = arith.constant 0 : index
      %13 = vector.load %arg7[%c0_10, %c0_11] : memref<128x128xf32, #tpu.memory_space<vmem>>, vector<128x128xf32>
      tpu.vector_store %arg7[%c0_10, %c0_11], %12 {strides = array<i32>} : memref<128x128xf32, #tpu.memory_space<vmem>>, vector<128x128xf32>,
    } else {
    }
    %c0 = arith.constant 0 : index
    %c0_1 = arith.constant 0 : index
    %3 = vector.load %arg7[%c0, %c0_1] : memref<128x128xf32, #tpu.memory_space<vmem>>, vector<128x128xf32>
    %c0_2 = arith.constant 0 : index
    %c0_3 = arith.constant 0 : index
    %4 = vector.load %arg3[%c0_2, %c0_3] : memref<128x512xf32, #tpu.memory_space<vmem>>, vector<128x512xf32>
    %c0_4 = arith.constant 0 : index
    %c0_5 = arith.constant 0 : index
    %5 = vector.load %arg4[%c0_4, %c0_5] : memref<512x128xf32, #tpu.memory_space<vmem>>, vector<512x128xf32>
    %cst = arith.constant dense<0.000000e+00> : vector<128x128xf32>
    %6 = tpu.matmul %4, %5, %cst {dimension_numbers = #tpu.dot_dimension_numbers<[1], [0], [0], [1], [0, 0, 1, 1], [], []>} : vector<128x512xf32>, vector<512x128xf32>, vector<128x128xf32> -> vector<128x128xf32>
    %7 = arith.addf %3, %6 : vector<128x128xf32>
    %c0_6 = arith.constant 0 : index
    %c0_7 = arith.constant 0 : index
    %8 = vector.load %arg7[%c0_6, %c0_7] : memref<128x128xf32, #tpu.memory_space<vmem>>, vector<128x128xf32>
    tpu.vector_store %arg7[%c0_6, %c0_7], %7 {strides = array<i32>} : memref<128x128xf32, #tpu.memory_space<vmem>>, vector<128x128xf32>,
    %c1_i32 = arith.constant 1 : i32
    %9 = arith.cmpi eq, %arg2, %c1_i32 : i32
    %10 = arith.extui %9 : i1 to i32
    %c0_i32_8 = arith.constant 0 : i32
    %11 = arith.cmpi ne, %10, %c0_i32_8 : i32
    scf.if %11 {
      %c0_9 = arith.constant 0 : index
      %c0_10 = arith.constant 0 : index
      %12 = vector.load %arg7[%c0_9, %c0_10] : memref<128x128xf32, #tpu.memory_space<vmem>>, vector<128x128xf32>
      %c0_11 = arith.constant 0 : index
      %c0_12 = arith.constant 0 : index
      %13 = vector.load %arg5[%c0_11, %c0_12] : memref<1x128xf32, #tpu.memory_space<vmem>>, vector<1x128xf32>
      %14 = vector.broadcast %13 : vector<1x128xf32> to vector<128x128xf32>
      %15 = arith.addf %12, %14 : vector<128x128xf32>
      %cst_13 = arith.constant 0.000000e+00 : f32
      %16 = vector.broadcast %cst_13 : f32 to vector<128x128xf32>
      %17 = arith.maximumf %15, %16 : vector<128x128xf32>
      %c0_14 = arith.constant 0 : index
      %c0_15 = arith.constant 0 : index
      %18 = vector.load %arg6[%c0_14, %c0_15] : memref<128x128xf32, #tpu.memory_space<vmem>>, vector<128x128xf32>
      tpu.vector_store %arg6[%c0_14, %c0_15], %17 {strides = array<i32>} : memref<128x128xf32, #tpu.memory_space<vmem>>, vector<128x128xf32>,
    } else {
    }
    return
  }
  func.func @transform_0(%arg0: i32, %arg1: i32, %arg2: i32) -> (i32, i32) {
    %c0_i32 = arith.constant 0 : i32
    return %arg0, %arg2 : i32, i32
  }
  func.func @transform_1(%arg0: i32, %arg1: i32, %arg2: i32) -> (i32, i32) {
    %c0_i32 = arith.constant 0 : i32
    return %arg2, %arg1 : i32, i32
  }
  func.func @transform_2(%arg0: i32, %arg1: i32, %arg2: i32) -> (i32, i32) {
    %c0_i32 = arith.constant 0 : i32
    %c0_i32_0 = arith.constant 0 : i32
    return %c0_i32, %arg1 : i32, i32
  }
  func.func @transform_3(%arg0: i32, %arg1: i32, %arg2: i32) -> (i32, i32) {
    %c0_i32 = arith.constant 0 : i32
    return %arg0, %arg1 : i32, i32
  }
}

module attributes {stable_mosaic.version = 11 : i64} {
  func.func @_gemm_bias_act_kernel(%arg0: i32, %arg1: i32, %arg2: i32, %arg3: memref<32x512xf32, #tpu.memory_space<vmem>>, %arg4: memref<512x256xf32, #tpu.memory_space<vmem>>, %arg5: memref<1x256xf32, #tpu.memory_space<vmem>>, %arg6: memref<32x256xf32, #tpu.memory_space<vmem>>, %arg7: memref<32x256xf32, #tpu.memory_space<vmem>>) attributes {dimension_semantics = [#tpu.dimension_semantics<parallel>, #tpu.dimension_semantics<parallel>, #tpu.dimension_semantics<arbitrary>], iteration_bounds = array<i64: 1, 1, 4>, scalar_prefetch = 0 : i64, scratch_operands = 1 : i64, tpu.core_type = #tpu.core_type<tc>, window_params = [{transform_indices = @transform_0, window_bounds = array<i64: 32, 512>}, {transform_indices = @transform_1, window_bounds = array<i64: 512, 256>}, {transform_indices = @transform_2, window_bounds = array<i64: 1, 256>}, {transform_indices = @transform_3, window_bounds = array<i64: 32, 256>}]} {
    %c0_i32 = arith.constant 0 : i32
    %0 = arith.cmpi eq, %arg2, %c0_i32 : i32
    %1 = arith.extui %0 : i1 to i32
    %c0_i32_0 = arith.constant 0 : i32
    %2 = arith.cmpi ne, %1, %c0_i32_0 : i32
    scf.if %2 {
      %cst_9 = arith.constant 0.000000e+00 : f32
      %12 = vector.broadcast %cst_9 : f32 to vector<32x256xf32>
      %c0_10 = arith.constant 0 : index
      %c0_11 = arith.constant 0 : index
      %13 = vector.load %arg7[%c0_10, %c0_11] : memref<32x256xf32, #tpu.memory_space<vmem>>, vector<32x256xf32>
      tpu.vector_store %arg7[%c0_10, %c0_11], %12 {strides = array<i32>} : memref<32x256xf32, #tpu.memory_space<vmem>>, vector<32x256xf32>,
    } else {
    }
    %c0 = arith.constant 0 : index
    %c0_1 = arith.constant 0 : index
    %3 = vector.load %arg7[%c0, %c0_1] : memref<32x256xf32, #tpu.memory_space<vmem>>, vector<32x256xf32>
    %c0_2 = arith.constant 0 : index
    %c0_3 = arith.constant 0 : index
    %4 = vector.load %arg3[%c0_2, %c0_3] : memref<32x512xf32, #tpu.memory_space<vmem>>, vector<32x512xf32>
    %c0_4 = arith.constant 0 : index
    %c0_5 = arith.constant 0 : index
    %5 = vector.load %arg4[%c0_4, %c0_5] : memref<512x256xf32, #tpu.memory_space<vmem>>, vector<512x256xf32>
    %cst = arith.constant dense<0.000000e+00> : vector<32x256xf32>
    %6 = tpu.matmul %4, %5, %cst {dimension_numbers = #tpu.dot_dimension_numbers<[1], [0], [0], [1], [0, 0, 1, 1], [], []>} : vector<32x512xf32>, vector<512x256xf32>, vector<32x256xf32> -> vector<32x256xf32>
    %7 = arith.addf %3, %6 : vector<32x256xf32>
    %c0_6 = arith.constant 0 : index
    %c0_7 = arith.constant 0 : index
    %8 = vector.load %arg7[%c0_6, %c0_7] : memref<32x256xf32, #tpu.memory_space<vmem>>, vector<32x256xf32>
    tpu.vector_store %arg7[%c0_6, %c0_7], %7 {strides = array<i32>} : memref<32x256xf32, #tpu.memory_space<vmem>>, vector<32x256xf32>,
    %c3_i32 = arith.constant 3 : i32
    %9 = arith.cmpi eq, %arg2, %c3_i32 : i32
    %10 = arith.extui %9 : i1 to i32
    %c0_i32_8 = arith.constant 0 : i32
    %11 = arith.cmpi ne, %10, %c0_i32_8 : i32
    scf.if %11 {
      %c0_9 = arith.constant 0 : index
      %c0_10 = arith.constant 0 : index
      %12 = vector.load %arg7[%c0_9, %c0_10] : memref<32x256xf32, #tpu.memory_space<vmem>>, vector<32x256xf32>
      %c0_11 = arith.constant 0 : index
      %c0_12 = arith.constant 0 : index
      %13 = vector.load %arg5[%c0_11, %c0_12] : memref<1x256xf32, #tpu.memory_space<vmem>>, vector<1x256xf32>
      %14 = vector.broadcast %13 : vector<1x256xf32> to vector<32x256xf32>
      %15 = arith.addf %12, %14 : vector<32x256xf32>
      %cst_13 = arith.constant 0.000000e+00 : f32
      %16 = vector.broadcast %cst_13 : f32 to vector<32x256xf32>
      %17 = arith.maximumf %15, %16 : vector<32x256xf32>
      %c0_14 = arith.constant 0 : index
      %c0_15 = arith.constant 0 : index
      %18 = vector.load %arg6[%c0_14, %c0_15] : memref<32x256xf32, #tpu.memory_space<vmem>>, vector<32x256xf32>
      tpu.vector_store %arg6[%c0_14, %c0_15], %17 {strides = array<i32>} : memref<32x256xf32, #tpu.memory_space<vmem>>, vector<32x256xf32>,
    } else {
    }
    return
  }
  func.func @transform_0(%arg0: i32, %arg1: i32, %arg2: i32) -> (i32, i32) {
    %c0_i32 = arith.constant 0 : i32
    return %arg0, %arg2 : i32, i32
  }
  func.func @transform_1(%arg0: i32, %arg1: i32, %arg2: i32) -> (i32, i32) {
    %c0_i32 = arith.constant 0 : i32
    return %arg2, %arg1 : i32, i32
  }
  func.func @transform_2(%arg0: i32, %arg1: i32, %arg2: i32) -> (i32, i32) {
    %c0_i32 = arith.constant 0 : i32
    %c0_i32_0 = arith.constant 0 : i32
    return %c0_i32, %arg1 : i32, i32
  }
  func.func @transform_3(%arg0: i32, %arg1: i32, %arg2: i32) -> (i32, i32) {
    %c0_i32 = arith.constant 0 : i32
    return %arg0, %arg1 : i32, i32
  }
}

module attributes {stable_mosaic.version = 11 : i64} {
  func.func @_pool_head_kernel(%arg0: i32, %arg1: memref<2x16x256xf32, #tpu.memory_space<vmem>>, %arg2: memref<256x8xf32, #tpu.memory_space<vmem>>, %arg3: memref<1x8xf32, #tpu.memory_space<vmem>>, %arg4: memref<2x8xf32, #tpu.memory_space<vmem>>) attributes {dimension_semantics = [#tpu.dimension_semantics<arbitrary>], iteration_bounds = array<i64: 1>, scalar_prefetch = 0 : i64, scratch_operands = 0 : i64, tpu.core_type = #tpu.core_type<tc>, window_params = [{pipeline_mode = #tpu.pipeline_mode<synchronous>, transform_indices = @transform_0, window_bounds = array<i64: 2, 16, 256>}, {pipeline_mode = #tpu.pipeline_mode<synchronous>, transform_indices = @transform_1, window_bounds = array<i64: 256, 8>}, {pipeline_mode = #tpu.pipeline_mode<synchronous>, transform_indices = @transform_2, window_bounds = array<i64: 1, 8>}, {pipeline_mode = #tpu.pipeline_mode<synchronous>, transform_indices = @transform_3, window_bounds = array<i64: 2, 8>}]} {
    %c0 = arith.constant 0 : index
    %c0_0 = arith.constant 0 : index
    %c0_1 = arith.constant 0 : index
    %0 = vector.load %arg1[%c0, %c0_0, %c0_1] : memref<2x16x256xf32, #tpu.memory_space<vmem>>, vector<2x16x256xf32>
    %cst = arith.constant dense<0.000000e+00> : vector<2x256xf32>
    %1 = vector.multi_reduction <add>, %0, %cst [1] : vector<2x16x256xf32> to vector<2x256xf32>
    %cst_2 = arith.constant 6.250000e-02 : f32
    %2 = vector.broadcast %cst_2 : f32 to vector<2x256xf32>
    %3 = arith.mulf %1, %2 : vector<2x256xf32>
    %c0_3 = arith.constant 0 : index
    %c0_4 = arith.constant 0 : index
    %4 = vector.load %arg2[%c0_3, %c0_4] : memref<256x8xf32, #tpu.memory_space<vmem>>, vector<256x8xf32>
    %cst_5 = arith.constant dense<0.000000e+00> : vector<2x8xf32>
    %5 = tpu.matmul %3, %4, %cst_5 {dimension_numbers = #tpu.dot_dimension_numbers<[1], [0], [0], [1], [0, 0, 1, 1], [], []>} : vector<2x256xf32>, vector<256x8xf32>, vector<2x8xf32> -> vector<2x8xf32>
    %c0_6 = arith.constant 0 : index
    %c0_7 = arith.constant 0 : index
    %6 = vector.load %arg3[%c0_6, %c0_7] : memref<1x8xf32, #tpu.memory_space<vmem>>, vector<1x8xf32>
    %7 = vector.broadcast %6 : vector<1x8xf32> to vector<2x8xf32>
    %8 = arith.addf %5, %7 : vector<2x8xf32>
    %c0_8 = arith.constant 0 : index
    %c0_9 = arith.constant 0 : index
    %9 = vector.load %arg4[%c0_8, %c0_9] : memref<2x8xf32, #tpu.memory_space<vmem>>, vector<2x8xf32>
    tpu.vector_store %arg4[%c0_8, %c0_9], %8 {strides = array<i32>} : memref<2x8xf32, #tpu.memory_space<vmem>>, vector<2x8xf32>,
    return
  }
  func.func @transform_0(%arg0: i32) -> (i32, i32, i32) {
    %c0_i32 = arith.constant 0 : i32
    %c0_i32_0 = arith.constant 0 : i32
    %c0_i32_1 = arith.constant 0 : i32
    %c0_i32_2 = arith.constant 0 : i32
    return %c0_i32, %c0_i32_0, %c0_i32_1 : i32, i32, i32
  }
  func.func @transform_1(%arg0: i32) -> (i32, i32) {
    %c0_i32 = arith.constant 0 : i32
    %c0_i32_0 = arith.constant 0 : i32
    %c0_i32_1 = arith.constant 0 : i32
    return %c0_i32, %c0_i32_0 : i32, i32
  }
  func.func @transform_2(%arg0: i32) -> (i32, i32) {
    %c0_i32 = arith.constant 0 : i32
    %c0_i32_0 = arith.constant 0 : i32
    %c0_i32_1 = arith.constant 0 : i32
    return %c0_i32, %c0_i32_0 : i32, i32
  }
  func.func @transform_3(%arg0: i32) -> (i32, i32) {
    %c0_i32 = arith.constant 0 : i32
    %c0_i32_0 = arith.constant 0 : i32
    %c0_i32_1 = arith.constant 0 : i32
    return %c0_i32, %c0_i32_0 : i32, i32
  }
}

</mosaic_0001>

<llo_original>
// kernel: _lambda_.4
$region0: #{_lambda_.4}
  #allocation0 [shape = 'u32[]', space=smem, size = 0x4, offset = 0x4, fixed_abs, tag = 'smem constant byte address 0x4 - core index']
  #allocation1 [shape = 'u32[72,128]{1,0:T(1,128)}', space=vmem, size = 0x9000, scoped, tag = 'internal scratch']
  #allocation2 [shape = 'f32[256,128]{1,0:T(8,128)}', space=vmem, size = 0x20000, scoped, tag = 'scratch operand']
  %s0 = inlined_call_operand.vmem [shape: f32[512,256], index: 0, kind: input, shape index: {}]
  %s1 = inlined_call_operand.vmem [shape: f32[256,128], index: 1, kind: input, shape index: {}]
  %s2 = inlined_call_operand.vmem [shape: f32[1,128], index: 2, kind: input, shape index: {}]
  %s3 = inlined_call_operand.vmem [shape: f32[512,128], index: 3, kind: output, shape index: {}]
  %s4 = sld [smem:[#allocation0]]
  $region53: #{_lambda_.4} parent=0
    _
  %s6 = ssub.s32 1, %s4
  %s7 = scalar_select 0, %s6, %s4
  loop: start=0, step=1, limit=4
  $region2: #{_lambda_.4} parent=0 // loop_pre_header
    _
  $region3: #{_lambda_.4} parent=0 // loop_header
    %s9 = sphi 0, %s13
    %p10 = scmp.ge.s32.totalorder %s9, 4
    %s16 = sphi 0, %s35
    %s17 = sphi 0, %s31
    %s18 = sphi 0, %s27
    %s19 = sphi 0, %s16
    %s20 = sphi 0, %s17
    %s21 = sphi 0, %s18
    %s22 = sphi 0, %s19
    %s23 = sphi 0, %s20
    %s24 = sphi 0, %s21
    %s40 = sphi 0, %s42
    %s43 = sphi 0, %s40
    %s44 = sphi 0, %s43
    %s60 = sphi 0, %s44
    %s68 = sphi 0, %s70
    %s71 = sphi 0, %s68
    %s72 = sphi 0, %s71
    %s88 = sphi 0, %s72
    %s94 = sphi 0, %s96
    %s97 = sphi 0, %s94
    %s98 = sphi 0, %s97
    %s114 = sphi 0, %s98
    %s122 = sphi 0, %s124
    %s125 = sphi 0, %s122
    %s126 = sphi 0, %s125
    %s142 = sphi 0, %s126
  $region4: #{_lambda_.4} parent=0 // loop_header_branch
    %12 = sbr.rel (%p10) target = $region8
  $region5: #{_lambda_.4} parent=0 // loop_body
    %s14 = ssub.s32 %s9, 1
    %s15 = ssub.s32 %s9, 2
    %s25 = sadd.s32 1, %s18
    %p26 = scmp.ge.s32.totalorder %s25, 1
    %s27 = scalar_select %p26, 0, %s25
    %s28 = sadd.s32 1, %s17
    %s29 = scalar_select %p26, %s28, %s17
    %p30 = scmp.ge.s32.totalorder %s29, 1
    %s31 = scalar_select %p30, 0, %s29
    %s32 = sadd.s32 1, %s16
    %s33 = scalar_select %p30, %s32, %s16
    %p34 = scmp.ge.s32.totalorder %s33, 2
    %s35 = scalar_select %p34, 0, %s33
    %s36 = ssub.s32 %s16, %s35
    %s37 = ssub.s32 %s18, %s27
    %s38 = sor.u32 %s36, %s37
    %p39 = scmp.eq.s32.totalorder %s38, 0
    %s41 = sadd.s32 %s40, 1
    %s42 = scalar_select %p39, %s40, %s41
    %p45 = pneg %p39
    %p46 = scmp.eq.s32.totalorder %s9, 1
    %p47 = por %p45, %p46
    %p48 = scmp.ne.s32.totalorder %s40, %s43
    %p49 = scmp.eq.s32.totalorder %s9, 0
    %p50 = por %p48, %p49
    %p51 = scmp.ne.s32.totalorder %s40, %s43
    %p52 = scmp.eq.s32.totalorder %s14, 1
    %p53 = por %p51, %p52
    %p54 = scmp.ne.s32.totalorder %s43, %s44
    %p55 = scmp.eq.s32.totalorder %s14, 0
    %p56 = por %p54, %p55
    %p57 = scmp.ne.s32.totalorder %s43, %s44
    %p58 = scmp.eq.s32.totalorder %s15, 1
    %p59 = por %p57, %p58
    %p61 = scmp.ne.s32.totalorder %s44, %s60
    %p62 = scmp.eq.s32.totalorder %s15, 0
    %p63 = por %p61, %p62
    %s64 = ssub.s32 %s18, %s27
    %s65 = ssub.s32 %s17, %s31
    %s66 = sor.u32 %s64, %s65
    %p67 = scmp.eq.s32.totalorder %s66, 0
    %s69 = sadd.s32 %s68, 1
    %s70 = scalar_select %p67, %s68, %s69
    %p73 = pneg %p67
    %p74 = scmp.eq.s32.totalorder %s9, 1
    %p75 = por %p73, %p74
    %p76 = scmp.ne.s32.totalorder %s68, %s71
    %p77 = scmp.eq.s32.totalorder %s9, 0
    %p78 = por %p76, %p77
    %p79 = scmp.ne.s32.totalorder %s68, %s71
    %p80 = scmp.eq.s32.totalorder %s14, 1
    %p81 = por %p79, %p80
    %p82 = scmp.ne.s32.totalorder %s71, %s72
    %p83 = scmp.eq.s32.totalorder %s14, 0
    %p84 = por %p82, %p83
    %p85 = scmp.ne.s32.totalorder %s71, %s72
    %p86 = scmp.eq.s32.totalorder %s15, 1
    %p87 = por %p85, %p86
    %p89 = scmp.ne.s32.totalorder %s72, %s88
    %p90 = scmp.eq.s32.totalorder %s15, 0
    %p91 = por %p89, %p90
    %s92 = ssub.s32 %s17, %s31
    %p93 = scmp.eq.s32.totalorder %s92, 0
    %s95 = sadd.s32 %s94, 1
    %s96 = scalar_select %p93, %s94, %s95
    %p99 = pneg %p93
    %p100 = scmp.eq.s32.totalorder %s9, 1
    %p101 = por %p99, %p100
    %p102 = scmp.ne.s32.totalorder %s94, %s97
    %p103 = scmp.eq.s32.totalorder %s9, 0
    %p104 = por %p102, %p103
    %p105 = scmp.ne.s32.totalorder %s94, %s97
    %p106 = scmp.eq.s32.totalorder %s14, 1
    %p107 = por %p105, %p106
    %p108 = scmp.ne.s32.totalorder %s97, %s98
    %p109 = scmp.eq.s32.totalorder %s14, 0
    %p110 = por %p108, %p109
    %p111 = scmp.ne.s32.totalorder %s97, %s98
    %p112 = scmp.eq.s32.totalorder %s15, 1
    %p113 = por %p111, %p112
    %p115 = scmp.ne.s32.totalorder %s98, %s114
    %p116 = scmp.eq.s32.totalorder %s15, 0
    %p117 = por %p115, %p116
    %s118 = ssub.s32 %s16, %s35
    %s119 = ssub.s32 %s17, %s31
    %s120 = sor.u32 %s118, %s119
    %p121 = scmp.eq.s32.totalorder %s120, 0
    %s123 = sadd.s32 %s122, 1
    %s124 = scalar_select %p121, %s122, %s123
    %p127 = pneg %p121
    %p128 = scmp.eq.s32.totalorder %s9, 1
    %p129 = por %p127, %p128
    %p130 = scmp.ne.s32.totalorder %s122, %s125
    %p131 = scmp.eq.s32.totalorder %s9, 0
    %p132 = por %p130, %p131
    %p133 = scmp.ne.s32.totalorder %s122, %s125
    %p134 = scmp.eq.s32.totalorder %s14, 1
    %p135 = por %p133, %p134
    %p136 = scmp.ne.s32.totalorder %s125, %s126
    %p137 = scmp.eq.s32.totalorder %s14, 0
    %p138 = por %p136, %p137
    %p139 = scmp.ne.s32.totalorder %s125, %s126
    %p140 = scmp.eq.s32.totalorder %s15, 1
    %p141 = por %p139, %p140
    %p143 = scmp.ne.s32.totalorder %s126, %s142
    %p144 = scmp.eq.s32.totalorder %s15, 0
    %p145 = por %p143, %p144
    %p146 = scmp.le.s32.totalorder 1, %s9
    %p147 = scmp.lt.s32.totalorder %s9, 3
    %p148 = pnand %p146, %p147
    %p149 = pneg %p148
    // Predicated region
    $region9: #{_lambda_.4} parent=5 // pred_check
      _
    $region10: #{_lambda_.4} parent=5 // pred_check_branch
      %151 = sbr.rel (%p148) target = $region12
    $region11: #{_lambda_.4} parent=5 // pred_region
      %s152 = ssub.s32 %s9, 1
      // Predicated region
      $region13: #{_lambda_.4} parent=11 // pred_check
        %p153 = pneg %p84
      $region14: #{_lambda_.4} parent=11 // pred_check_branch
        %155 = sbr.rel (%p153) target = $region16
      $region15: #{_lambda_.4} parent=11 // pred_region
        %s156 = smul.u32 32, %s21
        %p157 = scmp.lt.s32.totalorder %s156, 31
        %s158 = scalar_select %p157, %s156, 31
        %p159 = scmp.lt.s32.totalorder %s20, 0
        %s160 = scalar_select %p159, %s20, 0
        %s161 = sadd.s32 %s160, %s158
        %s162 = smul.addr %s161, 8
        %s163 = scalar_lea.vmem %s1, %s162
        %s164 = smul.u32 32, %s21
      $region16: #{_lambda_.4} parent=11 // pred_fallthru
        _
      // Predicated region
      $region17: #{_lambda_.4} parent=11 // pred_check
        %p165 = pneg %p110
      $region18: #{_lambda_.4} parent=11 // pred_check_branch
        %167 = sbr.rel (%p165) target = $region20
      $region19: #{_lambda_.4} parent=11 // pred_region
        %p168 = scmp.lt.s32.totalorder %s20, 0
        %s169 = scalar_select %p168, %s20, 0
        %s170 = scalar_lea.vmem %s2, %s169
      $region20: #{_lambda_.4} parent=11 // pred_fallthru
        _
    $region12: #{_lambda_.4} parent=5 // pred_fallthru
      _
    %p171 = scmp.lt.s32.totalorder %s9, 2
    // Predicated region
    $region21: #{_lambda_.4} parent=5 // pred_check
      %p172 = pneg %p171
    $region22: #{_lambda_.4} parent=5 // pred_check_branch
      %174 = sbr.rel (%p172) target = $region24
    $region23: #{_lambda_.4} parent=5 // pred_region
      // Predicated region
      $region25: #{_lambda_.4} parent=23 // pred_check
        %p175 = pneg %p50
      $region26: #{_lambda_.4} parent=23 // pred_check_branch
        %177 = sbr.rel (%p175) target = $region28
      $region27: #{_lambda_.4} parent=23 // pred_region
        %s178 = smul.u32 32, %s16
        %s179 = smul.u32 2, %s18
        %p180 = scmp.lt.s32.totalorder %s178, 63
        %s181 = scalar_select %p180, %s178, 63
        %p182 = scmp.lt.s32.totalorder %s179, 1
        %s183 = scalar_select %p182, %s179, 1
        %s184 = smul.addr %s181, 2
        %s185 = sadd.s32 %s183, %s184
        %s186 = smul.addr %s185, 8
        %s187 = scalar_lea.vmem %s0, %s186
        %s188 = smul.u32 32, %s16
        %s189 = smul.u32 2, %s18
      $region28: #{_lambda_.4} parent=23 // pred_fallthru
        _
    $region24: #{_lambda_.4} parent=5 // pred_fallthru
      _
    %p190 = scmp.le.s32.totalorder 1, %s9
    %p191 = scmp.lt.s32.totalorder %s9, 3
    %p192 = pnand %p190, %p191
    %p193 = pneg %p192
    // Predicated region
    $region29: #{_lambda_.4} parent=5 // pred_check
      _
    $region30: #{_lambda_.4} parent=5 // pred_check_branch
      %195 = sbr.rel (%p192) target = $region32
    $region31: #{_lambda_.4} parent=5 // pred_region
      %s196 = ssub.s32 %s9, 1
      %s197 = smul.u32 32, %s19
      %s198 = smul.u32 2, %s21
      %p199 = scmp.lt.s32.totalorder %s197, 63
      %s200 = scalar_select %p199, %s197, 63
      %p201 = scmp.lt.s32.totalorder %s198, 1
      %s202 = scalar_select %p201, %s198, 1
      %s203 = smul.addr %s200, 2
      %s204 = sadd.s32 %s202, %s203
      %s205 = smul.addr %s204, 8
      %s206 = scalar_lea.vmem %s0, %s205
      %p207 = pneg %p56
      %p208 = pneg %p53
      %s209 = smul.u32 32, %s21
      %p210 = scmp.lt.s32.totalorder %s209, 31
      %s211 = scalar_select %p210, %s209, 31
      %p212 = scmp.lt.s32.totalorder %s20, 0
      %s213 = scalar_select %p212, %s20, 0
      %s214 = sadd.s32 %s213, %s211
      %s215 = smul.addr %s214, 8
      %s216 = scalar_lea.vmem %s1, %s215
      %p217 = pneg %p84
      %p218 = pneg %p81
      %p219 = scmp.lt.s32.totalorder %s20, 0
      %s220 = scalar_select %p219, %s20, 0
      %s221 = scalar_lea.vmem %s2, %s220
      %p222 = pneg %p110
      %p223 = pneg %p107
      %p224 = pneg %p138
      %p225 = pneg %p135
      %s226 = smul.u32 32, %s19
      %p227 = scmp.lt.s32.totalorder %s226, 63
      %s228 = scalar_select %p227, %s226, 63
      %p229 = scmp.lt.s32.totalorder %s20, 0
      %s230 = scalar_select %p229, %s20, 0
      %s231 = sadd.s32 %s230, %s228
      %s232 = smul.addr %s231, 8
      %s233 = scalar_lea.vmem %s3, %s232
      %s234 = smul.u32 32, %s19
      %s235 = smul.u32 2, %s21
      %p236 = scmp.lt.s32.totalorder %s234, 63
      %s237 = scalar_select %p236, %s234, 63
      %p238 = scmp.lt.s32.totalorder %s235, 1
      %s239 = scalar_select %p238, %s235, 1
      %s240 = smul.addr %s237, 2
      %s241 = sadd.s32 %s239, %s240
      %s242 = smul.addr %s241, 8
      %s243 = scalar_lea.vmem %s0, %s242
      %s244 = smul.u32 32, %s19
      %s245 = smul.u32 2, %s21
      %s246 = smul.u32 32, %s21
      %p247 = scmp.lt.s32.totalorder %s246, 31
      %s248 = scalar_select %p247, %s246, 31
      %p249 = scmp.lt.s32.totalorder %s20, 0
      %s250 = scalar_select %p249, %s20, 0
      %s251 = sadd.s32 %s250, %s248
      %s252 = smul.addr %s251, 8
      %s253 = scalar_lea.vmem %s1, %s252
      %s254 = smul.u32 32, %s21
      %p255 = scmp.lt.s32.totalorder %s20, 0
      %s256 = scalar_select %p255, %s20, 0
      %s257 = scalar_lea.vmem %s2, %s256
      %s258 = smul.u32 32, %s19
      %p259 = scmp.lt.s32.totalorder %s258, 63
      %s260 = scalar_select %p259, %s258, 63
      %p261 = scmp.lt.s32.totalorder %s20, 0
      %s262 = scalar_select %p261, %s20, 0
      %s263 = sadd.s32 %s262, %s260
      %s264 = smul.addr %s263, 8
      %s265 = scalar_lea.vmem %s3, %s264
      %s266 = smul.u32 32, %s19
      %p267 = scmp.eq.s32.totalorder %s21, 0
      // Predicated region
      $region33: #{_lambda_.4} parent=31 // pred_check
        %p268 = pneg %p267
      $region34: #{_lambda_.4} parent=31 // pred_check_branch
        %270 = sbr.rel (%p268) target = $region36
      $region35: #{_lambda_.4} parent=31 // pred_region
        %271 = vst [vmem:[#allocation2] sm:$0xff] 0.0
        %272 = vst [vmem:[#allocation2 + $0x8] sm:$0xff] 0.0
        %273 = vst [vmem:[#allocation2 + $0x10] sm:$0xff] 0.0
        %274 = vst [vmem:[#allocation2 + $0x18] sm:$0xff] 0.0
        %275 = vst [vmem:[#allocation2 + $0x20] sm:$0xff] 0.0
        %276 = vst [vmem:[#allocation2 + $0x28] sm:$0xff] 0.0
        %277 = vst [vmem:[#allocation2 + $0x30] sm:$0xff] 0.0
        %278 = vst [vmem:[#allocation2 + $0x38] sm:$0xff] 0.0
        %279 = vst [vmem:[#allocation2 + $0x40] sm:$0xff] 0.0
        %280 = vst [vmem:[#allocation2 + $0x48] sm:$0xff] 0.0
        %281 = vst [vmem:[#allocation2 + $0x50] sm:$0xff] 0.0
        %282 = vst [vmem:[#allocation2 + $0x58] sm:$0xff] 0.0
        %283 = vst [vmem:[#allocation2 + $0x60] sm:$0xff] 0.0
        %284 = vst [vmem:[#allocation2 + $0x68] sm:$0xff] 0.0
        %285 = vst [vmem:[#allocation2 + $0x70] sm:$0xff] 0.0
        %286 = vst [vmem:[#allocation2 + $0x78] sm:$0xff] 0.0
        %287 = vst [vmem:[#allocation2 + $0x80] sm:$0xff] 0.0
        %288 = vst [vmem:[#allocation2 + $0x88] sm:$0xff] 0.0
        %289 = vst [vmem:[#allocation2 + $0x90] sm:$0xff] 0.0
        %290 = vst [vmem:[#allocation2 + $0x98] sm:$0xff] 0.0
        %291 = vst [vmem:[#allocation2 + $0xa0] sm:$0xff] 0.0
        %292 = vst [vmem:[#allocation2 + $0xa8] sm:$0xff] 0.0
        %293 = vst [vmem:[#allocation2 + $0xb0] sm:$0xff] 0.0
        %294 = vst [vmem:[#allocation2 + $0xb8] sm:$0xff] 0.0
        %295 = vst [vmem:[#allocation2 + $0xc0] sm:$0xff] 0.0
        %296 = vst [vmem:[#allocation2 + $0xc8] sm:$0xff] 0.0
        %297 = vst [vmem:[#allocation2 + $0xd0] sm:$0xff] 0.0
        %298 = vst [vmem:[#allocation2 + $0xd8] sm:$0xff] 0.0
        %299 = vst [vmem:[#allocation2 + $0xe0] sm:$0xff] 0.0
        %300 = vst [vmem:[#allocation2 + $0xe8] sm:$0xff] 0.0
        %301 = vst [vmem:[#allocation2 + $0xf0] sm:$0xff] 0.0
        %302 = vst [vmem:[#allocation2 + $0xf8] sm:$0xff] 0.0
      $region36: #{_lambda_.4} parent=31 // pred_fallthru
        _
      %v303 = vld [vmem:[#allocation2] sm:$0xff]
      %v304 = vld [vmem:[#allocation2 + $0x8] sm:$0xff]
      %v305 = vld [vmem:[#allocation2 + $0x10] sm:$0xff]
      %v306 = vld [vmem:[#allocation2 + $0x18] sm:$0xff]
      %v307 = vld [vmem:[#allocation2 + $0x20] sm:$0xff]
      %v308 = vld [vmem:[#allocation2 + $0x28] sm:$0xff]
      %v309 = vld [vmem:[#allocation2 + $0x30] sm:$0xff]
      %v310 = vld [vmem:[#allocation2 + $0x38] sm:$0xff]
      %v311 = vld [vmem:[#allocation2 + $0x40] sm:$0xff]
      %v312 = vld [vmem:[#allocation2 + $0x48] sm:$0xff]
      %v313 = vld [vmem:[#allocation2 + $0x50] sm:$0xff]
      %v314 = vld [vmem:[#allocation2 + $0x58] sm:$0xff]
      %v315 = vld [vmem:[#allocation2 + $0x60] sm:$0xff]
      %v316 = vld [vmem:[#allocation2 + $0x68] sm:$0xff]
      %v317 = vld [vmem:[#allocation2 + $0x70] sm:$0xff]
      %v318 = vld [vmem:[#allocation2 + $0x78] sm:$0xff]
      %v319 = vld [vmem:[#allocation2 + $0x80] sm:$0xff]
      %v320 = vld [vmem:[#allocation2 + $0x88] sm:$0xff]
      %v321 = vld [vmem:[#allocation2 + $0x90] sm:$0xff]
      %v322 = vld [vmem:[#allocation2 + $0x98] sm:$0xff]
      %v323 = vld [vmem:[#allocation2 + $0xa0] sm:$0xff]
      %v324 = vld [vmem:[#allocation2 + $0xa8] sm:$0xff]
      %v325 = vld [vmem:[#allocation2 + $0xb0] sm:$0xff]
      %v326 = vld [vmem:[#allocation2 + $0xb8] sm:$0xff]
      %v327 = vld [vmem:[#allocation2 + $0xc0] sm:$0xff]
      %v328 = vld [vmem:[#allocation2 + $0xc8] sm:$0xff]
      %v329 = vld [vmem:[#allocation2 + $0xd0] sm:$0xff]
      %v330 = vld [vmem:[#allocation2 + $0xd8] sm:$0xff]
      %v331 = vld [vmem:[#allocation2 + $0xe0] sm:$0xff]
      %v332 = vld [vmem:[#allocation2 + $0xe8] sm:$0xff]
      %v333 = vld [vmem:[#allocation2 + $0xf0] sm:$0xff]
      %v334 = vld [vmem:[#allocation2 + $0xf8] sm:$0xff]
      %v335 = vld [vmem:[%s243] sm:$0xff]
      %v336 = vld [vmem:[%s243 + $0x8] sm:$0xff]
      %v337 = vld [vmem:[%s243 + $0x10] sm:$0xff]
      %v338 = vld [vmem:[%s243 + $0x18] sm:$0xff]
      %v339 = vld [vmem:[%s243 + $0x20] sm:$0xff]
      %v340 = vld [vmem:[%s243 + $0x28] sm:$0xff]
      %v341 = vld [vmem:[%s243 + $0x30] sm:$0xff]
      %v342 = vld [vmem:[%s243 + $0x38] sm:$0xff]
      %v343 = vld [vmem:[%s243 + $0x40] sm:$0xff]
      %v344 = vld [vmem:[%s243 + $0x48] sm:$0xff]
      %v345 = vld [vmem:[%s243 + $0x50] sm:$0xff]
      %v346 = vld [vmem:[%s243 + $0x58] sm:$0xff]
      %v347 = vld [vmem:[%s243 + $0x60] sm:$0xff]
      %v348 = vld [vmem:[%s243 + $0x68] sm:$0xff]
      %v349 = vld [vmem:[%s243 + $0x70] sm:$0xff]
      %v350 = vld [vmem:[%s243 + $0x78] sm:$0xff]
      %v351 = vld [vmem:[%s243 + $0x80] sm:$0xff]
      %v352 = vld [vmem:[%s243 + $0x88] sm:$0xff]
      %v353 = vld [vmem:[%s243 + $0x90] sm:$0xff]
      %v354 = vld [vmem:[%s243 + $0x98] sm:$0xff]
      %v355 = vld [vmem:[%s243 + $0xa0] sm:$0xff]
      %v356 = vld [vmem:[%s243 + $0xa8] sm:$0xff]
      %v357 = vld [vmem:[%s243 + $0xb0] sm:$0xff]
      %v358 = vld [vmem:[%s243 + $0xb8] sm:$0xff]
      %v359 = vld [vmem:[%s243 + $0xc0] sm:$0xff]
      %v360 = vld [vmem:[%s243 + $0xc8] sm:$0xff]
      %v361 = vld [vmem:[%s243 + $0xd0] sm:$0xff]
      %v362 = vld [vmem:[%s243 + $0xd8] sm:$0xff]
      %v363 = vld [vmem:[%s243 + $0xe0] sm:$0xff]
      %v364 = vld [vmem:[%s243 + $0xe8] sm:$0xff]
      %v365 = vld [vmem:[%s243 + $0xf0] sm:$0xff]
      %v366 = vld [vmem:[%s243 + $0xf8] sm:$0xff]
      %v367 = vld [vmem:[%s243 + $0x100] sm:$0xff]
      %v368 = vld [vmem:[%s243 + $0x108] sm:$0xff]
      %v369 = vld [vmem:[%s243 + $0x110] sm:$0xff]
      %v370 = vld [vmem:[%s243 + $0x118] sm:$0xff]
      %v371 = vld [vmem:[%s243 + $0x120] sm:$0xff]
      %v372 = vld [vmem:[%s243 + $0x128] sm:$0xff]
      %v373 = vld [vmem:[%s243 + $0x130] sm:$0xff]
      %v374 = vld [vmem:[%s243 + $0x138] sm:$0xff]
      %v375 = vld [vmem:[%s243 + $0x140] sm:$0xff]
      %v376 = vld [vmem:[%s243 + $0x148] sm:$0xff]
      %v377 = vld [vmem:[%s243 + $0x150] sm:$0xff]
      %v378 = vld [vmem:[%s243 + $0x158] sm:$0xff]
      %v379 = vld [vmem:[%s243 + $0x160] sm:$0xff]
      %v380 = vld [vmem:[%s243 + $0x168] sm:$0xff]
      %v381 = vld [vmem:[%s243 + $0x170] sm:$0xff]
      %v382 = vld [vmem:[%s243 + $0x178] sm:$0xff]
      %v383 = vld [vmem:[%s243 + $0x180] sm:$0xff]
      %v384 = vld [vmem:[%s243 + $0x188] sm:$0xff]
      %v385 = vld [vmem:[%s243 + $0x190] sm:$0xff]
      %v386 = vld [vmem:[%s243 + $0x198] sm:$0xff]
      %v387 = vld [vmem:[%s243 + $0x1a0] sm:$0xff]
      %v388 = vld [vmem:[%s243 + $0x1a8] sm:$0xff]
      %v389 = vld [vmem:[%s243 + $0x1b0] sm:$0xff]
      %v390 = vld [vmem:[%s243 + $0x1b8] sm:$0xff]
      %v391 = vld [vmem:[%s243 + $0x1c0] sm:$0xff]
      %v392 = vld [vmem:[%s243 + $0x1c8] sm:$0xff]
      %v393 = vld [vmem:[%s243 + $0x1d0] sm:$0xff]
      %v394 = vld [vmem:[%s243 + $0x1d8] sm:$0xff]
      %v395 = vld [vmem:[%s243 + $0x1e0] sm:$0xff]
      %v396 = vld [vmem:[%s243 + $0x1e8] sm:$0xff]
      %v397 = vld [vmem:[%s243 + $0x1f0] sm:$0xff]
      %v398 = vld [vmem:[%s243 + $0x1f8] sm:$0xff]
      %v399 = vld [vmem:[%s253] sm:$0xff]
      %v400 = vld [vmem:[%s253 + $0x8] sm:$0xff]
      %v401 = vld [vmem:[%s253 + $0x10] sm:$0xff]
      %v402 = vld [vmem:[%s253 + $0x18] sm:$0xff]
      %v403 = vld [vmem:[%s253 + $0x20] sm:$0xff]
      %v404 = vld [vmem:[%s253 + $0x28] sm:$0xff]
      %v405 = vld [vmem:[%s253 + $0x30] sm:$0xff]
      %v406 = vld [vmem:[%s253 + $0x38] sm:$0xff]
      %v407 = vld [vmem:[%s253 + $0x40] sm:$0xff]
      %v408 = vld [vmem:[%s253 + $0x48] sm:$0xff]
      %v409 = vld [vmem:[%s253 + $0x50] sm:$0xff]
      %v410 = vld [vmem:[%s253 + $0x58] sm:$0xff]
      %v411 = vld [vmem:[%s253 + $0x60] sm:$0xff]
      %v412 = vld [vmem:[%s253 + $0x68] sm:$0xff]
      %v413 = vld [vmem:[%s253 + $0x70] sm:$0xff]
      %v414 = vld [vmem:[%s253 + $0x78] sm:$0xff]
      %v415 = vld [vmem:[%s253 + $0x80] sm:$0xff]
      %v416 = vld [vmem:[%s253 + $0x88] sm:$0xff]
      %v417 = vld [vmem:[%s253 + $0x90] sm:$0xff]
      %v418 = vld [vmem:[%s253 + $0x98] sm:$0xff]
      %v419 = vld [vmem:[%s253 + $0xa0] sm:$0xff]
      %v420 = vld [vmem:[%s253 + $0xa8] sm:$0xff]
      %v421 = vld [vmem:[%s253 + $0xb0] sm:$0xff]
      %v422 = vld [vmem:[%s253 + $0xb8] sm:$0xff]
      %v423 = vld [vmem:[%s253 + $0xc0] sm:$0xff]
      %v424 = vld [vmem:[%s253 + $0xc8] sm:$0xff]
      %v425 = vld [vmem:[%s253 + $0xd0] sm:$0xff]
      %v426 = vld [vmem:[%s253 + $0xd8] sm:$0xff]
      %v427 = vld [vmem:[%s253 + $0xe0] sm:$0xff]
      %v428 = vld [vmem:[%s253 + $0xe8] sm:$0xff]
      %v429 = vld [vmem:[%s253 + $0xf0] sm:$0xff]
      %v430 = vld [vmem:[%s253 + $0xf8] sm:$0xff]
      %431 = vmatpush.msra.mxu0 %v414
      %432 = vmatpush.msra.mxu0 %v413
      %433 = vmatpush.msra.mxu0 %v412
      %434 = vmatpush.msra.mxu0 %v411
      %435 = vmatpush.msra.mxu0 %v410
      %436 = vmatpush.msra.mxu0 %v409
      %437 = vmatpush.msra.mxu0 %v408
      %438 = vmatpush.msra.mxu0 %v407
      %439 = vmatpush.msra.mxu0 %v406
      %440 = vmatpush.msra.mxu0 %v405
      %441 = vmatpush.msra.mxu0 %v404
      %442 = vmatpush.msra.mxu0 %v403
      %443 = vmatpush.msra.mxu0 %v402
      %444 = vmatpush.msra.mxu0 %v401
      %445 = vmatpush.msra.mxu0 %v400
      %446 = vmatpush.msra.mxu0 %v399
      %447 = vmatmul.f32.gmra.mxu0 %v335
      %v448 = vpop.f32.mrf.mxu0
      %v449 = vadd.f32 0.0, %v448
      %450 = vmatmul.f32.gmra.mxu0 %v337
      %v451 = vpop.f32.mrf.mxu0
      %v452 = vadd.f32 0.0, %v451
      %453 = vmatmul.f32.gmra.mxu0 %v339
      %v454 = vpop.f32.mrf.mxu0
      %v455 = vadd.f32 0.0, %v454
      %456 = vmatmul.f32.gmra.mxu0 %v341
      %v457 = vpop.f32.mrf.mxu0
      %v458 = vadd.f32 0.0, %v457
      %459 = vmatmul.f32.gmra.mxu0 %v343
      %v460 = vpop.f32.mrf.mxu0
      %v461 = vadd.f32 0.0, %v460
      %462 = vmatmul.f32.gmra.mxu0 %v345
      %v463 = vpop.f32.mrf.mxu0
      %v464 = vadd.f32 0.0, %v463
      %465 = vmatmul.f32.gmra.mxu0 %v347
      %v466 = vpop.f32.mrf.mxu0
      %v467 = vadd.f32 0.0, %v466
      %468 = vmatmul.f32.gmra.mxu0 %v349
      %v469 = vpop.f32.mrf.mxu0
      %v470 = vadd.f32 0.0, %v469
      %471 = vmatmul.f32.gmra.mxu0 %v351
      %v472 = vpop.f32.mrf.mxu0
      %v473 = vadd.f32 0.0, %v472
      %474 = vmatmul.f32.gmra.mxu0 %v353
      %v475 = vpop.f32.mrf.mxu0
      %v476 = vadd.f32 0.0, %v475
      %477 = vmatmul.f32.gmra.mxu0 %v355
      %v478 = vpop.f32.mrf.mxu0
      %v479 = vadd.f32 0.0, %v478
      %480 = vmatmul.f32.gmra.mxu0 %v357
      %v481 = vpop.f32.mrf.mxu0
      %v482 = vadd.f32 0.0, %v481
      %483 = vmatmul.f32.gmra.mxu0 %v359
      %v484 = vpop.f32.mrf.mxu0
      %v485 = vadd.f32 0.0, %v484
      %486 = vmatmul.f32.gmra.mxu0 %v361
      %v487 = vpop.f32.mrf.mxu0
      %v488 = vadd.f32 0.0, %v487
      %489 = vmatmul.f32.gmra.mxu0 %v363
      %v490 = vpop.f32.mrf.mxu0
      %v491 = vadd.f32 0.0, %v490
      %492 = vmatmul.f32.gmra.mxu0 %v365
      %v493 = vpop.f32.mrf.mxu0
      %v494 = vadd.f32 0.0, %v493
      %495 = vmatmul.f32.gmra.mxu0 %v367
      %v496 = vpop.f32.mrf.mxu0
      %v497 = vadd.f32 0.0, %v496
      %498 = vmatmul.f32.gmra.mxu0 %v369
      %v499 = vpop.f32.mrf.mxu0
      %v500 = vadd.f32 0.0, %v499
      %501 = vmatmul.f32.gmra.mxu0 %v371
      %v502 = vpop.f32.mrf.mxu0
      %v503 = vadd.f32 0.0, %v502
      %504 = vmatmul.f32.gmra.mxu0 %v373
      %v505 = vpop.f32.mrf.mxu0
      %v506 = vadd.f32 0.0, %v505
      %507 = vmatmul.f32.gmra.mxu0 %v375
      %v508 = vpop.f32.mrf.mxu0
      %v509 = vadd.f32 0.0, %v508
      %510 = vmatmul.f32.gmra.mxu0 %v377
      %v511 = vpop.f32.mrf.mxu0
      %v512 = vadd.f32 0.0, %v511
      %513 = vmatmul.f32.gmra.mxu0 %v379
      %v514 = vpop.f32.mrf.mxu0
      %v515 = vadd.f32 0.0, %v514
      %516 = vmatmul.f32.gmra.mxu0 %v381
      %v517 = vpop.f32.mrf.mxu0
      %v518 = vadd.f32 0.0, %v517
      %519 = vmatmul.f32.gmra.mxu0 %v383
      %v520 = vpop.f32.mrf.mxu0
      %v521 = vadd.f32 0.0, %v520
      %522 = vmatmul.f32.gmra.mxu0 %v385
      %v523 = vpop.f32.mrf.mxu0
      %v524 = vadd.f32 0.0, %v523
      %525 = vmatmul.f32.gmra.mxu0 %v387
      %v526 = vpop.f32.mrf.mxu0
      %v527 = vadd.f32 0.0, %v526
      %528 = vmatmul.f32.gmra.mxu0 %v389
      %v529 = vpop.f32.mrf.mxu0
      %v530 = vadd.f32 0.0, %v529
      %531 = vmatmul.f32.gmra.mxu0 %v391
      %v532 = vpop.f32.mrf.mxu0
      %v533 = vadd.f32 0.0, %v532
      %534 = vmatmul.f32.gmra.mxu0 %v393
      %v535 = vpop.f32.mrf.mxu0
      %v536 = vadd.f32 0.0, %v535
      %537 = vmatmul.f32.gmra.mxu0 %v395
      %v538 = vpop.f32.mrf.mxu0
      %v539 = vadd.f32 0.0, %v538
      %540 = vmatmul.f32.gmra.mxu0 %v397
      %v541 = vpop.f32.mrf.mxu0
      %v542 = vadd.f32 0.0, %v541
      %543 = vdwg.mxu0
      %544 = vmatpush.msra.mxu0 %v430
      %545 = vmatpush.msra.mxu0 %v429
      %546 = vmatpush.msra.mxu0 %v428
      %547 = vmatpush.msra.mxu0 %v427
      %548 = vmatpush.msra.mxu0 %v426
      %549 = vmatpush.msra.mxu0 %v425
      %550 = vmatpush.msra.mxu0 %v424
      %551 = vmatpush.msra.mxu0 %v423
      %552 = vmatpush.msra.mxu0 %v422
      %553 = vmatpush.msra.mxu0 %v421
      %554 = vmatpush.msra.mxu0 %v420
      %555 = vmatpush.msra.mxu0 %v419
      %556 = vmatpush.msra.mxu0 %v418
      %557 = vmatpush.msra.mxu0 %v417
      %558 = vmatpush.msra.mxu0 %v416
      %559 = vmatpush.msra.mxu0 %v415
      %560 = vmatmul.f32.gmra.mxu0 %v336
      %v561 = vpop.f32.mrf.mxu0
      %v562 = vadd.f32 %v449, %v561
      %563 = vmatmul.f32.gmra.mxu0 %v338
      %v564 = vpop.f32.mrf.mxu0
      %v565 = vadd.f32 %v452, %v564
      %566 = vmatmul.f32.gmra.mxu0 %v340
      %v567 = vpop.f32.mrf.mxu0
      %v568 = vadd.f32 %v455, %v567
      %569 = vmatmul.f32.gmra.mxu0 %v342
      %v570 = vpop.f32.mrf.mxu0
      %v571 = vadd.f32 %v458, %v570
      %572 = vmatmul.f32.gmra.mxu0 %v344
      %v573 = vpop.f32.mrf.mxu0
      %v574 = vadd.f32 %v461, %v573
      %575 = vmatmul.f32.gmra.mxu0 %v346
      %v576 = vpop.f32.mrf.mxu0
      %v577 = vadd.f32 %v464, %v576
      %578 = vmatmul.f32.gmra.mxu0 %v348
      %v579 = vpop.f32.mrf.mxu0
      %v580 = vadd.f32 %v467, %v579
      %581 = vmatmul.f32.gmra.mxu0 %v350
      %v582 = vpop.f32.mrf.mxu0
      %v583 = vadd.f32 %v470, %v582
      %584 = vmatmul.f32.gmra.mxu0 %v352
      %v585 = vpop.f32.mrf.mxu0
      %v586 = vadd.f32 %v473, %v585
      %587 = vmatmul.f32.gmra.mxu0 %v354
      %v588 = vpop.f32.mrf.mxu0
      %v589 = vadd.f32 %v476, %v588
      %590 = vmatmul.f32.gmra.mxu0 %v356
      %v591 = vpop.f32.mrf.mxu0
      %v592 = vadd.f32 %v479, %v591
      %593 = vmatmul.f32.gmra.mxu0 %v358
      %v594 = vpop.f32.mrf.mxu0
      %v595 = vadd.f32 %v482, %v594
      %596 = vmatmul.f32.gmra.mxu0 %v360
      %v597 = vpop.f32.mrf.mxu0
      %v598 = vadd.f32 %v485, %v597
      %599 = vmatmul.f32.gmra.mxu0 %v362
      %v600 = vpop.f32.mrf.mxu0
      %v601 = vadd.f32 %v488, %v600
      %602 = vmatmul.f32.gmra.mxu0 %v364
      %v603 = vpop.f32.mrf.mxu0
      %v604 = vadd.f32 %v491, %v603
      %605 = vmatmul.f32.gmra.mxu0 %v366
      %v606 = vpop.f32.mrf.mxu0
      %v607 = vadd.f32 %v494, %v606
      %608 = vmatmul.f32.gmra.mxu0 %v368
      %v609 = vpop.f32.mrf.mxu0
      %v610 = vadd.f32 %v497, %v609
      %611 = vmatmul.f32.gmra.mxu0 %v370
      %v612 = vpop.f32.mrf.mxu0
      %v613 = vadd.f32 %v500, %v612
      %614 = vmatmul.f32.gmra.mxu0 %v372
      %v615 = vpop.f32.mrf.mxu0
      %v616 = vadd.f32 %v503, %v615
      %617 = vmatmul.f32.gmra.mxu0 %v374
      %v618 = vpop.f32.mrf.mxu0
      %v619 = vadd.f32 %v506, %v618
      %620 = vmatmul.f32.gmra.mxu0 %v376
      %v621 = vpop.f32.mrf.mxu0
      %v622 = vadd.f32 %v509, %v621
      %623 = vmatmul.f32.gmra.mxu0 %v378
      %v624 = vpop.f32.mrf.mxu0
      %v625 = vadd.f32 %v512, %v624
      %626 = vmatmul.f32.gmra.mxu0 %v380
      %v627 = vpop.f32.mrf.mxu0
      %v628 = vadd.f32 %v515, %v627
      %629 = vmatmul.f32.gmra.mxu0 %v382
      %v630 = vpop.f32.mrf.mxu0
      %v631 = vadd.f32 %v518, %v630
      %632 = vmatmul.f32.gmra.mxu0 %v384
      %v633 = vpop.f32.mrf.mxu0
      %v634 = vadd.f32 %v521, %v633
      %635 = vmatmul.f32.gmra.mxu0 %v386
      %v636 = vpop.f32.mrf.mxu0
      %v637 = vadd.f32 %v524, %v636
      %638 = vmatmul.f32.gmra.mxu0 %v388
      %v639 = vpop.f32.mrf.mxu0
      %v640 = vadd.f32 %v527, %v639
      %641 = vmatmul.f32.gmra.mxu0 %v390
      %v642 = vpop.f32.mrf.mxu0
      %v643 = vadd.f32 %v530, %v642
      %644 = vmatmul.f32.gmra.mxu0 %v392
      %v645 = vpop.f32.mrf.mxu0
      %v646 = vadd.f32 %v533, %v645
      %647 = vmatmul.f32.gmra.mxu0 %v394
      %v648 = vpop.f32.mrf.mxu0
      %v649 = vadd.f32 %v536, %v648
      %650 = vmatmul.f32.gmra.mxu0 %v396
      %v651 = vpop.f32.mrf.mxu0
      %v652 = vadd.f32 %v539, %v651
      %653 = vmatmul.f32.gmra.mxu0 %v398
      %v654 = vpop.f32.mrf.mxu0
      %v655 = vadd.f32 %v542, %v654
      %656 = vdwg.mxu0
      %v657 = vadd.f32 %v303, %v562
      %v658 = vadd.f32 %v304, %v565
      %v659 = vadd.f32 %v305, %v568
      %v660 = vadd.f32 %v306, %v571
      %v661 = vadd.f32 %v307, %v574
      %v662 = vadd.f32 %v308, %v577
      %v663 = vadd.f32 %v309, %v580
      %v664 = vadd.f32 %v310, %v583
      %v665 = vadd.f32 %v311, %v586
      %v666 = vadd.f32 %v312, %v589
      %v667 = vadd.f32 %v313, %v592
      %v668 = vadd.f32 %v314, %v595
      %v669 = vadd.f32 %v315, %v598
      %v670 = vadd.f32 %v316, %v601
      %v671 = vadd.f32 %v317, %v604
      %v672 = vadd.f32 %v318, %v607
      %v673 = vadd.f32 %v319, %v610
      %v674 = vadd.f32 %v320, %v613
      %v675 = vadd.f32 %v321, %v616
      %v676 = vadd.f32 %v322, %v619
      %v677 = vadd.f32 %v323, %v622
      %v678 = vadd.f32 %v324, %v625
      %v679 = vadd.f32 %v325, %v628
      %v680 = vadd.f32 %v326, %v631
      %v681 = vadd.f32 %v327, %v634
      %v682 = vadd.f32 %v328, %v637
      %v683 = vadd.f32 %v329, %v640
      %v684 = vadd.f32 %v330, %v643
      %v685 = vadd.f32 %v331, %v646
      %v686 = vadd.f32 %v332, %v649
      %v687 = vadd.f32 %v333, %v652
      %v688 = vadd.f32 %v334, %v655
      %689 = vst [vmem:[#allocation2] sm:$0xff] %v657
      %690 = vst [vmem:[#allocation2 + $0x8] sm:$0xff] %v658
      %691 = vst [vmem:[#allocation2 + $0x10] sm:$0xff] %v659
      %692 = vst [vmem:[#allocation2 + $0x18] sm:$0xff] %v660
      %693 = vst [vmem:[#allocation2 + $0x20] sm:$0xff] %v661
      %694 = vst [vmem:[#allocation2 + $0x28] sm:$0xff] %v662
      %695 = vst [vmem:[#allocation2 + $0x30] sm:$0xff] %v663
      %696 = vst [vmem:[#allocation2 + $0x38] sm:$0xff] %v664
      %697 = vst [vmem:[#allocation2 + $0x40] sm:$0xff] %v665
      %698 = vst [vmem:[#allocation2 + $0x48] sm:$0xff] %v666
      %699 = vst [vmem:[#allocation2 + $0x50] sm:$0xff] %v667
      %700 = vst [vmem:[#allocation2 + $0x58] sm:$0xff] %v668
      %701 = vst [vmem:[#allocation2 + $0x60] sm:$0xff] %v669
      %702 = vst [vmem:[#allocation2 + $0x68] sm:$0xff] %v670
      %703 = vst [vmem:[#allocation2 + $0x70] sm:$0xff] %v671
      %704 = vst [vmem:[#allocation2 + $0x78] sm:$0xff] %v672
      %705 = vst [vmem:[#allocation2 + $0x80] sm:$0xff] %v673
      %706 = vst [vmem:[#allocation2 + $0x88] sm:$0xff] %v674
      %707 = vst [vmem:[#allocation2 + $0x90] sm:$0xff] %v675
      %708 = vst [vmem:[#allocation2 + $0x98] sm:$0xff] %v676
      %709 = vst [vmem:[#allocation2 + $0xa0] sm:$0xff] %v677
      %710 = vst [vmem:[#allocation2 + $0xa8] sm:$0xff] %v678
      %711 = vst [vmem:[#allocation2 + $0xb0] sm:$0xff] %v679
      %712 = vst [vmem:[#allocation2 + $0xb8] sm:$0xff] %v680
      %713 = vst [vmem:[#allocation2 + $0xc0] sm:$0xff] %v681
      %714 = vst [vmem:[#allocation2 + $0xc8] sm:$0xff] %v682
      %715 = vst [vmem:[#allocation2 + $0xd0] sm:$0xff] %v683
      %716 = vst [vmem:[#allocation2 + $0xd8] sm:$0xff] %v684
      %717 = vst [vmem:[#allocation2 + $0xe0] sm:$0xff] %v685
      %718 = vst [vmem:[#allocation2 + $0xe8] sm:$0xff] %v686
      %719 = vst [vmem:[#allocation2 + $0xf0] sm:$0xff] %v687
      %720 = vst [vmem:[#allocation2 + $0xf8] sm:$0xff] %v688
      // Predicated region
      $region37: #{_lambda_.4} parent=31 // pred_check
        %p721 = pneg %p267
      $region38: #{_lambda_.4} parent=31 // pred_check_branch
        %723 = sbr.rel (%p721) target = $region40
      $region39: #{_lambda_.4} parent=31 // pred_region
        %v724 = vld [vmem:[#allocation2] sm:$0xff]
        %v725 = vld [vmem:[#allocation2 + $0x8] sm:$0xff]
        %v726 = vld [vmem:[#allocation2 + $0x10] sm:$0xff]
        %v727 = vld [vmem:[#allocation2 + $0x18] sm:$0xff]
        %v728 = vld [vmem:[#allocation2 + $0x20] sm:$0xff]
        %v729 = vld [vmem:[#allocation2 + $0x28] sm:$0xff]
        %v730 = vld [vmem:[#allocation2 + $0x30] sm:$0xff]
        %v731 = vld [vmem:[#allocation2 + $0x38] sm:$0xff]
        %v732 = vld [vmem:[#allocation2 + $0x40] sm:$0xff]
        %v733 = vld [vmem:[#allocation2 + $0x48] sm:$0xff]
        %v734 = vld [vmem:[#allocation2 + $0x50] sm:$0xff]
        %v735 = vld [vmem:[#allocation2 + $0x58] sm:$0xff]
        %v736 = vld [vmem:[#allocation2 + $0x60] sm:$0xff]
        %v737 = vld [vmem:[#allocation2 + $0x68] sm:$0xff]
        %v738 = vld [vmem:[#allocation2 + $0x70] sm:$0xff]
        %v739 = vld [vmem:[#allocation2 + $0x78] sm:$0xff]
        %v740 = vld [vmem:[#allocation2 + $0x80] sm:$0xff]
        %v741 = vld [vmem:[#allocation2 + $0x88] sm:$0xff]
        %v742 = vld [vmem:[#allocation2 + $0x90] sm:$0xff]
        %v743 = vld [vmem:[#allocation2 + $0x98] sm:$0xff]
        %v744 = vld [vmem:[#allocation2 + $0xa0] sm:$0xff]
        %v745 = vld [vmem:[#allocation2 + $0xa8] sm:$0xff]
        %v746 = vld [vmem:[#allocation2 + $0xb0] sm:$0xff]
        %v747 = vld [vmem:[#allocation2 + $0xb8] sm:$0xff]
        %v748 = vld [vmem:[#allocation2 + $0xc0] sm:$0xff]
        %v749 = vld [vmem:[#allocation2 + $0xc8] sm:$0xff]
        %v750 = vld [vmem:[#allocation2 + $0xd0] sm:$0xff]
        %v751 = vld [vmem:[#allocation2 + $0xd8] sm:$0xff]
        %v752 = vld [vmem:[#allocation2 + $0xe0] sm:$0xff]
        %v753 = vld [vmem:[#allocation2 + $0xe8] sm:$0xff]
        %v754 = vld [vmem:[#allocation2 + $0xf0] sm:$0xff]
        %v755 = vld [vmem:[#allocation2 + $0xf8] sm:$0xff]
        %v756 = vld [vmem:[%s257] sm:$0x1]
        %v758 = vperm.slane %v756, 0
        %v760 = vadd.f32 %v724, %v758
        %v761 = vadd.f32 %v725, %v758
        %v762 = vadd.f32 %v726, %v758
        %v763 = vadd.f32 %v727, %v758
        %v764 = vadd.f32 %v728, %v758
        %v765 = vadd.f32 %v729, %v758
        %v766 = vadd.f32 %v730, %v758
        %v767 = vadd.f32 %v731, %v758
        %v768 = vadd.f32 %v732, %v758
        %v769 = vadd.f32 %v733, %v758
        %v770 = vadd.f32 %v734, %v758
        %v771 = vadd.f32 %v735, %v758
        %v772 = vadd.f32 %v736, %v758
        %v773 = vadd.f32 %v737, %v758
        %v774 = vadd.f32 %v738, %v758
        %v775 = vadd.f32 %v739, %v758
        %v776 = vadd.f32 %v740, %v758
        %v777 = vadd.f32 %v741, %v758
        %v778 = vadd.f32 %v742, %v758
        %v779 = vadd.f32 %v743, %v758
        %v780 = vadd.f32 %v744, %v758
        %v781 = vadd.f32 %v745, %v758
        %v782 = vadd.f32 %v746, %v758
        %v783 = vadd.f32 %v747, %v758
        %v784 = vadd.f32 %v748, %v758
        %v785 = vadd.f32 %v749, %v758
        %v786 = vadd.f32 %v750, %v758
        %v787 = vadd.f32 %v751, %v758
        %v788 = vadd.f32 %v752, %v758
        %v789 = vadd.f32 %v753, %v758
        %v790 = vadd.f32 %v754, %v758
        %v791 = vadd.f32 %v755, %v758
        %v792 = vmax.f32 %v760, 0.0
        %v793 = vmax.f32 %v761, 0.0
        %v794 = vmax.f32 %v762, 0.0
        %v795 = vmax.f32 %v763, 0.0
        %v796 = vmax.f32 %v764, 0.0
        %v797 = vmax.f32 %v765, 0.0
        %v798 = vmax.f32 %v766, 0.0
        %v799 = vmax.f32 %v767, 0.0
        %v800 = vmax.f32 %v768, 0.0
        %v801 = vmax.f32 %v769, 0.0
        %v802 = vmax.f32 %v770, 0.0
        %v803 = vmax.f32 %v771, 0.0
        %v804 = vmax.f32 %v772, 0.0
        %v805 = vmax.f32 %v773, 0.0
        %v806 = vmax.f32 %v774, 0.0
        %v807 = vmax.f32 %v775, 0.0
        %v808 = vmax.f32 %v776, 0.0
        %v809 = vmax.f32 %v777, 0.0
        %v810 = vmax.f32 %v778, 0.0
        %v811 = vmax.f32 %v779, 0.0
        %v812 = vmax.f32 %v780, 0.0
        %v813 = vmax.f32 %v781, 0.0
        %v814 = vmax.f32 %v782, 0.0
        %v815 = vmax.f32 %v783, 0.0
        %v816 = vmax.f32 %v784, 0.0
        %v817 = vmax.f32 %v785, 0.0
        %v818 = vmax.f32 %v786, 0.0
        %v819 = vmax.f32 %v787, 0.0
        %v820 = vmax.f32 %v788, 0.0
        %v821 = vmax.f32 %v789, 0.0
        %v822 = vmax.f32 %v790, 0.0
        %v823 = vmax.f32 %v791, 0.0
        %824 = vst [vmem:[%s265] sm:$0xff] %v792
        %825 = vst [vmem:[%s265 + $0x8] sm:$0xff] %v793
        %826 = vst [vmem:[%s265 + $0x10] sm:$0xff] %v794
        %827 = vst [vmem:[%s265 + $0x18] sm:$0xff] %v795
        %828 = vst [vmem:[%s265 + $0x20] sm:$0xff] %v796
        %829 = vst [vmem:[%s265 + $0x28] sm:$0xff] %v797
        %830 = vst [vmem:[%s265 + $0x30] sm:$0xff] %v798
        %831 = vst [vmem:[%s265 + $0x38] sm:$0xff] %v799
        %832 = vst [vmem:[%s265 + $0x40] sm:$0xff] %v800
        %833 = vst [vmem:[%s265 + $0x48] sm:$0xff] %v801
        %834 = vst [vmem:[%s265 + $0x50] sm:$0xff] %v802
        %835 = vst [vmem:[%s265 + $0x58] sm:$0xff] %v803
        %836 = vst [vmem:[%s265 + $0x60] sm:$0xff] %v804
        %837 = vst [vmem:[%s265 + $0x68] sm:$0xff] %v805
        %838 = vst [vmem:[%s265 + $0x70] sm:$0xff] %v806
        %839 = vst [vmem:[%s265 + $0x78] sm:$0xff] %v807
        %840 = vst [vmem:[%s265 + $0x80] sm:$0xff] %v808
        %841 = vst [vmem:[%s265 + $0x88] sm:$0xff] %v809
        %842 = vst [vmem:[%s265 + $0x90] sm:$0xff] %v810
        %843 = vst [vmem:[%s265 + $0x98] sm:$0xff] %v811
        %844 = vst [vmem:[%s265 + $0xa0] sm:$0xff] %v812
        %845 = vst [vmem:[%s265 + $0xa8] sm:$0xff] %v813
        %846 = vst [vmem:[%s265 + $0xb0] sm:$0xff] %v814
        %847 = vst [vmem:[%s265 + $0xb8] sm:$0xff] %v815
        %848 = vst [vmem:[%s265 + $0xc0] sm:$0xff] %v816
        %849 = vst [vmem:[%s265 + $0xc8] sm:$0xff] %v817
        %850 = vst [vmem:[%s265 + $0xd0] sm:$0xff] %v818
        %851 = vst [vmem:[%s265 + $0xd8] sm:$0xff] %v819
        %852 = vst [vmem:[%s265 + $0xe0] sm:$0xff] %v820
        %853 = vst [vmem:[%s265 + $0xe8] sm:$0xff] %v821
        %854 = vst [vmem:[%s265 + $0xf0] sm:$0xff] %v822
        %855 = vst [vmem:[%s265 + $0xf8] sm:$0xff] %v823
      $region40: #{_lambda_.4} parent=31 // pred_fallthru
        _
      %s856 = smul.u32 32, %s19
      %p857 = scmp.lt.s32.totalorder %s856, 63
      %s858 = scalar_select %p857, %s856, 63
      %p859 = scmp.lt.s32.totalorder %s20, 0
      %s860 = scalar_select %p859, %s20, 0
      %s861 = sadd.s32 %s860, %s858
      %s862 = smul.addr %s861, 8
      %s863 = scalar_lea.vmem %s3, %s862
      // Predicated region
      $region41: #{_lambda_.4} parent=31 // pred_check
        %p864 = pneg %p135
      $region42: #{_lambda_.4} parent=31 // pred_check_branch
        %866 = sbr.rel (%p864) target = $region44
      $region43: #{_lambda_.4} parent=31 // pred_region
        %s867 = smul.u32 32, %s19
      $region44: #{_lambda_.4} parent=31 // pred_fallthru
        _
    $region32: #{_lambda_.4} parent=5 // pred_fallthru
      _
    %p868 = scmp.le.s32.totalorder 2, %s9
    // Predicated region
    $region45: #{_lambda_.4} parent=5 // pred_check
      %p869 = pneg %p868
    $region46: #{_lambda_.4} parent=5 // pred_check_branch
      %871 = sbr.rel (%p869) target = $region48
    $region47: #{_lambda_.4} parent=5 // pred_region
      %s872 = ssub.s32 %s9, 2
      // Predicated region
      $region49: #{_lambda_.4} parent=47 // pred_check
        %p873 = pneg %p141
      $region50: #{_lambda_.4} parent=47 // pred_check_branch
        %875 = sbr.rel (%p873) target = $region52
      $region51: #{_lambda_.4} parent=47 // pred_region
        %s876 = smul.u32 32, %s22
        %p877 = scmp.lt.s32.totalorder %s876, 63
        %s878 = scalar_select %p877, %s876, 63
        %p879 = scmp.lt.s32.totalorder %s23, 0
        %s880 = scalar_select %p879, %s23, 0
        %s881 = sadd.s32 %s880, %s878
        %s882 = smul.addr %s881, 8
        %s883 = scalar_lea.vmem %s3, %s882
      $region52: #{_lambda_.4} parent=47 // pred_fallthru
        _
    $region48: #{_lambda_.4} parent=5 // pred_fallthru
      _
  $region6: #{_lambda_.4} parent=0 // loop_footer
    %s13 = sadd.s32 1, %s9
  $region7: #{_lambda_.4} parent=0 // loop_footer_branch
    %8 = sbr.rel target = $region3
  $region8: #{_lambda_.4} parent=0 // loop_exit
    _

// kernel: _lambda_.5
$region0: #{_lambda_.5}
  #allocation0 [shape = 'u32[]', space=smem, size = 0x4, offset = 0x4, fixed_abs, tag = 'smem constant byte address 0x4 - core index']
  #allocation1 [shape = 'u32[72,128]{1,0:T(1,128)}', space=vmem, size = 0x9000, scoped, tag = 'internal scratch']
  #allocation2 [shape = 'f32[128,128]{1,0:T(8,128)}', space=vmem, size = 0x10000, scoped, tag = 'scratch operand']
  %s0 = inlined_call_operand.vmem [shape: f32[128,1024], index: 0, kind: input, shape index: {}]
  %s1 = inlined_call_operand.vmem [shape: f32[1024,128], index: 1, kind: input, shape index: {}]
  %s2 = inlined_call_operand.vmem [shape: f32[1,128], index: 2, kind: input, shape index: {}]
  %s3 = inlined_call_operand.vmem [shape: f32[128,128], index: 3, kind: output, shape index: {}]
  %s4 = sld [smem:[#allocation0]]
  $region76: #{_lambda_.5} parent=0
    _
  %s6 = ssub.s32 1, %s4
  %s7 = scalar_select 0, %s6, %s4
  $region1: #{_lambda_.5} parent=0
    #allocation3 [shape = 'u8[524288]{0}', space=vmem, size = 0x80000, scoped, tag = 'input window, operand 0']
    loop: start=0, step=1, limit=4
    $region2: #{_lambda_.5} parent=1 // loop_pre_header
      _
    $region3: #{_lambda_.5} parent=1 // loop_header
      %s9 = sphi 0, %s13
      %p10 = scmp.ge.s32.totalorder %s9, 4
      %s16 = sphi 0, %s35
      %s17 = sphi 0, %s31
      %s18 = sphi 0, %s27
      %s19 = sphi 0, %s16
      %s20 = sphi 0, %s17
      %s21 = sphi 0, %s18
      %s22 = sphi 0, %s19
      %s23 = sphi 0, %s20
      %s24 = sphi 0, %s21
      %s40 = sphi 0, %s42
      %s43 = sphi 0, %s40
      %s44 = sphi 0, %s43
      %s60 = sphi 0, %s44
      %s68 = sphi 0, %s70
      %s71 = sphi 0, %s68
      %s72 = sphi 0, %s71
      %s88 = sphi 0, %s72
      %s94 = sphi 0, %s96
      %s97 = sphi 0, %s94
      %s98 = sphi 0, %s97
      %s114 = sphi 0, %s98
      %s122 = sphi 0, %s124
      %s125 = sphi 0, %s122
      %s126 = sphi 0, %s125
      %s142 = sphi 0, %s126
    $region4: #{_lambda_.5} parent=1 // loop_header_branch
      %12 = sbr.rel (%p10) target = $region8
    $region5: #{_lambda_.5} parent=1 // loop_body
      %s14 = ssub.s32 %s9, 1
      %s15 = ssub.s32 %s9, 2
      %s25 = sadd.s32 1, %s18
      %p26 = scmp.ge.s32.totalorder %s25, 2
      %s27 = scalar_select %p26, 0, %s25
      %s28 = sadd.s32 1, %s17
      %s29 = scalar_select %p26, %s28, %s17
      %p30 = scmp.ge.s32.totalorder %s29, 1
      %s31 = scalar_select %p30, 0, %s29
      %s32 = sadd.s32 1, %s16
      %s33 = scalar_select %p30, %s32, %s16
      %p34 = scmp.ge.s32.totalorder %s33, 1
      %s35 = scalar_select %p34, 0, %s33
      %s36 = ssub.s32 %s16, %s35
      %s37 = ssub.s32 %s18, %s27
      %s38 = sor.u32 %s36, %s37
      %p39 = scmp.eq.s32.totalorder %s38, 0
      %s41 = sadd.s32 %s40, 1
      %s42 = scalar_select %p39, %s40, %s41
      %p45 = pneg %p39
      %p46 = scmp.eq.s32.totalorder %s9, 1
      %p47 = por %p45, %p46
      %p48 = scmp.ne.s32.totalorder %s40, %s43
      %p49 = scmp.eq.s32.totalorder %s9, 0
      %p50 = por %p48, %p49
      %p51 = scmp.ne.s32.totalorder %s40, %s43
      %p52 = scmp.eq.s32.totalorder %s14, 1
      %p53 = por %p51, %p52
      %p54 = scmp.ne.s32.totalorder %s43, %s44
      %p55 = scmp.eq.s32.totalorder %s14, 0
      %p56 = por %p54, %p55
      %p57 = scmp.ne.s32.totalorder %s43, %s44
      %p58 = scmp.eq.s32.totalorder %s15, 1
      %p59 = por %p57, %p58
      %p61 = scmp.ne.s32.totalorder %s44, %s60
      %p62 = scmp.eq.s32.totalorder %s15, 0
      %p63 = por %p61, %p62
      %s64 = ssub.s32 %s18, %s27
      %s65 = ssub.s32 %s17, %s31
      %s66 = sor.u32 %s64, %s65
      %p67 = scmp.eq.s32.totalorder %s66, 0
      %s69 = sadd.s32 %s68, 1
      %s70 = scalar_select %p67, %s68, %s69
      %p73 = pneg %p67
      %p74 = scmp.eq.s32.totalorder %s9, 1
      %p75 = por %p73, %p74
      %p76 = scmp.ne.s32.totalorder %s68, %s71
      %p77 = scmp.eq.s32.totalorder %s9, 0
      %p78 = por %p76, %p77
      %p79 = scmp.ne.s32.totalorder %s68, %s71
      %p80 = scmp.eq.s32.totalorder %s14, 1
      %p81 = por %p79, %p80
      %p82 = scmp.ne.s32.totalorder %s71, %s72
      %p83 = scmp.eq.s32.totalorder %s14, 0
      %p84 = por %p82, %p83
      %p85 = scmp.ne.s32.totalorder %s71, %s72
      %p86 = scmp.eq.s32.totalorder %s15, 1
      %p87 = por %p85, %p86
      %p89 = scmp.ne.s32.totalorder %s72, %s88
      %p90 = scmp.eq.s32.totalorder %s15, 0
      %p91 = por %p89, %p90
      %s92 = ssub.s32 %s17, %s31
      %p93 = scmp.eq.s32.totalorder %s92, 0
      %s95 = sadd.s32 %s94, 1
      %s96 = scalar_select %p93, %s94, %s95
      %p99 = pneg %p93
      %p100 = scmp.eq.s32.totalorder %s9, 1
      %p101 = por %p99, %p100
      %p102 = scmp.ne.s32.totalorder %s94, %s97
      %p103 = scmp.eq.s32.totalorder %s9, 0
      %p104 = por %p102, %p103
      %p105 = scmp.ne.s32.totalorder %s94, %s97
      %p106 = scmp.eq.s32.totalorder %s14, 1
      %p107 = por %p105, %p106
      %p108 = scmp.ne.s32.totalorder %s97, %s98
      %p109 = scmp.eq.s32.totalorder %s14, 0
      %p110 = por %p108, %p109
      %p111 = scmp.ne.s32.totalorder %s97, %s98
      %p112 = scmp.eq.s32.totalorder %s15, 1
      %p113 = por %p111, %p112
      %p115 = scmp.ne.s32.totalorder %s98, %s114
      %p116 = scmp.eq.s32.totalorder %s15, 0
      %p117 = por %p115, %p116
      %s118 = ssub.s32 %s16, %s35
      %s119 = ssub.s32 %s17, %s31
      %s120 = sor.u32 %s118, %s119
      %p121 = scmp.eq.s32.totalorder %s120, 0
      %s123 = sadd.s32 %s122, 1
      %s124 = scalar_select %p121, %s122, %s123
      %p127 = pneg %p121
      %p128 = scmp.eq.s32.totalorder %s9, 1
      %p129 = por %p127, %p128
      %p130 = scmp.ne.s32.totalorder %s122, %s125
      %p131 = scmp.eq.s32.totalorder %s9, 0
      %p132 = por %p130, %p131
      %p133 = scmp.ne.s32.totalorder %s122, %s125
      %p134 = scmp.eq.s32.totalorder %s14, 1
      %p135 = por %p133, %p134
      %p136 = scmp.ne.s32.totalorder %s125, %s126
      %p137 = scmp.eq.s32.totalorder %s14, 0
      %p138 = por %p136, %p137
      %p139 = scmp.ne.s32.totalorder %s125, %s126
      %p140 = scmp.eq.s32.totalorder %s15, 1
      %p141 = por %p139, %p140
      %p143 = scmp.ne.s32.totalorder %s126, %s142
      %p144 = scmp.eq.s32.totalorder %s15, 0
      %p145 = por %p143, %p144
      %p146 = scmp.le.s32.totalorder 1, %s9
      %p147 = scmp.lt.s32.totalorder %s9, 3
      %p148 = pnand %p146, %p147
      %p149 = pneg %p148
      // Predicated region
      $region9: #{_lambda_.5} parent=5 // pred_check
        _
      $region10: #{_lambda_.5} parent=5 // pred_check_branch
        %151 = sbr.rel (%p148) target = $region12
      $region11: #{_lambda_.5} parent=5 // pred_region
        %s152 = ssub.s32 %s9, 1
        // Predicated region
        $region13: #{_lambda_.5} parent=11 // pred_check
          %p153 = pneg %p110
        $region14: #{_lambda_.5} parent=11 // pred_check_branch
          %155 = sbr.rel (%p153) target = $region16
        $region15: #{_lambda_.5} parent=11 // pred_region
          %p156 = scmp.lt.s32.totalorder %s20, 0
          %s157 = scalar_select %p156, %s20, 0
          %s158 = scalar_lea.vmem %s2, %s157
        $region16: #{_lambda_.5} parent=11 // pred_fallthru
          _
      $region12: #{_lambda_.5} parent=5 // pred_fallthru
        _
      %p159 = scmp.lt.s32.totalorder %s9, 2
      // Predicated region
      $region17: #{_lambda_.5} parent=5 // pred_check
        %p160 = pneg %p159
      $region18: #{_lambda_.5} parent=5 // pred_check_branch
        %162 = sbr.rel (%p160) target = $region20
      $region19: #{_lambda_.5} parent=5 // pred_region
        // Predicated region
        $region21: #{_lambda_.5} parent=19 // pred_check
          %p163 = pneg %p50
        $region22: #{_lambda_.5} parent=19 // pred_check_branch
          %165 = sbr.rel (%p163) target = $region24
        $region23: #{_lambda_.5} parent=19 // pred_region
          %s166 = sand.u32 %s40, 1
          %s167 = sand.u32 %s40, 1
          %s168 = smul.addr %s167, 512
          %s169 = scalar_lea.vmem [#allocation3], %s168
          %s170 = smul.u32 16, %s16
          %s171 = smul.u32 4, %s18
          %s172 = smul.addr %s170, 8
          %s173 = sadd.s32 %s171, %s172
          %s174 = smul.addr %s173, 8
          %s175 = scalar_lea.vmem %s0, %s174
          // Predicated region
          $region25: #{_lambda_.5} parent=23 // pred_check
            _
          $region26: #{_lambda_.5} parent=23 // pred_check_branch
            %177 = sbr.rel (0) target = $region28
          $region27: #{_lambda_.5} parent=23 // pred_region
            // Predicated region
            $region29: #{_lambda_.5} parent=27 // pred_check
              _
            $region30: #{_lambda_.5} parent=27 // pred_check_branch
              %179 = sbr.rel (0) target = $region32
            $region31: #{_lambda_.5} parent=27 // pred_region
              loop: start=0, step=1, limit=1
              $region33: #{_lambda_.5} parent=31 // loop_pre_header
                _
              $region34: #{_lambda_.5} parent=31 // loop_header
                %s181 = sphi 0, %s185
                %p182 = scmp.ge.s32.totalorder %s181, 1
                %s186 = sphi %s175, %s175
                %s187 = sphi %s169, %s169
              $region35: #{_lambda_.5} parent=31 // loop_header_branch
                %184 = sbr.rel (%p182) target = $region39
              $region36: #{_lambda_.5} parent=31 // loop_body
                %v188 = vld [vmem:[%s186] sm:$0xff]
                %189 = vst [vmem:[%s187] sm:$0xff] %v188
                %v190 = vld [vmem:[%s186 + $0x8] sm:$0xff]
                %191 = vst [vmem:[%s187 + $0x8] sm:$0xff] %v190
                %v192 = vld [vmem:[%s186 + $0x10] sm:$0xff]
                %193 = vst [vmem:[%s187 + $0x10] sm:$0xff] %v192
                %v194 = vld [vmem:[%s186 + $0x18] sm:$0xff]
                %195 = vst [vmem:[%s187 + $0x18] sm:$0xff] %v194
                %v196 = vld [vmem:[%s186 + $0x40] sm:$0xff]
                %197 = vst [vmem:[%s187 + $0x20] sm:$0xff] %v196
                %v198 = vld [vmem:[%s186 + $0x48] sm:$0xff]
                %199 = vst [vmem:[%s187 + $0x28] sm:$0xff] %v198
                %v200 = vld [vmem:[%s186 + $0x50] sm:$0xff]
                %201 = vst [vmem:[%s187 + $0x30] sm:$0xff] %v200
                %v202 = vld [vmem:[%s186 + $0x58] sm:$0xff]
                %203 = vst [vmem:[%s187 + $0x38] sm:$0xff] %v202
                %v204 = vld [vmem:[%s186 + $0x80] sm:$0xff]
                %205 = vst [vmem:[%s187 + $0x40] sm:$0xff] %v204
                %v206 = vld [vmem:[%s186 + $0x88] sm:$0xff]
                %207 = vst [vmem:[%s187 + $0x48] sm:$0xff] %v206
                %v208 = vld [vmem:[%s186 + $0x90] sm:$0xff]
                %209 = vst [vmem:[%s187 + $0x50] sm:$0xff] %v208
                %v210 = vld [vmem:[%s186 + $0x98] sm:$0xff]
                %211 = vst [vmem:[%s187 + $0x58] sm:$0xff] %v210
                %v212 = vld [vmem:[%s186 + $0xc0] sm:$0xff]
                %213 = vst [vmem:[%s187 + $0x60] sm:$0xff] %v212
                %v214 = vld [vmem:[%s186 + $0xc8] sm:$0xff]
                %215 = vst [vmem:[%s187 + $0x68] sm:$0xff] %v214
                %v216 = vld [vmem:[%s186 + $0xd0] sm:$0xff]
                %217 = vst [vmem:[%s187 + $0x70] sm:$0xff] %v216
                %v218 = vld [vmem:[%s186 + $0xd8] sm:$0xff]
                %219 = vst [vmem:[%s187 + $0x78] sm:$0xff] %v218
                %v220 = vld [vmem:[%s186 + $0x100] sm:$0xff]
                %221 = vst [vmem:[%s187 + $0x80] sm:$0xff] %v220
                %v222 = vld [vmem:[%s186 + $0x108] sm:$0xff]
                %223 = vst [vmem:[%s187 + $0x88] sm:$0xff] %v222
                %v224 = vld [vmem:[%s186 + $0x110] sm:$0xff]
                %225 = vst [vmem:[%s187 + $0x90] sm:$0xff] %v224
                %v226 = vld [vmem:[%s186 + $0x118] sm:$0xff]
                %227 = vst [vmem:[%s187 + $0x98] sm:$0xff] %v226
                %v228 = vld [vmem:[%s186 + $0x140] sm:$0xff]
                %229 = vst [vmem:[%s187 + $0xa0] sm:$0xff] %v228
                %v230 = vld [vmem:[%s186 + $0x148] sm:$0xff]
                %231 = vst [vmem:[%s187 + $0xa8] sm:$0xff] %v230
                %v232 = vld [vmem:[%s186 + $0x150] sm:$0xff]
                %233 = vst [vmem:[%s187 + $0xb0] sm:$0xff] %v232
                %v234 = vld [vmem:[%s186 + $0x158] sm:$0xff]
                %235 = vst [vmem:[%s187 + $0xb8] sm:$0xff] %v234
                %v236 = vld [vmem:[%s186 + $0x180] sm:$0xff]
                %237 = vst [vmem:[%s187 + $0xc0] sm:$0xff] %v236
                %v238 = vld [vmem:[%s186 + $0x188] sm:$0xff]
                %239 = vst [vmem:[%s187 + $0xc8] sm:$0xff] %v238
                %v240 = vld [vmem:[%s186 + $0x190] sm:$0xff]
                %241 = vst [vmem:[%s187 + $0xd0] sm:$0xff] %v240
                %v242 = vld [vmem:[%s186 + $0x198] sm:$0xff]
                %243 = vst [vmem:[%s187 + $0xd8] sm:$0xff] %v242
                %v244 = vld [vmem:[%s186 + $0x1c0] sm:$0xff]
                %245 = vst [vmem:[%s187 + $0xe0] sm:$0xff] %v244
                %v246 = vld [vmem:[%s186 + $0x1c8] sm:$0xff]
                %247 = vst [vmem:[%s187 + $0xe8] sm:$0xff] %v246
                %v248 = vld [vmem:[%s186 + $0x1d0] sm:$0xff]
                %249 = vst [vmem:[%s187 + $0xf0] sm:$0xff] %v248
                %v250 = vld [vmem:[%s186 + $0x1d8] sm:$0xff]
                %251 = vst [vmem:[%s187 + $0xf8] sm:$0xff] %v250
                %v252 = vld [vmem:[%s186 + $0x200] sm:$0xff]
                %253 = vst [vmem:[%s187 + $0x100] sm:$0xff] %v252
                %v254 = vld [vmem:[%s186 + $0x208] sm:$0xff]
                %255 = vst [vmem:[%s187 + $0x108] sm:$0xff] %v254
                %v256 = vld [vmem:[%s186 + $0x210] sm:$0xff]
                %257 = vst [vmem:[%s187 + $0x110] sm:$0xff] %v256
                %v258 = vld [vmem:[%s186 + $0x218] sm:$0xff]
                %259 = vst [vmem:[%s187 + $0x118] sm:$0xff] %v258
                %v260 = vld [vmem:[%s186 + $0x240] sm:$0xff]
                %261 = vst [vmem:[%s187 + $0x120] sm:$0xff] %v260
                %v262 = vld [vmem:[%s186 + $0x248] sm:$0xff]
                %263 = vst [vmem:[%s187 + $0x128] sm:$0xff] %v262
                %v264 = vld [vmem:[%s186 + $0x250] sm:$0xff]
                %265 = vst [vmem:[%s187 + $0x130] sm:$0xff] %v264
                %v266 = vld [vmem:[%s186 + $0x258] sm:$0xff]
                %267 = vst [vmem:[%s187 + $0x138] sm:$0xff] %v266
                %v268 = vld [vmem:[%s186 + $0x280] sm:$0xff]
                %269 = vst [vmem:[%s187 + $0x140] sm:$0xff] %v268
                %v270 = vld [vmem:[%s186 + $0x288] sm:$0xff]
                %271 = vst [vmem:[%s187 + $0x148] sm:$0xff] %v270
                %v272 = vld [vmem:[%s186 + $0x290] sm:$0xff]
                %273 = vst [vmem:[%s187 + $0x150] sm:$0xff] %v272
                %v274 = vld [vmem:[%s186 + $0x298] sm:$0xff]
                %275 = vst [vmem:[%s187 + $0x158] sm:$0xff] %v274
                %v276 = vld [vmem:[%s186 + $0x2c0] sm:$0xff]
                %277 = vst [vmem:[%s187 + $0x160] sm:$0xff] %v276
                %v278 = vld [vmem:[%s186 + $0x2c8] sm:$0xff]
                %279 = vst [vmem:[%s187 + $0x168] sm:$0xff] %v278
                %v280 = vld [vmem:[%s186 + $0x2d0] sm:$0xff]
                %281 = vst [vmem:[%s187 + $0x170] sm:$0xff] %v280
                %v282 = vld [vmem:[%s186 + $0x2d8] sm:$0xff]
                %283 = vst [vmem:[%s187 + $0x178] sm:$0xff] %v282
                %v284 = vld [vmem:[%s186 + $0x300] sm:$0xff]
                %285 = vst [vmem:[%s187 + $0x180] sm:$0xff] %v284
                %v286 = vld [vmem:[%s186 + $0x308] sm:$0xff]
                %287 = vst [vmem:[%s187 + $0x188] sm:$0xff] %v286
                %v288 = vld [vmem:[%s186 + $0x310] sm:$0xff]
                %289 = vst [vmem:[%s187 + $0x190] sm:$0xff] %v288
                %v290 = vld [vmem:[%s186 + $0x318] sm:$0xff]
                %291 = vst [vmem:[%s187 + $0x198] sm:$0xff] %v290
                %v292 = vld [vmem:[%s186 + $0x340] sm:$0xff]
                %293 = vst [vmem:[%s187 + $0x1a0] sm:$0xff] %v292
                %v294 = vld [vmem:[%s186 + $0x348] sm:$0xff]
                %295 = vst [vmem:[%s187 + $0x1a8] sm:$0xff] %v294
                %v296 = vld [vmem:[%s186 + $0x350] sm:$0xff]
                %297 = vst [vmem:[%s187 + $0x1b0] sm:$0xff] %v296
                %v298 = vld [vmem:[%s186 + $0x358] sm:$0xff]
                %299 = vst [vmem:[%s187 + $0x1b8] sm:$0xff] %v298
                %v300 = vld [vmem:[%s186 + $0x380] sm:$0xff]
                %301 = vst [vmem:[%s187 + $0x1c0] sm:$0xff] %v300
                %v302 = vld [vmem:[%s186 + $0x388] sm:$0xff]
                %303 = vst [vmem:[%s187 + $0x1c8] sm:$0xff] %v302
                %v304 = vld [vmem:[%s186 + $0x390] sm:$0xff]
                %305 = vst [vmem:[%s187 + $0x1d0] sm:$0xff] %v304
                %v306 = vld [vmem:[%s186 + $0x398] sm:$0xff]
                %307 = vst [vmem:[%s187 + $0x1d8] sm:$0xff] %v306
                %v308 = vld [vmem:[%s186 + $0x3c0] sm:$0xff]
                %309 = vst [vmem:[%s187 + $0x1e0] sm:$0xff] %v308
                %v310 = vld [vmem:[%s186 + $0x3c8] sm:$0xff]
                %311 = vst [vmem:[%s187 + $0x1e8] sm:$0xff] %v310
                %v312 = vld [vmem:[%s186 + $0x3d0] sm:$0xff]
                %313 = vst [vmem:[%s187 + $0x1f0] sm:$0xff] %v312
                %v314 = vld [vmem:[%s186 + $0x3d8] sm:$0xff]
                %315 = vst [vmem:[%s187 + $0x1f8] sm:$0xff] %v314
              $region37: #{_lambda_.5} parent=31 // loop_footer
                %s185 = sadd.s32 1, %s181
              $region38: #{_lambda_.5} parent=31 // loop_footer_branch
                %180 = sbr.rel target = $region34
              $region39: #{_lambda_.5} parent=31 // loop_exit
                _
            $region32: #{_lambda_.5} parent=27 // pred_fallthru
              _
            // Predicated region
            $region40: #{_lambda_.5} parent=27 // pred_check
              _
            $region41: #{_lambda_.5} parent=27 // pred_check_branch
              %317 = sbr.rel target = $region43
            $region42: #{_lambda_.5} parent=27 // pred_region
              _
            $region43: #{_lambda_.5} parent=27 // pred_fallthru
              _
          $region28: #{_lambda_.5} parent=23 // pred_fallthru
            _
          %318 = vnop
        $region24: #{_lambda_.5} parent=19 // pred_fallthru
          _
        // Predicated region
        $region44: #{_lambda_.5} parent=19 // pred_check
          %p319 = pneg %p78
        $region45: #{_lambda_.5} parent=19 // pred_check_branch
          %321 = sbr.rel (%p319) target = $region47
        $region46: #{_lambda_.5} parent=19 // pred_region
          %s322 = smul.u32 64, %s18
          %p323 = scmp.lt.s32.totalorder %s322, 127
          %s324 = scalar_select %p323, %s322, 127
          %p325 = scmp.lt.s32.totalorder %s17, 0
          %s326 = scalar_select %p325, %s17, 0
          %s327 = sadd.s32 %s326, %s324
          %s328 = smul.addr %s327, 8
          %s329 = scalar_lea.vmem %s1, %s328
          %s330 = smul.u32 64, %s18
        $region47: #{_lambda_.5} parent=19 // pred_fallthru
          _
      $region20: #{_lambda_.5} parent=5 // pred_fallthru
        _
      %p331 = scmp.le.s32.totalorder 1, %s9
      %p332 = scmp.lt.s32.totalorder %s9, 3
      %p333 = pnand %p331, %p332
      %p334 = pneg %p333
      // Predicated region
      $region48: #{_lambda_.5} parent=5 // pred_check
        _
      $region49: #{_lambda_.5} parent=5 // pred_check_branch
        %336 = sbr.rel (%p333) target = $region51
      $region50: #{_lambda_.5} parent=5 // pred_region
        %s337 = ssub.s32 %s9, 1
        %s338 = sand.u32 %s43, 1
        %s339 = sand.u32 %s43, 1
        %s340 = smul.addr %s339, 512
        %s341 = scalar_lea.vmem [#allocation3], %s340
        // Predicated region
        $region52: #{_lambda_.5} parent=50 // pred_check
          %p342 = pneg %p56
        $region53: #{_lambda_.5} parent=50 // pred_check_branch
          %344 = sbr.rel (%p342) target = $region55
        $region54: #{_lambda_.5} parent=50 // pred_region
          _
        $region55: #{_lambda_.5} parent=50 // pred_fallthru
          _
        %s345 = sand.u32 %s43, 1
        %s346 = sand.u32 %s43, 1
        %s347 = smul.addr %s346, 512
        %s348 = scalar_lea.vmem [#allocation3], %s347
        %p349 = pneg %p56
        %p350 = pneg %p53
        %s351 = smul.u32 64, %s21
        %p352 = scmp.lt.s32.totalorder %s351, 127
        %s353 = scalar_select %p352, %s351, 127
        %p354 = scmp.lt.s32.totalorder %s20, 0
        %s355 = scalar_select %p354, %s20, 0
        %s356 = sadd.s32 %s355, %s353
        %s357 = smul.addr %s356, 8
        %s358 = scalar_lea.vmem %s1, %s357
        %p359 = pneg %p84
        %p360 = pneg %p81
        %p361 = scmp.lt.s32.totalorder %s20, 0
        %s362 = scalar_select %p361, %s20, 0
        %s363 = scalar_lea.vmem %s2, %s362
        %p364 = pneg %p110
        %p365 = pneg %p107
        %p366 = pneg %p138
        %p367 = pneg %p135
        %s368 = smul.u32 16, %s19
        %p369 = scmp.lt.s32.totalorder %s368, 15
        %s370 = scalar_select %p369, %s368, 15
        %p371 = scmp.lt.s32.totalorder %s20, 0
        %s372 = scalar_select %p371, %s20, 0
        %s373 = sadd.s32 %s372, %s370
        %s374 = smul.addr %s373, 8
        %s375 = scalar_lea.vmem %s3, %s374
        %s376 = smul.u32 16, %s19
        %s377 = smul.u32 4, %s21
        %s378 = smul.u32 64, %s21
        %p379 = scmp.lt.s32.totalorder %s378, 127
        %s380 = scalar_select %p379, %s378, 127
        %p381 = scmp.lt.s32.totalorder %s20, 0
        %s382 = scalar_select %p381, %s20, 0
        %s383 = sadd.s32 %s382, %s380
        %s384 = smul.addr %s383, 8
        %s385 = scalar_lea.vmem %s1, %s384
        %s386 = smul.u32 64, %s21
        %p387 = scmp.lt.s32.totalorder %s20, 0
        %s388 = scalar_select %p387, %s20, 0
        %s389 = scalar_lea.vmem %s2, %s388
        %s390 = smul.u32 16, %s19
        %p391 = scmp.lt.s32.totalorder %s390, 15
        %s392 = scalar_select %p391, %s390, 15
        %p393 = scmp.lt.s32.totalorder %s20, 0
        %s394 = scalar_select %p393, %s20, 0
        %s395 = sadd.s32 %s394, %s392
        %s396 = smul.addr %s395, 8
        %s397 = scalar_lea.vmem %s3, %s396
        %s398 = smul.u32 16, %s19
        %p399 = scmp.eq.s32.totalorder %s21, 0
        // Predicated region
        $region56: #{_lambda_.5} parent=50 // pred_check
          %p400 = pneg %p399
        $region57: #{_lambda_.5} parent=50 // pred_check_branch
          %402 = sbr.rel (%p400) target = $region59
        $region58: #{_lambda_.5} parent=50 // pred_region
          %403 = vst [vmem:[#allocation2] sm:$0xff] 0.0
          %404 = vst [vmem:[#allocation2 + $0x8] sm:$0xff] 0.0
          %405 = vst [vmem:[#allocation2 + $0x10] sm:$0xff] 0.0
          %406 = vst [vmem:[#allocation2 + $0x18] sm:$0xff] 0.0
          %407 = vst [vmem:[#allocation2 + $0x20] sm:$0xff] 0.0
          %408 = vst [vmem:[#allocation2 + $0x28] sm:$0xff] 0.0
          %409 = vst [vmem:[#allocation2 + $0x30] sm:$0xff] 0.0
          %410 = vst [vmem:[#allocation2 + $0x38] sm:$0xff] 0.0
          %411 = vst [vmem:[#allocation2 + $0x40] sm:$0xff] 0.0
          %412 = vst [vmem:[#allocation2 + $0x48] sm:$0xff] 0.0
          %413 = vst [vmem:[#allocation2 + $0x50] sm:$0xff] 0.0
          %414 = vst [vmem:[#allocation2 + $0x58] sm:$0xff] 0.0
          %415 = vst [vmem:[#allocation2 + $0x60] sm:$0xff] 0.0
          %416 = vst [vmem:[#allocation2 + $0x68] sm:$0xff] 0.0
          %417 = vst [vmem:[#allocation2 + $0x70] sm:$0xff] 0.0
          %418 = vst [vmem:[#allocation2 + $0x78] sm:$0xff] 0.0
        $region59: #{_lambda_.5} parent=50 // pred_fallthru
          _
        %v419 = vld [vmem:[#allocation2] sm:$0xff]
        %v420 = vld [vmem:[#allocation2 + $0x8] sm:$0xff]
        %v421 = vld [vmem:[#allocation2 + $0x10] sm:$0xff]
        %v422 = vld [vmem:[#allocation2 + $0x18] sm:$0xff]
        %v423 = vld [vmem:[#allocation2 + $0x20] sm:$0xff]
        %v424 = vld [vmem:[#allocation2 + $0x28] sm:$0xff]
        %v425 = vld [vmem:[#allocation2 + $0x30] sm:$0xff]
        %v426 = vld [vmem:[#allocation2 + $0x38] sm:$0xff]
        %v427 = vld [vmem:[#allocation2 + $0x40] sm:$0xff]
        %v428 = vld [vmem:[#allocation2 + $0x48] sm:$0xff]
        %v429 = vld [vmem:[#allocation2 + $0x50] sm:$0xff]
        %v430 = vld [vmem:[#allocation2 + $0x58] sm:$0xff]
        %v431 = vld [vmem:[#allocation2 + $0x60] sm:$0xff]
        %v432 = vld [vmem:[#allocation2 + $0x68] sm:$0xff]
        %v433 = vld [vmem:[#allocation2 + $0x70] sm:$0xff]
        %v434 = vld [vmem:[#allocation2 + $0x78] sm:$0xff]
        %v435 = vld [vmem:[%s341] sm:$0xff]
        %v436 = vld [vmem:[%s341 + $0x8] sm:$0xff]
        %v437 = vld [vmem:[%s341 + $0x10] sm:$0xff]
        %v438 = vld [vmem:[%s341 + $0x18] sm:$0xff]
        %v439 = vld [vmem:[%s341 + $0x20] sm:$0xff]
        %v440 = vld [vmem:[%s341 + $0x28] sm:$0xff]
        %v441 = vld [vmem:[%s341 + $0x30] sm:$0xff]
        %v442 = vld [vmem:[%s341 + $0x38] sm:$0xff]
        %v443 = vld [vmem:[%s341 + $0x40] sm:$0xff]
        %v444 = vld [vmem:[%s341 + $0x48] sm:$0xff]
        %v445 = vld [vmem:[%s341 + $0x50] sm:$0xff]
        %v446 = vld [vmem:[%s341 + $0x58] sm:$0xff]
        %v447 = vld [vmem:[%s341 + $0x60] sm:$0xff]
        %v448 = vld [vmem:[%s341 + $0x68] sm:$0xff]
        %v449 = vld [vmem:[%s341 + $0x70] sm:$0xff]
        %v450 = vld [vmem:[%s341 + $0x78] sm:$0xff]
        %v451 = vld [vmem:[%s341 + $0x80] sm:$0xff]
        %v452 = vld [vmem:[%s341 + $0x88] sm:$0xff]
        %v453 = vld [vmem:[%s341 + $0x90] sm:$0xff]
        %v454 = vld [vmem:[%s341 + $0x98] sm:$0xff]
        %v455 = vld [vmem:[%s341 + $0xa0] sm:$0xff]
        %v456 = vld [vmem:[%s341 + $0xa8] sm:$0xff]
        %v457 = vld [vmem:[%s341 + $0xb0] sm:$0xff]
        %v458 = vld [vmem:[%s341 + $0xb8] sm:$0xff]
        %v459 = vld [vmem:[%s341 + $0xc0] sm:$0xff]
        %v460 = vld [vmem:[%s341 + $0xc8] sm:$0xff]
        %v461 = vld [vmem:[%s341 + $0xd0] sm:$0xff]
        %v462 = vld [vmem:[%s341 + $0xd8] sm:$0xff]
        %v463 = vld [vmem:[%s341 + $0xe0] sm:$0xff]
        %v464 = vld [vmem:[%s341 + $0xe8] sm:$0xff]
        %v465 = vld [vmem:[%s341 + $0xf0] sm:$0xff]
        %v466 = vld [vmem:[%s341 + $0xf8] sm:$0xff]
        %v467 = vld [vmem:[%s341 + $0x100] sm:$0xff]
        %v468 = vld [vmem:[%s341 + $0x108] sm:$0xff]
        %v469 = vld [vmem:[%s341 + $0x110] sm:$0xff]
        %v470 = vld [vmem:[%s341 + $0x118] sm:$0xff]
        %v471 = vld [vmem:[%s341 + $0x120] sm:$0xff]
        %v472 = vld [vmem:[%s341 + $0x128] sm:$0xff]
        %v473 = vld [vmem:[%s341 + $0x130] sm:$0xff]
        %v474 = vld [vmem:[%s341 + $0x138] sm:$0xff]
        %v475 = vld [vmem:[%s341 + $0x140] sm:$0xff]
        %v476 = vld [vmem:[%s341 + $0x148] sm:$0xff]
        %v477 = vld [vmem:[%s341 + $0x150] sm:$0xff]
        %v478 = vld [vmem:[%s341 + $0x158] sm:$0xff]
        %v479 = vld [vmem:[%s341 + $0x160] sm:$0xff]
        %v480 = vld [vmem:[%s341 + $0x168] sm:$0xff]
        %v481 = vld [vmem:[%s341 + $0x170] sm:$0xff]
        %v482 = vld [vmem:[%s341 + $0x178] sm:$0xff]
        %v483 = vld [vmem:[%s341 + $0x180] sm:$0xff]
        %v484 = vld [vmem:[%s341 + $0x188] sm:$0xff]
        %v485 = vld [vmem:[%s341 + $0x190] sm:$0xff]
        %v486 = vld [vmem:[%s341 + $0x198] sm:$0xff]
        %v487 = vld [vmem:[%s341 + $0x1a0] sm:$0xff]
        %v488 = vld [vmem:[%s341 + $0x1a8] sm:$0xff]
        %v489 = vld [vmem:[%s341 + $0x1b0] sm:$0xff]
        %v490 = vld [vmem:[%s341 + $0x1b8] sm:$0xff]
        %v491 = vld [vmem:[%s341 + $0x1c0] sm:$0xff]
        %v492 = vld [vmem:[%s341 + $0x1c8] sm:$0xff]
        %v493 = vld [vmem:[%s341 + $0x1d0] sm:$0xff]
        %v494 = vld [vmem:[%s341 + $0x1d8] sm:$0xff]
        %v495 = vld [vmem:[%s341 + $0x1e0] sm:$0xff]
        %v496 = vld [vmem:[%s341 + $0x1e8] sm:$0xff]
        %v497 = vld [vmem:[%s341 + $0x1f0] sm:$0xff]
        %v498 = vld [vmem:[%s341 + $0x1f8] sm:$0xff]
        %v499 = vld [vmem:[%s385] sm:$0xff]
        %v500 = vld [vmem:[%s385 + $0x8] sm:$0xff]
        %v501 = vld [vmem:[%s385 + $0x10] sm:$0xff]
        %v502 = vld [vmem:[%s385 + $0x18] sm:$0xff]
        %v503 = vld [vmem:[%s385 + $0x20] sm:$0xff]
        %v504 = vld [vmem:[%s385 + $0x28] sm:$0xff]
        %v505 = vld [vmem:[%s385 + $0x30] sm:$0xff]
        %v506 = vld [vmem:[%s385 + $0x38] sm:$0xff]
        %v507 = vld [vmem:[%s385 + $0x40] sm:$0xff]
        %v508 = vld [vmem:[%s385 + $0x48] sm:$0xff]
        %v509 = vld [vmem:[%s385 + $0x50] sm:$0xff]
        %v510 = vld [vmem:[%s385 + $0x58] sm:$0xff]
        %v511 = vld [vmem:[%s385 + $0x60] sm:$0xff]
        %v512 = vld [vmem:[%s385 + $0x68] sm:$0xff]
        %v513 = vld [vmem:[%s385 + $0x70] sm:$0xff]
        %v514 = vld [vmem:[%s385 + $0x78] sm:$0xff]
        %v515 = vld [vmem:[%s385 + $0x80] sm:$0xff]
        %v516 = vld [vmem:[%s385 + $0x88] sm:$0xff]
        %v517 = vld [vmem:[%s385 + $0x90] sm:$0xff]
        %v518 = vld [vmem:[%s385 + $0x98] sm:$0xff]
        %v519 = vld [vmem:[%s385 + $0xa0] sm:$0xff]
        %v520 = vld [vmem:[%s385 + $0xa8] sm:$0xff]
        %v521 = vld [vmem:[%s385 + $0xb0] sm:$0xff]
        %v522 = vld [vmem:[%s385 + $0xb8] sm:$0xff]
        %v523 = vld [vmem:[%s385 + $0xc0] sm:$0xff]
        %v524 = vld [vmem:[%s385 + $0xc8] sm:$0xff]
        %v525 = vld [vmem:[%s385 + $0xd0] sm:$0xff]
        %v526 = vld [vmem:[%s385 + $0xd8] sm:$0xff]
        %v527 = vld [vmem:[%s385 + $0xe0] sm:$0xff]
        %v528 = vld [vmem:[%s385 + $0xe8] sm:$0xff]
        %v529 = vld [vmem:[%s385 + $0xf0] sm:$0xff]
        %v530 = vld [vmem:[%s385 + $0xf8] sm:$0xff]
        %v531 = vld [vmem:[%s385 + $0x100] sm:$0xff]
        %v532 = vld [vmem:[%s385 + $0x108] sm:$0xff]
        %v533 = vld [vmem:[%s385 + $0x110] sm:$0xff]
        %v534 = vld [vmem:[%s385 + $0x118] sm:$0xff]
        %v535 = vld [vmem:[%s385 + $0x120] sm:$0xff]
        %v536 = vld [vmem:[%s385 + $0x128] sm:$0xff]
        %v537 = vld [vmem:[%s385 + $0x130] sm:$0xff]
        %v538 = vld [vmem:[%s385 + $0x138] sm:$0xff]
        %v539 = vld [vmem:[%s385 + $0x140] sm:$0xff]
        %v540 = vld [vmem:[%s385 + $0x148] sm:$0xff]
        %v541 = vld [vmem:[%s385 + $0x150] sm:$0xff]
        %v542 = vld [vmem:[%s385 + $0x158] sm:$0xff]
        %v543 = vld [vmem:[%s385 + $0x160] sm:$0xff]
        %v544 = vld [vmem:[%s385 + $0x168] sm:$0xff]
        %v545 = vld [vmem:[%s385 + $0x170] sm:$0xff]
        %v546 = vld [vmem:[%s385 + $0x178] sm:$0xff]
        %v547 = vld [vmem:[%s385 + $0x180] sm:$0xff]
        %v548 = vld [vmem:[%s385 + $0x188] sm:$0xff]
        %v549 = vld [vmem:[%s385 + $0x190] sm:$0xff]
        %v550 = vld [vmem:[%s385 + $0x198] sm:$0xff]
        %v551 = vld [vmem:[%s385 + $0x1a0] sm:$0xff]
        %v552 = vld [vmem:[%s385 + $0x1a8] sm:$0xff]
        %v553 = vld [vmem:[%s385 + $0x1b0] sm:$0xff]
        %v554 = vld [vmem:[%s385 + $0x1b8] sm:$0xff]
        %v555 = vld [vmem:[%s385 + $0x1c0] sm:$0xff]
        %v556 = vld [vmem:[%s385 + $0x1c8] sm:$0xff]
        %v557 = vld [vmem:[%s385 + $0x1d0] sm:$0xff]
        %v558 = vld [vmem:[%s385 + $0x1d8] sm:$0xff]
        %v559 = vld [vmem:[%s385 + $0x1e0] sm:$0xff]
        %v560 = vld [vmem:[%s385 + $0x1e8] sm:$0xff]
        %v561 = vld [vmem:[%s385 + $0x1f0] sm:$0xff]
        %v562 = vld [vmem:[%s385 + $0x1f8] sm:$0xff]
        %563 = vmatpush.msra.mxu0 %v514
        %564 = vmatpush.msra.mxu0 %v513
        %565 = vmatpush.msra.mxu0 %v512
        %566 = vmatpush.msra.mxu0 %v511
        %567 = vmatpush.msra.mxu0 %v510
        %568 = vmatpush.msra.mxu0 %v509
        %569 = vmatpush.msra.mxu0 %v508
        %570 = vmatpush.msra.mxu0 %v507
        %571 = vmatpush.msra.mxu0 %v506
        %572 = vmatpush.msra.mxu0 %v505
        %573 = vmatpush.msra.mxu0 %v504
        %574 = vmatpush.msra.mxu0 %v503
        %575 = vmatpush.msra.mxu0 %v502
        %576 = vmatpush.msra.mxu0 %v501
        %577 = vmatpush.msra.mxu0 %v500
        %578 = vmatpush.msra.mxu0 %v499
        %579 = vmatmul.f32.gmra.mxu0 %v435
        %v580 = vpop.f32.mrf.mxu0
        %v581 = vadd.f32 0.0, %v580
        %582 = vmatmul.f32.gmra.mxu0 %v439
        %v583 = vpop.f32.mrf.mxu0
        %v584 = vadd.f32 0.0, %v583
        %585 = vmatmul.f32.gmra.mxu0 %v443
        %v586 = vpop.f32.mrf.mxu0
        %v587 = vadd.f32 0.0, %v586
        %588 = vmatmul.f32.gmra.mxu0 %v447
        %v589 = vpop.f32.mrf.mxu0
        %v590 = vadd.f32 0.0, %v589
        %591 = vmatmul.f32.gmra.mxu0 %v451
        %v592 = vpop.f32.mrf.mxu0
        %v593 = vadd.f32 0.0, %v592
        %594 = vmatmul.f32.gmra.mxu0 %v455
        %v595 = vpop.f32.mrf.mxu0
        %v596 = vadd.f32 0.0, %v595
        %597 = vmatmul.f32.gmra.mxu0 %v459
        %v598 = vpop.f32.mrf.mxu0
        %v599 = vadd.f32 0.0, %v598
        %600 = vmatmul.f32.gmra.mxu0 %v463
        %v601 = vpop.f32.mrf.mxu0
        %v602 = vadd.f32 0.0, %v601
        %603 = vmatmul.f32.gmra.mxu0 %v467
        %v604 = vpop.f32.mrf.mxu0
        %v605 = vadd.f32 0.0, %v604
        %606 = vmatmul.f32.gmra.mxu0 %v471
        %v607 = vpop.f32.mrf.mxu0
        %v608 = vadd.f32 0.0, %v607
        %609 = vmatmul.f32.gmra.mxu0 %v475
        %v610 = vpop.f32.mrf.mxu0
        %v611 = vadd.f32 0.0, %v610
        %612 = vmatmul.f32.gmra.mxu0 %v479
        %v613 = vpop.f32.mrf.mxu0
        %v614 = vadd.f32 0.0, %v613
        %615 = vmatmul.f32.gmra.mxu0 %v483
        %v616 = vpop.f32.mrf.mxu0
        %v617 = vadd.f32 0.0, %v616
        %618 = vmatmul.f32.gmra.mxu0 %v487
        %v619 = vpop.f32.mrf.mxu0
        %v620 = vadd.f32 0.0, %v619
        %621 = vmatmul.f32.gmra.mxu0 %v491
        %v622 = vpop.f32.mrf.mxu0
        %v623 = vadd.f32 0.0, %v622
        %624 = vmatmul.f32.gmra.mxu0 %v495
        %v625 = vpop.f32.mrf.mxu0
        %v626 = vadd.f32 0.0, %v625
        %627 = vdwg.mxu0
        %628 = vmatpush.msra.mxu0 %v530
        %629 = vmatpush.msra.mxu0 %v529
        %630 = vmatpush.msra.mxu0 %v528
        %631 = vmatpush.msra.mxu0 %v527
        %632 = vmatpush.msra.mxu0 %v526
        %633 = vmatpush.msra.mxu0 %v525
        %634 = vmatpush.msra.mxu0 %v524
        %635 = vmatpush.msra.mxu0 %v523
        %636 = vmatpush.msra.mxu0 %v522
        %637 = vmatpush.msra.mxu0 %v521
        %638 = vmatpush.msra.mxu0 %v520
        %639 = vmatpush.msra.mxu0 %v519
        %640 = vmatpush.msra.mxu0 %v518
        %641 = vmatpush.msra.mxu0 %v517
        %642 = vmatpush.msra.mxu0 %v516
        %643 = vmatpush.msra.mxu0 %v515
        %644 = vmatmul.f32.gmra.mxu0 %v436
        %v645 = vpop.f32.mrf.mxu0
        %v646 = vadd.f32 %v581, %v645
        %647 = vmatmul.f32.gmra.mxu0 %v440
        %v648 = vpop.f32.mrf.mxu0
        %v649 = vadd.f32 %v584, %v648
        %650 = vmatmul.f32.gmra.mxu0 %v444
        %v651 = vpop.f32.mrf.mxu0
        %v652 = vadd.f32 %v587, %v651
        %653 = vmatmul.f32.gmra.mxu0 %v448
        %v654 = vpop.f32.mrf.mxu0
        %v655 = vadd.f32 %v590, %v654
        %656 = vmatmul.f32.gmra.mxu0 %v452
        %v657 = vpop.f32.mrf.mxu0
        %v658 = vadd.f32 %v593, %v657
        %659 = vmatmul.f32.gmra.mxu0 %v456
        %v660 = vpop.f32.mrf.mxu0
        %v661 = vadd.f32 %v596, %v660
        %662 = vmatmul.f32.gmra.mxu0 %v460
        %v663 = vpop.f32.mrf.mxu0
        %v664 = vadd.f32 %v599, %v663
        %665 = vmatmul.f32.gmra.mxu0 %v464
        %v666 = vpop.f32.mrf.mxu0
        %v667 = vadd.f32 %v602, %v666
        %668 = vmatmul.f32.gmra.mxu0 %v468
        %v669 = vpop.f32.mrf.mxu0
        %v670 = vadd.f32 %v605, %v669
        %671 = vmatmul.f32.gmra.mxu0 %v472
        %v672 = vpop.f32.mrf.mxu0
        %v673 = vadd.f32 %v608, %v672
        %674 = vmatmul.f32.gmra.mxu0 %v476
        %v675 = vpop.f32.mrf.mxu0
        %v676 = vadd.f32 %v611, %v675
        %677 = vmatmul.f32.gmra.mxu0 %v480
        %v678 = vpop.f32.mrf.mxu0
        %v679 = vadd.f32 %v614, %v678
        %680 = vmatmul.f32.gmra.mxu0 %v484
        %v681 = vpop.f32.mrf.mxu0
        %v682 = vadd.f32 %v617, %v681
        %683 = vmatmul.f32.gmra.mxu0 %v488
        %v684 = vpop.f32.mrf.mxu0
        %v685 = vadd.f32 %v620, %v684
        %686 = vmatmul.f32.gmra.mxu0 %v492
        %v687 = vpop.f32.mrf.mxu0
        %v688 = vadd.f32 %v623, %v687
        %689 = vmatmul.f32.gmra.mxu0 %v496
        %v690 = vpop.f32.mrf.mxu0
        %v691 = vadd.f32 %v626, %v690
        %692 = vdwg.mxu0
        %693 = vmatpush.msra.mxu0 %v546
        %694 = vmatpush.msra.mxu0 %v545
        %695 = vmatpush.msra.mxu0 %v544
        %696 = vmatpush.msra.mxu0 %v543
        %697 = vmatpush.msra.mxu0 %v542
        %698 = vmatpush.msra.mxu0 %v541
        %699 = vmatpush.msra.mxu0 %v540
        %700 = vmatpush.msra.mxu0 %v539
        %701 = vmatpush.msra.mxu0 %v538
        %702 = vmatpush.msra.mxu0 %v537
        %703 = vmatpush.msra.mxu0 %v536
        %704 = vmatpush.msra.mxu0 %v535
        %705 = vmatpush.msra.mxu0 %v534
        %706 = vmatpush.msra.mxu0 %v533
        %707 = vmatpush.msra.mxu0 %v532
        %708 = vmatpush.msra.mxu0 %v531
        %709 = vmatmul.f32.gmra.mxu0 %v437
        %v710 = vpop.f32.mrf.mxu0
        %v711 = vadd.f32 %v646, %v710
        %712 = vmatmul.f32.gmra.mxu0 %v441
        %v713 = vpop.f32.mrf.mxu0
        %v714 = vadd.f32 %v649, %v713
        %715 = vmatmul.f32.gmra.mxu0 %v445
        %v716 = vpop.f32.mrf.mxu0
        %v717 = vadd.f32 %v652, %v716
        %718 = vmatmul.f32.gmra.mxu0 %v449
        %v719 = vpop.f32.mrf.mxu0
        %v720 = vadd.f32 %v655, %v719
        %721 = vmatmul.f32.gmra.mxu0 %v453
        %v722 = vpop.f32.mrf.mxu0
        %v723 = vadd.f32 %v658, %v722
        %724 = vmatmul.f32.gmra.mxu0 %v457
        %v725 = vpop.f32.mrf.mxu0
        %v726 = vadd.f32 %v661, %v725
        %727 = vmatmul.f32.gmra.mxu0 %v461
        %v728 = vpop.f32.mrf.mxu0
        %v729 = vadd.f32 %v664, %v728
        %730 = vmatmul.f32.gmra.mxu0 %v465
        %v731 = vpop.f32.mrf.mxu0
        %v732 = vadd.f32 %v667, %v731
        %733 = vmatmul.f32.gmra.mxu0 %v469
        %v734 = vpop.f32.mrf.mxu0
        %v735 = vadd.f32 %v670, %v734
        %736 = vmatmul.f32.gmra.mxu0 %v473
        %v737 = vpop.f32.mrf.mxu0
        %v738 = vadd.f32 %v673, %v737
        %739 = vmatmul.f32.gmra.mxu0 %v477
        %v740 = vpop.f32.mrf.mxu0
        %v741 = vadd.f32 %v676, %v740
        %742 = vmatmul.f32.gmra.mxu0 %v481
        %v743 = vpop.f32.mrf.mxu0
        %v744 = vadd.f32 %v679, %v743
        %745 = vmatmul.f32.gmra.mxu0 %v485
        %v746 = vpop.f32.mrf.mxu0
        %v747 = vadd.f32 %v682, %v746
        %748 = vmatmul.f32.gmra.mxu0 %v489
        %v749 = vpop.f32.mrf.mxu0
        %v750 = vadd.f32 %v685, %v749
        %751 = vmatmul.f32.gmra.mxu0 %v493
        %v752 = vpop.f32.mrf.mxu0
        %v753 = vadd.f32 %v688, %v752
        %754 = vmatmul.f32.gmra.mxu0 %v497
        %v755 = vpop.f32.mrf.mxu0
        %v756 = vadd.f32 %v691, %v755
        %757 = vdwg.mxu0
        %758 = vmatpush.msra.mxu0 %v562
        %759 = vmatpush.msra.mxu0 %v561
        %760 = vmatpush.msra.mxu0 %v560
        %761 = vmatpush.msra.mxu0 %v559
        %762 = vmatpush.msra.mxu0 %v558
        %763 = vmatpush.msra.mxu0 %v557
        %764 = vmatpush.msra.mxu0 %v556
        %765 = vmatpush.msra.mxu0 %v555
        %766 = vmatpush.msra.mxu0 %v554
        %767 = vmatpush.msra.mxu0 %v553
        %768 = vmatpush.msra.mxu0 %v552
        %769 = vmatpush.msra.mxu0 %v551
        %770 = vmatpush.msra.mxu0 %v550
        %771 = vmatpush.msra.mxu0 %v549
        %772 = vmatpush.msra.mxu0 %v548
        %773 = vmatpush.msra.mxu0 %v547
        %774 = vmatmul.f32.gmra.mxu0 %v438
        %v775 = vpop.f32.mrf.mxu0
        %v776 = vadd.f32 %v711, %v775
        %777 = vmatmul.f32.gmra.mxu0 %v442
        %v778 = vpop.f32.mrf.mxu0
        %v779 = vadd.f32 %v714, %v778
        %780 = vmatmul.f32.gmra.mxu0 %v446
        %v781 = vpop.f32.mrf.mxu0
        %v782 = vadd.f32 %v717, %v781
        %783 = vmatmul.f32.gmra.mxu0 %v450
        %v784 = vpop.f32.mrf.mxu0
        %v785 = vadd.f32 %v720, %v784
        %786 = vmatmul.f32.gmra.mxu0 %v454
        %v787 = vpop.f32.mrf.mxu0
        %v788 = vadd.f32 %v723, %v787
        %789 = vmatmul.f32.gmra.mxu0 %v458
        %v790 = vpop.f32.mrf.mxu0
        %v791 = vadd.f32 %v726, %v790
        %792 = vmatmul.f32.gmra.mxu0 %v462
        %v793 = vpop.f32.mrf.mxu0
        %v794 = vadd.f32 %v729, %v793
        %795 = vmatmul.f32.gmra.mxu0 %v466
        %v796 = vpop.f32.mrf.mxu0
        %v797 = vadd.f32 %v732, %v796
        %798 = vmatmul.f32.gmra.mxu0 %v470
        %v799 = vpop.f32.mrf.mxu0
        %v800 = vadd.f32 %v735, %v799
        %801 = vmatmul.f32.gmra.mxu0 %v474
        %v802 = vpop.f32.mrf.mxu0
        %v803 = vadd.f32 %v738, %v802
        %804 = vmatmul.f32.gmra.mxu0 %v478
        %v805 = vpop.f32.mrf.mxu0
        %v806 = vadd.f32 %v741, %v805
        %807 = vmatmul.f32.gmra.mxu0 %v482
        %v808 = vpop.f32.mrf.mxu0
        %v809 = vadd.f32 %v744, %v808
        %810 = vmatmul.f32.gmra.mxu0 %v486
        %v811 = vpop.f32.mrf.mxu0
        %v812 = vadd.f32 %v747, %v811
        %813 = vmatmul.f32.gmra.mxu0 %v490
        %v814 = vpop.f32.mrf.mxu0
        %v815 = vadd.f32 %v750, %v814
        %816 = vmatmul.f32.gmra.mxu0 %v494
        %v817 = vpop.f32.mrf.mxu0
        %v818 = vadd.f32 %v753, %v817
        %819 = vmatmul.f32.gmra.mxu0 %v498
        %v820 = vpop.f32.mrf.mxu0
        %v821 = vadd.f32 %v756, %v820
        %822 = vdwg.mxu0
        %v823 = vadd.f32 %v419, %v776
        %v824 = vadd.f32 %v420, %v779
        %v825 = vadd.f32 %v421, %v782
        %v826 = vadd.f32 %v422, %v785
        %v827 = vadd.f32 %v423, %v788
        %v828 = vadd.f32 %v424, %v791
        %v829 = vadd.f32 %v425, %v794
        %v830 = vadd.f32 %v426, %v797
        %v831 = vadd.f32 %v427, %v800
        %v832 = vadd.f32 %v428, %v803
        %v833 = vadd.f32 %v429, %v806
        %v834 = vadd.f32 %v430, %v809
        %v835 = vadd.f32 %v431, %v812
        %v836 = vadd.f32 %v432, %v815
        %v837 = vadd.f32 %v433, %v818
        %v838 = vadd.f32 %v434, %v821
        %839 = vst [vmem:[#allocation2] sm:$0xff] %v823
        %840 = vst [vmem:[#allocation2 + $0x8] sm:$0xff] %v824
        %841 = vst [vmem:[#allocation2 + $0x10] sm:$0xff] %v825
        %842 = vst [vmem:[#allocation2 + $0x18] sm:$0xff] %v826
        %843 = vst [vmem:[#allocation2 + $0x20] sm:$0xff] %v827
        %844 = vst [vmem:[#allocation2 + $0x28] sm:$0xff] %v828
        %845 = vst [vmem:[#allocation2 + $0x30] sm:$0xff] %v829
        %846 = vst [vmem:[#allocation2 + $0x38] sm:$0xff] %v830
        %847 = vst [vmem:[#allocation2 + $0x40] sm:$0xff] %v831
        %848 = vst [vmem:[#allocation2 + $0x48] sm:$0xff] %v832
        %849 = vst [vmem:[#allocation2 + $0x50] sm:$0xff] %v833
        %850 = vst [vmem:[#allocation2 + $0x58] sm:$0xff] %v834
        %851 = vst [vmem:[#allocation2 + $0x60] sm:$0xff] %v835
        %852 = vst [vmem:[#allocation2 + $0x68] sm:$0xff] %v836
        %853 = vst [vmem:[#allocation2 + $0x70] sm:$0xff] %v837
        %854 = vst [vmem:[#allocation2 + $0x78] sm:$0xff] %v838
        %p855 = scmp.eq.s32.totalorder %s21, 1
        // Predicated region
        $region60: #{_lambda_.5} parent=50 // pred_check
          %p856 = pneg %p855
        $region61: #{_lambda_.5} parent=50 // pred_check_branch
          %858 = sbr.rel (%p856) target = $region63
        $region62: #{_lambda_.5} parent=50 // pred_region
          %v859 = vld [vmem:[#allocation2] sm:$0xff]
          %v860 = vld [vmem:[#allocation2 + $0x8] sm:$0xff]
          %v861 = vld [vmem:[#allocation2 + $0x10] sm:$0xff]
          %v862 = vld [vmem:[#allocation2 + $0x18] sm:$0xff]
          %v863 = vld [vmem:[#allocation2 + $0x20] sm:$0xff]
          %v864 = vld [vmem:[#allocation2 + $0x28] sm:$0xff]
          %v865 = vld [vmem:[#allocation2 + $0x30] sm:$0xff]
          %v866 = vld [vmem:[#allocation2 + $0x38] sm:$0xff]
          %v867 = vld [vmem:[#allocation2 + $0x40] sm:$0xff]
          %v868 = vld [vmem:[#allocation2 + $0x48] sm:$0xff]
          %v869 = vld [vmem:[#allocation2 + $0x50] sm:$0xff]
          %v870 = vld [vmem:[#allocation2 + $0x58] sm:$0xff]
          %v871 = vld [vmem:[#allocation2 + $0x60] sm:$0xff]
          %v872 = vld [vmem:[#allocation2 + $0x68] sm:$0xff]
          %v873 = vld [vmem:[#allocation2 + $0x70] sm:$0xff]
          %v874 = vld [vmem:[#allocation2 + $0x78] sm:$0xff]
          %v875 = vld [vmem:[%s389] sm:$0x1]
          %v877 = vperm.slane %v875, 0
          %v879 = vadd.f32 %v859, %v877
          %v880 = vadd.f32 %v860, %v877
          %v881 = vadd.f32 %v861, %v877
          %v882 = vadd.f32 %v862, %v877
          %v883 = vadd.f32 %v863, %v877
          %v884 = vadd.f32 %v864, %v877
          %v885 = vadd.f32 %v865, %v877
          %v886 = vadd.f32 %v866, %v877
          %v887 = vadd.f32 %v867, %v877
          %v888 = vadd.f32 %v868, %v877
          %v889 = vadd.f32 %v869, %v877
          %v890 = vadd.f32 %v870, %v877
          %v891 = vadd.f32 %v871, %v877
          %v892 = vadd.f32 %v872, %v877
          %v893 = vadd.f32 %v873, %v877
          %v894 = vadd.f32 %v874, %v877
          %v895 = vmax.f32 %v879, 0.0
          %v896 = vmax.f32 %v880, 0.0
          %v897 = vmax.f32 %v881, 0.0
          %v898 = vmax.f32 %v882, 0.0
          %v899 = vmax.f32 %v883, 0.0
          %v900 = vmax.f32 %v884, 0.0
          %v901 = vmax.f32 %v885, 0.0
          %v902 = vmax.f32 %v886, 0.0
          %v903 = vmax.f32 %v887, 0.0
          %v904 = vmax.f32 %v888, 0.0
          %v905 = vmax.f32 %v889, 0.0
          %v906 = vmax.f32 %v890, 0.0
          %v907 = vmax.f32 %v891, 0.0
          %v908 = vmax.f32 %v892, 0.0
          %v909 = vmax.f32 %v893, 0.0
          %v910 = vmax.f32 %v894, 0.0
          %911 = vst [vmem:[%s397] sm:$0xff] %v895
          %912 = vst [vmem:[%s397 + $0x8] sm:$0xff] %v896
          %913 = vst [vmem:[%s397 + $0x10] sm:$0xff] %v897
          %914 = vst [vmem:[%s397 + $0x18] sm:$0xff] %v898
          %915 = vst [vmem:[%s397 + $0x20] sm:$0xff] %v899
          %916 = vst [vmem:[%s397 + $0x28] sm:$0xff] %v900
          %917 = vst [vmem:[%s397 + $0x30] sm:$0xff] %v901
          %918 = vst [vmem:[%s397 + $0x38] sm:$0xff] %v902
          %919 = vst [vmem:[%s397 + $0x40] sm:$0xff] %v903
          %920 = vst [vmem:[%s397 + $0x48] sm:$0xff] %v904
          %921 = vst [vmem:[%s397 + $0x50] sm:$0xff] %v905
          %922 = vst [vmem:[%s397 + $0x58] sm:$0xff] %v906
          %923 = vst [vmem:[%s397 + $0x60] sm:$0xff] %v907
          %924 = vst [vmem:[%s397 + $0x68] sm:$0xff] %v908
          %925 = vst [vmem:[%s397 + $0x70] sm:$0xff] %v909
          %926 = vst [vmem:[%s397 + $0x78] sm:$0xff] %v910
        $region63: #{_lambda_.5} parent=50 // pred_fallthru
          _
        %s927 = smul.u32 16, %s19
        %p928 = scmp.lt.s32.totalorder %s927, 15
        %s929 = scalar_select %p928, %s927, 15
        %p930 = scmp.lt.s32.totalorder %s20, 0
        %s931 = scalar_select %p930, %s20, 0
        %s932 = sadd.s32 %s931, %s929
        %s933 = smul.addr %s932, 8
        %s934 = scalar_lea.vmem %s3, %s933
        // Predicated region
        $region64: #{_lambda_.5} parent=50 // pred_check
          %p935 = pneg %p135
        $region65: #{_lambda_.5} parent=50 // pred_check_branch
          %937 = sbr.rel (%p935) target = $region67
        $region66: #{_lambda_.5} parent=50 // pred_region
          %s938 = smul.u32 16, %s19
        $region67: #{_lambda_.5} parent=50 // pred_fallthru
          _
        // Predicated region
        $region68: #{_lambda_.5} parent=50 // pred_check
          %p939 = pneg %p135
        $region69: #{_lambda_.5} parent=50 // pred_check_branch
          %941 = sbr.rel (%p939) target = $region71
        $region70: #{_lambda_.5} parent=50 // pred_region
          %s942 = smul.u32 16, %s19
          %p943 = scmp.lt.s32.totalorder %s942, 15
          %s944 = scalar_select %p943, %s942, 15
          %p945 = scmp.lt.s32.totalorder %s20, 0
          %s946 = scalar_select %p945, %s20, 0
          %s947 = sadd.s32 %s946, %s944
          %s948 = smul.addr %s947, 8
          %s949 = scalar_lea.vmem %s3, %s948
        $region71: #{_lambda_.5} parent=50 // pred_fallthru
          _
      $region51: #{_lambda_.5} parent=5 // pred_fallthru
        _
      %p950 = scmp.le.s32.totalorder 2, %s9
      // Predicated region
      $region72: #{_lambda_.5} parent=5 // pred_check
        %p951 = pneg %p950
      $region73: #{_lambda_.5} parent=5 // pred_check_branch
        %953 = sbr.rel (%p951) target = $region75
      $region74: #{_lambda_.5} parent=5 // pred_region
        %s954 = ssub.s32 %s9, 2
      $region75: #{_lambda_.5} parent=5 // pred_fallthru
        _
    $region6: #{_lambda_.5} parent=1 // loop_footer
      %s13 = sadd.s32 1, %s9
    $region7: #{_lambda_.5} parent=1 // loop_footer_branch
      %8 = sbr.rel target = $region3
    $region8: #{_lambda_.5} parent=1 // loop_exit
      _

// kernel: _lambda_.6
$region0: #{_lambda_.6}
  #allocation0 [shape = 'u32[]', space=smem, size = 0x4, offset = 0x4, fixed_abs, tag = 'smem constant byte address 0x4 - core index']
  #allocation1 [shape = 'u32[72,128]{1,0:T(1,128)}', space=vmem, size = 0x9000, scoped, tag = 'internal scratch']
  #allocation2 [shape = 'f32[32,256]{1,0:T(8,128)}', space=vmem, size = 0x8000, scoped, tag = 'scratch operand']
  %s0 = inlined_call_operand.vmem [shape: f32[32,2048], index: 0, kind: input, shape index: {}]
  %s1 = inlined_call_operand.vmem [shape: f32[2048,256], index: 1, kind: input, shape index: {}]
  %s2 = inlined_call_operand.vmem [shape: f32[1,256], index: 2, kind: input, shape index: {}]
  %s3 = inlined_call_operand.vmem [shape: f32[32,256], index: 3, kind: output, shape index: {}]
  %s4 = sld [smem:[#allocation0]]
  $region76: #{_lambda_.6} parent=0
    _
  %s6 = ssub.s32 1, %s4
  %s7 = scalar_select 0, %s6, %s4
  $region1: #{_lambda_.6} parent=0
    #allocation3 [shape = 'u8[131072]{0}', space=vmem, size = 0x20000, scoped, tag = 'input window, operand 0']
    loop: start=0, step=1, limit=6
    $region2: #{_lambda_.6} parent=1 // loop_pre_header
      _
    $region3: #{_lambda_.6} parent=1 // loop_header
      %s9 = sphi 0, %s13
      %p10 = scmp.ge.s32.totalorder %s9, 6
      %s16 = sphi 0, %s35
      %s17 = sphi 0, %s31
      %s18 = sphi 0, %s27
      %s19 = sphi 0, %s16
      %s20 = sphi 0, %s17
      %s21 = sphi 0, %s18
      %s22 = sphi 0, %s19
      %s23 = sphi 0, %s20
      %s24 = sphi 0, %s21
      %s40 = sphi 0, %s42
      %s43 = sphi 0, %s40
      %s44 = sphi 0, %s43
      %s60 = sphi 0, %s44
      %s68 = sphi 0, %s70
      %s71 = sphi 0, %s68
      %s72 = sphi 0, %s71
      %s88 = sphi 0, %s72
      %s94 = sphi 0, %s96
      %s97 = sphi 0, %s94
      %s98 = sphi 0, %s97
      %s114 = sphi 0, %s98
      %s122 = sphi 0, %s124
      %s125 = sphi 0, %s122
      %s126 = sphi 0, %s125
      %s142 = sphi 0, %s126
    $region4: #{_lambda_.6} parent=1 // loop_header_branch
      %12 = sbr.rel (%p10) target = $region8
    $region5: #{_lambda_.6} parent=1 // loop_body
      %s14 = ssub.s32 %s9, 1
      %s15 = ssub.s32 %s9, 2
      %s25 = sadd.s32 1, %s18
      %p26 = scmp.ge.s32.totalorder %s25, 4
      %s27 = scalar_select %p26, 0, %s25
      %s28 = sadd.s32 1, %s17
      %s29 = scalar_select %p26, %s28, %s17
      %p30 = scmp.ge.s32.totalorder %s29, 1
      %s31 = scalar_select %p30, 0, %s29
      %s32 = sadd.s32 1, %s16
      %s33 = scalar_select %p30, %s32, %s16
      %p34 = scmp.ge.s32.totalorder %s33, 1
      %s35 = scalar_select %p34, 0, %s33
      %s36 = ssub.s32 %s16, %s35
      %s37 = ssub.s32 %s18, %s27
      %s38 = sor.u32 %s36, %s37
      %p39 = scmp.eq.s32.totalorder %s38, 0
      %s41 = sadd.s32 %s40, 1
      %s42 = scalar_select %p39, %s40, %s41
      %p45 = pneg %p39
      %p46 = scmp.eq.s32.totalorder %s9, 3
      %p47 = por %p45, %p46
      %p48 = scmp.ne.s32.totalorder %s40, %s43
      %p49 = scmp.eq.s32.totalorder %s9, 0
      %p50 = por %p48, %p49
      %p51 = scmp.ne.s32.totalorder %s40, %s43
      %p52 = scmp.eq.s32.totalorder %s14, 3
      %p53 = por %p51, %p52
      %p54 = scmp.ne.s32.totalorder %s43, %s44
      %p55 = scmp.eq.s32.totalorder %s14, 0
      %p56 = por %p54, %p55
      %p57 = scmp.ne.s32.totalorder %s43, %s44
      %p58 = scmp.eq.s32.totalorder %s15, 3
      %p59 = por %p57, %p58
      %p61 = scmp.ne.s32.totalorder %s44, %s60
      %p62 = scmp.eq.s32.totalorder %s15, 0
      %p63 = por %p61, %p62
      %s64 = ssub.s32 %s18, %s27
      %s65 = ssub.s32 %s17, %s31
      %s66 = sor.u32 %s64, %s65
      %p67 = scmp.eq.s32.totalorder %s66, 0
      %s69 = sadd.s32 %s68, 1
      %s70 = scalar_select %p67, %s68, %s69
      %p73 = pneg %p67
      %p74 = scmp.eq.s32.totalorder %s9, 3
      %p75 = por %p73, %p74
      %p76 = scmp.ne.s32.totalorder %s68, %s71
      %p77 = scmp.eq.s32.totalorder %s9, 0
      %p78 = por %p76, %p77
      %p79 = scmp.ne.s32.totalorder %s68, %s71
      %p80 = scmp.eq.s32.totalorder %s14, 3
      %p81 = por %p79, %p80
      %p82 = scmp.ne.s32.totalorder %s71, %s72
      %p83 = scmp.eq.s32.totalorder %s14, 0
      %p84 = por %p82, %p83
      %p85 = scmp.ne.s32.totalorder %s71, %s72
      %p86 = scmp.eq.s32.totalorder %s15, 3
      %p87 = por %p85, %p86
      %p89 = scmp.ne.s32.totalorder %s72, %s88
      %p90 = scmp.eq.s32.totalorder %s15, 0
      %p91 = por %p89, %p90
      %s92 = ssub.s32 %s17, %s31
      %p93 = scmp.eq.s32.totalorder %s92, 0
      %s95 = sadd.s32 %s94, 1
      %s96 = scalar_select %p93, %s94, %s95
      %p99 = pneg %p93
      %p100 = scmp.eq.s32.totalorder %s9, 3
      %p101 = por %p99, %p100
      %p102 = scmp.ne.s32.totalorder %s94, %s97
      %p103 = scmp.eq.s32.totalorder %s9, 0
      %p104 = por %p102, %p103
      %p105 = scmp.ne.s32.totalorder %s94, %s97
      %p106 = scmp.eq.s32.totalorder %s14, 3
      %p107 = por %p105, %p106
      %p108 = scmp.ne.s32.totalorder %s97, %s98
      %p109 = scmp.eq.s32.totalorder %s14, 0
      %p110 = por %p108, %p109
      %p111 = scmp.ne.s32.totalorder %s97, %s98
      %p112 = scmp.eq.s32.totalorder %s15, 3
      %p113 = por %p111, %p112
      %p115 = scmp.ne.s32.totalorder %s98, %s114
      %p116 = scmp.eq.s32.totalorder %s15, 0
      %p117 = por %p115, %p116
      %s118 = ssub.s32 %s16, %s35
      %s119 = ssub.s32 %s17, %s31
      %s120 = sor.u32 %s118, %s119
      %p121 = scmp.eq.s32.totalorder %s120, 0
      %s123 = sadd.s32 %s122, 1
      %s124 = scalar_select %p121, %s122, %s123
      %p127 = pneg %p121
      %p128 = scmp.eq.s32.totalorder %s9, 3
      %p129 = por %p127, %p128
      %p130 = scmp.ne.s32.totalorder %s122, %s125
      %p131 = scmp.eq.s32.totalorder %s9, 0
      %p132 = por %p130, %p131
      %p133 = scmp.ne.s32.totalorder %s122, %s125
      %p134 = scmp.eq.s32.totalorder %s14, 3
      %p135 = por %p133, %p134
      %p136 = scmp.ne.s32.totalorder %s125, %s126
      %p137 = scmp.eq.s32.totalorder %s14, 0
      %p138 = por %p136, %p137
      %p139 = scmp.ne.s32.totalorder %s125, %s126
      %p140 = scmp.eq.s32.totalorder %s15, 3
      %p141 = por %p139, %p140
      %p143 = scmp.ne.s32.totalorder %s126, %s142
      %p144 = scmp.eq.s32.totalorder %s15, 0
      %p145 = por %p143, %p144
      %p146 = scmp.le.s32.totalorder 1, %s9
      %p147 = scmp.lt.s32.totalorder %s9, 5
      %p148 = pnand %p146, %p147
      %p149 = pneg %p148
      // Predicated region
      $region9: #{_lambda_.6} parent=5 // pred_check
        _
      $region10: #{_lambda_.6} parent=5 // pred_check_branch
        %151 = sbr.rel (%p148) target = $region12
      $region11: #{_lambda_.6} parent=5 // pred_region
        %s152 = ssub.s32 %s9, 1
        // Predicated region
        $region13: #{_lambda_.6} parent=11 // pred_check
          %p153 = pneg %p110
        $region14: #{_lambda_.6} parent=11 // pred_check_branch
          %155 = sbr.rel (%p153) target = $region16
        $region15: #{_lambda_.6} parent=11 // pred_region
          %s156 = smul.u32 2, %s20
          %p157 = scmp.lt.s32.totalorder %s156, 1
          %s158 = scalar_select %p157, %s156, 1
          %s159 = scalar_lea.vmem %s2, %s158
          %s160 = smul.u32 2, %s20
        $region16: #{_lambda_.6} parent=11 // pred_fallthru
          _
      $region12: #{_lambda_.6} parent=5 // pred_fallthru
        _
      %p161 = scmp.lt.s32.totalorder %s9, 4
      // Predicated region
      $region17: #{_lambda_.6} parent=5 // pred_check
        %p162 = pneg %p161
      $region18: #{_lambda_.6} parent=5 // pred_check_branch
        %164 = sbr.rel (%p162) target = $region20
      $region19: #{_lambda_.6} parent=5 // pred_region
        // Predicated region
        $region21: #{_lambda_.6} parent=19 // pred_check
          %p165 = pneg %p50
        $region22: #{_lambda_.6} parent=19 // pred_check_branch
          %167 = sbr.rel (%p165) target = $region24
        $region23: #{_lambda_.6} parent=19 // pred_region
          %s168 = sand.u32 %s40, 1
          %s169 = sand.u32 %s40, 1
          %s170 = smul.addr %s169, 128
          %s171 = scalar_lea.vmem [#allocation3], %s170
          %s172 = smul.u32 4, %s16
          %s173 = smul.u32 4, %s18
          %s174 = smul.addr %s172, 16
          %s175 = sadd.s32 %s173, %s174
          %s176 = smul.addr %s175, 8
          %s177 = scalar_lea.vmem %s0, %s176
          // Predicated region
          $region25: #{_lambda_.6} parent=23 // pred_check
            _
          $region26: #{_lambda_.6} parent=23 // pred_check_branch
            %179 = sbr.rel (0) target = $region28
          $region27: #{_lambda_.6} parent=23 // pred_region
            // Predicated region
            $region29: #{_lambda_.6} parent=27 // pred_check
              _
            $region30: #{_lambda_.6} parent=27 // pred_check_branch
              %181 = sbr.rel (0) target = $region32
            $region31: #{_lambda_.6} parent=27 // pred_region
              loop: start=0, step=1, limit=1
              $region33: #{_lambda_.6} parent=31 // loop_pre_header
                _
              $region34: #{_lambda_.6} parent=31 // loop_header
                %s183 = sphi 0, %s187
                %p184 = scmp.ge.s32.totalorder %s183, 1
                %s188 = sphi %s177, %s177
                %s189 = sphi %s171, %s171
              $region35: #{_lambda_.6} parent=31 // loop_header_branch
                %186 = sbr.rel (%p184) target = $region39
              $region36: #{_lambda_.6} parent=31 // loop_body
                %v190 = vld [vmem:[%s188] sm:$0xff]
                %191 = vst [vmem:[%s189] sm:$0xff] %v190
                %v192 = vld [vmem:[%s188 + $0x8] sm:$0xff]
                %193 = vst [vmem:[%s189 + $0x8] sm:$0xff] %v192
                %v194 = vld [vmem:[%s188 + $0x10] sm:$0xff]
                %195 = vst [vmem:[%s189 + $0x10] sm:$0xff] %v194
                %v196 = vld [vmem:[%s188 + $0x18] sm:$0xff]
                %197 = vst [vmem:[%s189 + $0x18] sm:$0xff] %v196
                %v198 = vld [vmem:[%s188 + $0x80] sm:$0xff]
                %199 = vst [vmem:[%s189 + $0x20] sm:$0xff] %v198
                %v200 = vld [vmem:[%s188 + $0x88] sm:$0xff]
                %201 = vst [vmem:[%s189 + $0x28] sm:$0xff] %v200
                %v202 = vld [vmem:[%s188 + $0x90] sm:$0xff]
                %203 = vst [vmem:[%s189 + $0x30] sm:$0xff] %v202
                %v204 = vld [vmem:[%s188 + $0x98] sm:$0xff]
                %205 = vst [vmem:[%s189 + $0x38] sm:$0xff] %v204
                %v206 = vld [vmem:[%s188 + $0x100] sm:$0xff]
                %207 = vst [vmem:[%s189 + $0x40] sm:$0xff] %v206
                %v208 = vld [vmem:[%s188 + $0x108] sm:$0xff]
                %209 = vst [vmem:[%s189 + $0x48] sm:$0xff] %v208
                %v210 = vld [vmem:[%s188 + $0x110] sm:$0xff]
                %211 = vst [vmem:[%s189 + $0x50] sm:$0xff] %v210
                %v212 = vld [vmem:[%s188 + $0x118] sm:$0xff]
                %213 = vst [vmem:[%s189 + $0x58] sm:$0xff] %v212
                %v214 = vld [vmem:[%s188 + $0x180] sm:$0xff]
                %215 = vst [vmem:[%s189 + $0x60] sm:$0xff] %v214
                %v216 = vld [vmem:[%s188 + $0x188] sm:$0xff]
                %217 = vst [vmem:[%s189 + $0x68] sm:$0xff] %v216
                %v218 = vld [vmem:[%s188 + $0x190] sm:$0xff]
                %219 = vst [vmem:[%s189 + $0x70] sm:$0xff] %v218
                %v220 = vld [vmem:[%s188 + $0x198] sm:$0xff]
                %221 = vst [vmem:[%s189 + $0x78] sm:$0xff] %v220
              $region37: #{_lambda_.6} parent=31 // loop_footer
                %s187 = sadd.s32 1, %s183
              $region38: #{_lambda_.6} parent=31 // loop_footer_branch
                %182 = sbr.rel target = $region34
              $region39: #{_lambda_.6} parent=31 // loop_exit
                _
            $region32: #{_lambda_.6} parent=27 // pred_fallthru
              _
            // Predicated region
            $region40: #{_lambda_.6} parent=27 // pred_check
              _
            $region41: #{_lambda_.6} parent=27 // pred_check_branch
              %223 = sbr.rel target = $region43
            $region42: #{_lambda_.6} parent=27 // pred_region
              _
            $region43: #{_lambda_.6} parent=27 // pred_fallthru
              _
          $region28: #{_lambda_.6} parent=23 // pred_fallthru
            _
          %224 = vnop
        $region24: #{_lambda_.6} parent=19 // pred_fallthru
          _
        // Predicated region
        $region44: #{_lambda_.6} parent=19 // pred_check
          %p225 = pneg %p78
        $region45: #{_lambda_.6} parent=19 // pred_check_branch
          %227 = sbr.rel (%p225) target = $region47
        $region46: #{_lambda_.6} parent=19 // pred_region
          %s228 = smul.u32 64, %s18
          %s229 = smul.u32 2, %s17
          %p230 = scmp.lt.s32.totalorder %s228, 255
          %s231 = scalar_select %p230, %s228, 255
          %p232 = scmp.lt.s32.totalorder %s229, 1
          %s233 = scalar_select %p232, %s229, 1
          %s234 = smul.addr %s231, 2
          %s235 = sadd.s32 %s233, %s234
          %s236 = smul.addr %s235, 8
          %s237 = scalar_lea.vmem %s1, %s236
          %s238 = smul.u32 64, %s18
          %s239 = smul.u32 2, %s17
        $region47: #{_lambda_.6} parent=19 // pred_fallthru
          _
      $region20: #{_lambda_.6} parent=5 // pred_fallthru
        _
      %p240 = scmp.le.s32.totalorder 1, %s9
      %p241 = scmp.lt.s32.totalorder %s9, 5
      %p242 = pnand %p240, %p241
      %p243 = pneg %p242
      // Predicated region
      $region48: #{_lambda_.6} parent=5 // pred_check
        _
      $region49: #{_lambda_.6} parent=5 // pred_check_branch
        %245 = sbr.rel (%p242) target = $region51
      $region50: #{_lambda_.6} parent=5 // pred_region
        %s246 = ssub.s32 %s9, 1
        %s247 = sand.u32 %s43, 1
        %s248 = sand.u32 %s43, 1
        %s249 = smul.addr %s248, 128
        %s250 = scalar_lea.vmem [#allocation3], %s249
        // Predicated region
        $region52: #{_lambda_.6} parent=50 // pred_check
          %p251 = pneg %p56
        $region53: #{_lambda_.6} parent=50 // pred_check_branch
          %253 = sbr.rel (%p251) target = $region55
        $region54: #{_lambda_.6} parent=50 // pred_region
          _
        $region55: #{_lambda_.6} parent=50 // pred_fallthru
          _
        %s254 = sand.u32 %s43, 1
        %s255 = sand.u32 %s43, 1
        %s256 = smul.addr %s255, 128
        %s257 = scalar_lea.vmem [#allocation3], %s256
        %p258 = pneg %p56
        %p259 = pneg %p53
        %s260 = smul.u32 64, %s21
        %s261 = smul.u32 2, %s20
        %p262 = scmp.lt.s32.totalorder %s260, 255
        %s263 = scalar_select %p262, %s260, 255
        %p264 = scmp.lt.s32.totalorder %s261, 1
        %s265 = scalar_select %p264, %s261, 1
        %s266 = smul.addr %s263, 2
        %s267 = sadd.s32 %s265, %s266
        %s268 = smul.addr %s267, 8
        %s269 = scalar_lea.vmem %s1, %s268
        %p270 = pneg %p84
        %p271 = pneg %p81
        %s272 = smul.u32 2, %s20
        %p273 = scmp.lt.s32.totalorder %s272, 1
        %s274 = scalar_select %p273, %s272, 1
        %s275 = scalar_lea.vmem %s2, %s274
        %p276 = pneg %p110
        %p277 = pneg %p107
        %p278 = pneg %p138
        %p279 = pneg %p135
        %s280 = smul.u32 4, %s19
        %s281 = smul.u32 2, %s20
        %p282 = scmp.lt.s32.totalorder %s280, 3
        %s283 = scalar_select %p282, %s280, 3
        %p284 = scmp.lt.s32.totalorder %s281, 1
        %s285 = scalar_select %p284, %s281, 1
        %s286 = smul.addr %s283, 2
        %s287 = sadd.s32 %s285, %s286
        %s288 = smul.addr %s287, 8
        %s289 = scalar_lea.vmem %s3, %s288
        %s290 = smul.u32 4, %s19
        %s291 = smul.u32 4, %s21
        %s292 = smul.u32 64, %s21
        %s293 = smul.u32 2, %s20
        %p294 = scmp.lt.s32.totalorder %s292, 255
        %s295 = scalar_select %p294, %s292, 255
        %p296 = scmp.lt.s32.totalorder %s293, 1
        %s297 = scalar_select %p296, %s293, 1
        %s298 = smul.addr %s295, 2
        %s299 = sadd.s32 %s297, %s298
        %s300 = smul.addr %s299, 8
        %s301 = scalar_lea.vmem %s1, %s300
        %s302 = smul.u32 64, %s21
        %s303 = smul.u32 2, %s20
        %s304 = smul.u32 2, %s20
        %p305 = scmp.lt.s32.totalorder %s304, 1
        %s306 = scalar_select %p305, %s304, 1
        %s307 = scalar_lea.vmem %s2, %s306
        %s308 = smul.u32 2, %s20
        %s309 = smul.u32 4, %s19
        %s310 = smul.u32 2, %s20
        %p311 = scmp.lt.s32.totalorder %s309, 3
        %s312 = scalar_select %p311, %s309, 3
        %p313 = scmp.lt.s32.totalorder %s310, 1
        %s314 = scalar_select %p313, %s310, 1
        %s315 = smul.addr %s312, 2
        %s316 = sadd.s32 %s314, %s315
        %s317 = smul.addr %s316, 8
        %s318 = scalar_lea.vmem %s3, %s317
        %s319 = smul.u32 4, %s19
        %s320 = smul.u32 2, %s20
        %p321 = scmp.eq.s32.totalorder %s21, 0
        // Predicated region
        $region56: #{_lambda_.6} parent=50 // pred_check
          %p322 = pneg %p321
        $region57: #{_lambda_.6} parent=50 // pred_check_branch
          %324 = sbr.rel (%p322) target = $region59
        $region58: #{_lambda_.6} parent=50 // pred_region
          %325 = vst [vmem:[#allocation2] sm:$0xff] 0.0
          %326 = vst [vmem:[#allocation2 + $0x8] sm:$0xff] 0.0
          %327 = vst [vmem:[#allocation2 + $0x10] sm:$0xff] 0.0
          %328 = vst [vmem:[#allocation2 + $0x18] sm:$0xff] 0.0
          %329 = vst [vmem:[#allocation2 + $0x20] sm:$0xff] 0.0
          %330 = vst [vmem:[#allocation2 + $0x28] sm:$0xff] 0.0
          %331 = vst [vmem:[#allocation2 + $0x30] sm:$0xff] 0.0
          %332 = vst [vmem:[#allocation2 + $0x38] sm:$0xff] 0.0
        $region59: #{_lambda_.6} parent=50 // pred_fallthru
          _
        %v333 = vld [vmem:[#allocation2] sm:$0xff]
        %v334 = vld [vmem:[#allocation2 + $0x8] sm:$0xff]
        %v335 = vld [vmem:[#allocation2 + $0x10] sm:$0xff]
        %v336 = vld [vmem:[#allocation2 + $0x18] sm:$0xff]
        %v337 = vld [vmem:[#allocation2 + $0x20] sm:$0xff]
        %v338 = vld [vmem:[#allocation2 + $0x28] sm:$0xff]
        %v339 = vld [vmem:[#allocation2 + $0x30] sm:$0xff]
        %v340 = vld [vmem:[#allocation2 + $0x38] sm:$0xff]
        %v341 = vld [vmem:[%s250] sm:$0xff]
        %v342 = vld [vmem:[%s250 + $0x8] sm:$0xff]
        %v343 = vld [vmem:[%s250 + $0x10] sm:$0xff]
        %v344 = vld [vmem:[%s250 + $0x18] sm:$0xff]
        %v345 = vld [vmem:[%s250 + $0x20] sm:$0xff]
        %v346 = vld [vmem:[%s250 + $0x28] sm:$0xff]
        %v347 = vld [vmem:[%s250 + $0x30] sm:$0xff]
        %v348 = vld [vmem:[%s250 + $0x38] sm:$0xff]
        %v349 = vld [vmem:[%s250 + $0x40] sm:$0xff]
        %v350 = vld [vmem:[%s250 + $0x48] sm:$0xff]
        %v351 = vld [vmem:[%s250 + $0x50] sm:$0xff]
        %v352 = vld [vmem:[%s250 + $0x58] sm:$0xff]
        %v353 = vld [vmem:[%s250 + $0x60] sm:$0xff]
        %v354 = vld [vmem:[%s250 + $0x68] sm:$0xff]
        %v355 = vld [vmem:[%s250 + $0x70] sm:$0xff]
        %v356 = vld [vmem:[%s250 + $0x78] sm:$0xff]
        %v357 = vld [vmem:[%s301] sm:$0xff]
        %v358 = vld [vmem:[%s301 + $0x8] sm:$0xff]
        %v359 = vld [vmem:[%s301 + $0x10] sm:$0xff]
        %v360 = vld [vmem:[%s301 + $0x18] sm:$0xff]
        %v361 = vld [vmem:[%s301 + $0x20] sm:$0xff]
        %v362 = vld [vmem:[%s301 + $0x28] sm:$0xff]
        %v363 = vld [vmem:[%s301 + $0x30] sm:$0xff]
        %v364 = vld [vmem:[%s301 + $0x38] sm:$0xff]
        %v365 = vld [vmem:[%s301 + $0x40] sm:$0xff]
        %v366 = vld [vmem:[%s301 + $0x48] sm:$0xff]
        %v367 = vld [vmem:[%s301 + $0x50] sm:$0xff]
        %v368 = vld [vmem:[%s301 + $0x58] sm:$0xff]
        %v369 = vld [vmem:[%s301 + $0x60] sm:$0xff]
        %v370 = vld [vmem:[%s301 + $0x68] sm:$0xff]
        %v371 = vld [vmem:[%s301 + $0x70] sm:$0xff]
        %v372 = vld [vmem:[%s301 + $0x78] sm:$0xff]
        %v373 = vld [vmem:[%s301 + $0x80] sm:$0xff]
        %v374 = vld [vmem:[%s301 + $0x88] sm:$0xff]
        %v375 = vld [vmem:[%s301 + $0x90] sm:$0xff]
        %v376 = vld [vmem:[%s301 + $0x98] sm:$0xff]
        %v377 = vld [vmem:[%s301 + $0xa0] sm:$0xff]
        %v378 = vld [vmem:[%s301 + $0xa8] sm:$0xff]
        %v379 = vld [vmem:[%s301 + $0xb0] sm:$0xff]
        %v380 = vld [vmem:[%s301 + $0xb8] sm:$0xff]
        %v381 = vld [vmem:[%s301 + $0xc0] sm:$0xff]
        %v382 = vld [vmem:[%s301 + $0xc8] sm:$0xff]
        %v383 = vld [vmem:[%s301 + $0xd0] sm:$0xff]
        %v384 = vld [vmem:[%s301 + $0xd8] sm:$0xff]
        %v385 = vld [vmem:[%s301 + $0xe0] sm:$0xff]
        %v386 = vld [vmem:[%s301 + $0xe8] sm:$0xff]
        %v387 = vld [vmem:[%s301 + $0xf0] sm:$0xff]
        %v388 = vld [vmem:[%s301 + $0xf8] sm:$0xff]
        %v389 = vld [vmem:[%s301 + $0x100] sm:$0xff]
        %v390 = vld [vmem:[%s301 + $0x108] sm:$0xff]
        %v391 = vld [vmem:[%s301 + $0x110] sm:$0xff]
        %v392 = vld [vmem:[%s301 + $0x118] sm:$0xff]
        %v393 = vld [vmem:[%s301 + $0x120] sm:$0xff]
        %v394 = vld [vmem:[%s301 + $0x128] sm:$0xff]
        %v395 = vld [vmem:[%s301 + $0x130] sm:$0xff]
        %v396 = vld [vmem:[%s301 + $0x138] sm:$0xff]
        %v397 = vld [vmem:[%s301 + $0x140] sm:$0xff]
        %v398 = vld [vmem:[%s301 + $0x148] sm:$0xff]
        %v399 = vld [vmem:[%s301 + $0x150] sm:$0xff]
        %v400 = vld [vmem:[%s301 + $0x158] sm:$0xff]
        %v401 = vld [vmem:[%s301 + $0x160] sm:$0xff]
        %v402 = vld [vmem:[%s301 + $0x168] sm:$0xff]
        %v403 = vld [vmem:[%s301 + $0x170] sm:$0xff]
        %v404 = vld [vmem:[%s301 + $0x178] sm:$0xff]
        %v405 = vld [vmem:[%s301 + $0x180] sm:$0xff]
        %v406 = vld [vmem:[%s301 + $0x188] sm:$0xff]
        %v407 = vld [vmem:[%s301 + $0x190] sm:$0xff]
        %v408 = vld [vmem:[%s301 + $0x198] sm:$0xff]
        %v409 = vld [vmem:[%s301 + $0x1a0] sm:$0xff]
        %v410 = vld [vmem:[%s301 + $0x1a8] sm:$0xff]
        %v411 = vld [vmem:[%s301 + $0x1b0] sm:$0xff]
        %v412 = vld [vmem:[%s301 + $0x1b8] sm:$0xff]
        %v413 = vld [vmem:[%s301 + $0x1c0] sm:$0xff]
        %v414 = vld [vmem:[%s301 + $0x1c8] sm:$0xff]
        %v415 = vld [vmem:[%s301 + $0x1d0] sm:$0xff]
        %v416 = vld [vmem:[%s301 + $0x1d8] sm:$0xff]
        %v417 = vld [vmem:[%s301 + $0x1e0] sm:$0xff]
        %v418 = vld [vmem:[%s301 + $0x1e8] sm:$0xff]
        %v419 = vld [vmem:[%s301 + $0x1f0] sm:$0xff]
        %v420 = vld [vmem:[%s301 + $0x1f8] sm:$0xff]
        %v421 = vld [vmem:[%s301 + $0x200] sm:$0xff]
        %v422 = vld [vmem:[%s301 + $0x208] sm:$0xff]
        %v423 = vld [vmem:[%s301 + $0x210] sm:$0xff]
        %v424 = vld [vmem:[%s301 + $0x218] sm:$0xff]
        %v425 = vld [vmem:[%s301 + $0x220] sm:$0xff]
        %v426 = vld [vmem:[%s301 + $0x228] sm:$0xff]
        %v427 = vld [vmem:[%s301 + $0x230] sm:$0xff]
        %v428 = vld [vmem:[%s301 + $0x238] sm:$0xff]
        %v429 = vld [vmem:[%s301 + $0x240] sm:$0xff]
        %v430 = vld [vmem:[%s301 + $0x248] sm:$0xff]
        %v431 = vld [vmem:[%s301 + $0x250] sm:$0xff]
        %v432 = vld [vmem:[%s301 + $0x258] sm:$0xff]
        %v433 = vld [vmem:[%s301 + $0x260] sm:$0xff]
        %v434 = vld [vmem:[%s301 + $0x268] sm:$0xff]
        %v435 = vld [vmem:[%s301 + $0x270] sm:$0xff]
        %v436 = vld [vmem:[%s301 + $0x278] sm:$0xff]
        %v437 = vld [vmem:[%s301 + $0x280] sm:$0xff]
        %v438 = vld [vmem:[%s301 + $0x288] sm:$0xff]
        %v439 = vld [vmem:[%s301 + $0x290] sm:$0xff]
        %v440 = vld [vmem:[%s301 + $0x298] sm:$0xff]
        %v441 = vld [vmem:[%s301 + $0x2a0] sm:$0xff]
        %v442 = vld [vmem:[%s301 + $0x2a8] sm:$0xff]
        %v443 = vld [vmem:[%s301 + $0x2b0] sm:$0xff]
        %v444 = vld [vmem:[%s301 + $0x2b8] sm:$0xff]
        %v445 = vld [vmem:[%s301 + $0x2c0] sm:$0xff]
        %v446 = vld [vmem:[%s301 + $0x2c8] sm:$0xff]
        %v447 = vld [vmem:[%s301 + $0x2d0] sm:$0xff]
        %v448 = vld [vmem:[%s301 + $0x2d8] sm:$0xff]
        %v449 = vld [vmem:[%s301 + $0x2e0] sm:$0xff]
        %v450 = vld [vmem:[%s301 + $0x2e8] sm:$0xff]
        %v451 = vld [vmem:[%s301 + $0x2f0] sm:$0xff]
        %v452 = vld [vmem:[%s301 + $0x2f8] sm:$0xff]
        %v453 = vld [vmem:[%s301 + $0x300] sm:$0xff]
        %v454 = vld [vmem:[%s301 + $0x308] sm:$0xff]
        %v455 = vld [vmem:[%s301 + $0x310] sm:$0xff]
        %v456 = vld [vmem:[%s301 + $0x318] sm:$0xff]
        %v457 = vld [vmem:[%s301 + $0x320] sm:$0xff]
        %v458 = vld [vmem:[%s301 + $0x328] sm:$0xff]
        %v459 = vld [vmem:[%s301 + $0x330] sm:$0xff]
        %v460 = vld [vmem:[%s301 + $0x338] sm:$0xff]
        %v461 = vld [vmem:[%s301 + $0x340] sm:$0xff]
        %v462 = vld [vmem:[%s301 + $0x348] sm:$0xff]
        %v463 = vld [vmem:[%s301 + $0x350] sm:$0xff]
        %v464 = vld [vmem:[%s301 + $0x358] sm:$0xff]
        %v465 = vld [vmem:[%s301 + $0x360] sm:$0xff]
        %v466 = vld [vmem:[%s301 + $0x368] sm:$0xff]
        %v467 = vld [vmem:[%s301 + $0x370] sm:$0xff]
        %v468 = vld [vmem:[%s301 + $0x378] sm:$0xff]
        %v469 = vld [vmem:[%s301 + $0x380] sm:$0xff]
        %v470 = vld [vmem:[%s301 + $0x388] sm:$0xff]
        %v471 = vld [vmem:[%s301 + $0x390] sm:$0xff]
        %v472 = vld [vmem:[%s301 + $0x398] sm:$0xff]
        %v473 = vld [vmem:[%s301 + $0x3a0] sm:$0xff]
        %v474 = vld [vmem:[%s301 + $0x3a8] sm:$0xff]
        %v475 = vld [vmem:[%s301 + $0x3b0] sm:$0xff]
        %v476 = vld [vmem:[%s301 + $0x3b8] sm:$0xff]
        %v477 = vld [vmem:[%s301 + $0x3c0] sm:$0xff]
        %v478 = vld [vmem:[%s301 + $0x3c8] sm:$0xff]
        %v479 = vld [vmem:[%s301 + $0x3d0] sm:$0xff]
        %v480 = vld [vmem:[%s301 + $0x3d8] sm:$0xff]
        %v481 = vld [vmem:[%s301 + $0x3e0] sm:$0xff]
        %v482 = vld [vmem:[%s301 + $0x3e8] sm:$0xff]
        %v483 = vld [vmem:[%s301 + $0x3f0] sm:$0xff]
        %v484 = vld [vmem:[%s301 + $0x3f8] sm:$0xff]
        %485 = vmatpush.msra.mxu0 %v387
        %486 = vmatpush.msra.mxu0 %v385
        %487 = vmatpush.msra.mxu0 %v383
        %488 = vmatpush.msra.mxu0 %v381
        %489 = vmatpush.msra.mxu0 %v379
        %490 = vmatpush.msra.mxu0 %v377
        %491 = vmatpush.msra.mxu0 %v375
        %492 = vmatpush.msra.mxu0 %v373
        %493 = vmatpush.msra.mxu0 %v371
        %494 = vmatpush.msra.mxu0 %v369
        %495 = vmatpush.msra.mxu0 %v367
        %496 = vmatpush.msra.mxu0 %v365
        %497 = vmatpush.msra.mxu0 %v363
        %498 = vmatpush.msra.mxu0 %v361
        %499 = vmatpush.msra.mxu0 %v359
        %500 = vmatpush.msra.mxu0 %v357
        %501 = vmatmul.f32.gmra.mxu0 %v341
        %v502 = vpop.f32.mrf.mxu0
        %v503 = vadd.f32 0.0, %v502
        %504 = vmatmul.f32.gmra.mxu0 %v345
        %v505 = vpop.f32.mrf.mxu0
        %v506 = vadd.f32 0.0, %v505
        %507 = vmatmul.f32.gmra.mxu0 %v349
        %v508 = vpop.f32.mrf.mxu0
        %v509 = vadd.f32 0.0, %v508
        %510 = vmatmul.f32.gmra.mxu0 %v353
        %v511 = vpop.f32.mrf.mxu0
        %v512 = vadd.f32 0.0, %v511
        %513 = vdwg.mxu0
        %514 = vmatpush.msra.mxu0 %v419
        %515 = vmatpush.msra.mxu0 %v417
        %516 = vmatpush.msra.mxu0 %v415
        %517 = vmatpush.msra.mxu0 %v413
        %518 = vmatpush.msra.mxu0 %v411
        %519 = vmatpush.msra.mxu0 %v409
        %520 = vmatpush.msra.mxu0 %v407
        %521 = vmatpush.msra.mxu0 %v405
        %522 = vmatpush.msra.mxu0 %v403
        %523 = vmatpush.msra.mxu0 %v401
        %524 = vmatpush.msra.mxu0 %v399
        %525 = vmatpush.msra.mxu0 %v397
        %526 = vmatpush.msra.mxu0 %v395
        %527 = vmatpush.msra.mxu0 %v393
        %528 = vmatpush.msra.mxu0 %v391
        %529 = vmatpush.msra.mxu0 %v389
        %530 = vmatmul.f32.gmra.mxu0 %v342
        %v531 = vpop.f32.mrf.mxu0
        %v532 = vadd.f32 %v503, %v531
        %533 = vmatmul.f32.gmra.mxu0 %v346
        %v534 = vpop.f32.mrf.mxu0
        %v535 = vadd.f32 %v506, %v534
        %536 = vmatmul.f32.gmra.mxu0 %v350
        %v537 = vpop.f32.mrf.mxu0
        %v538 = vadd.f32 %v509, %v537
        %539 = vmatmul.f32.gmra.mxu0 %v354
        %v540 = vpop.f32.mrf.mxu0
        %v541 = vadd.f32 %v512, %v540
        %542 = vdwg.mxu0
        %543 = vmatpush.msra.mxu0 %v451
        %544 = vmatpush.msra.mxu0 %v449
        %545 = vmatpush.msra.mxu0 %v447
        %546 = vmatpush.msra.mxu0 %v445
        %547 = vmatpush.msra.mxu0 %v443
        %548 = vmatpush.msra.mxu0 %v441
        %549 = vmatpush.msra.mxu0 %v439
        %550 = vmatpush.msra.mxu0 %v437
        %551 = vmatpush.msra.mxu0 %v435
        %552 = vmatpush.msra.mxu0 %v433
        %553 = vmatpush.msra.mxu0 %v431
        %554 = vmatpush.msra.mxu0 %v429
        %555 = vmatpush.msra.mxu0 %v427
        %556 = vmatpush.msra.mxu0 %v425
        %557 = vmatpush.msra.mxu0 %v423
        %558 = vmatpush.msra.mxu0 %v421
        %559 = vmatmul.f32.gmra.mxu0 %v343
        %v560 = vpop.f32.mrf.mxu0
        %v561 = vadd.f32 %v532, %v560
        %562 = vmatmul.f32.gmra.mxu0 %v347
        %v563 = vpop.f32.mrf.mxu0
        %v564 = vadd.f32 %v535, %v563
        %565 = vmatmul.f32.gmra.mxu0 %v351
        %v566 = vpop.f32.mrf.mxu0
        %v567 = vadd.f32 %v538, %v566
        %568 = vmatmul.f32.gmra.mxu0 %v355
        %v569 = vpop.f32.mrf.mxu0
        %v570 = vadd.f32 %v541, %v569
        %571 = vdwg.mxu0
        %572 = vmatpush.msra.mxu0 %v483
        %573 = vmatpush.msra.mxu0 %v481
        %574 = vmatpush.msra.mxu0 %v479
        %575 = vmatpush.msra.mxu0 %v477
        %576 = vmatpush.msra.mxu0 %v475
        %577 = vmatpush.msra.mxu0 %v473
        %578 = vmatpush.msra.mxu0 %v471
        %579 = vmatpush.msra.mxu0 %v469
        %580 = vmatpush.msra.mxu0 %v467
        %581 = vmatpush.msra.mxu0 %v465
        %582 = vmatpush.msra.mxu0 %v463
        %583 = vmatpush.msra.mxu0 %v461
        %584 = vmatpush.msra.mxu0 %v459
        %585 = vmatpush.msra.mxu0 %v457
        %586 = vmatpush.msra.mxu0 %v455
        %587 = vmatpush.msra.mxu0 %v453
        %588 = vmatmul.f32.gmra.mxu0 %v344
        %v589 = vpop.f32.mrf.mxu0
        %v590 = vadd.f32 %v561, %v589
        %591 = vmatmul.f32.gmra.mxu0 %v348
        %v592 = vpop.f32.mrf.mxu0
        %v593 = vadd.f32 %v564, %v592
        %594 = vmatmul.f32.gmra.mxu0 %v352
        %v595 = vpop.f32.mrf.mxu0
        %v596 = vadd.f32 %v567, %v595
        %597 = vmatmul.f32.gmra.mxu0 %v356
        %v598 = vpop.f32.mrf.mxu0
        %v599 = vadd.f32 %v570, %v598
        %600 = vdwg.mxu0
        %601 = vmatpush.msra.mxu0 %v388
        %602 = vmatpush.msra.mxu0 %v386
        %603 = vmatpush.msra.mxu0 %v384
        %604 = vmatpush.msra.mxu0 %v382
        %605 = vmatpush.msra.mxu0 %v380
        %606 = vmatpush.msra.mxu0 %v378
        %607 = vmatpush.msra.mxu0 %v376
        %608 = vmatpush.msra.mxu0 %v374
        %609 = vmatpush.msra.mxu0 %v372
        %610 = vmatpush.msra.mxu0 %v370
        %611 = vmatpush.msra.mxu0 %v368
        %612 = vmatpush.msra.mxu0 %v366
        %613 = vmatpush.msra.mxu0 %v364
        %614 = vmatpush.msra.mxu0 %v362
        %615 = vmatpush.msra.mxu0 %v360
        %616 = vmatpush.msra.mxu0 %v358
        %617 = vmatmul.f32.gmra.mxu0 %v341
        %v618 = vpop.f32.mrf.mxu0
        %v619 = vadd.f32 0.0, %v618
        %620 = vmatmul.f32.gmra.mxu0 %v345
        %v621 = vpop.f32.mrf.mxu0
        %v622 = vadd.f32 0.0, %v621
        %623 = vmatmul.f32.gmra.mxu0 %v349
        %v624 = vpop.f32.mrf.mxu0
        %v625 = vadd.f32 0.0, %v624
        %626 = vmatmul.f32.gmra.mxu0 %v353
        %v627 = vpop.f32.mrf.mxu0
        %v628 = vadd.f32 0.0, %v627
        %629 = vdwg.mxu0
        %630 = vmatpush.msra.mxu0 %v420
        %631 = vmatpush.msra.mxu0 %v418
        %632 = vmatpush.msra.mxu0 %v416
        %633 = vmatpush.msra.mxu0 %v414
        %634 = vmatpush.msra.mxu0 %v412
        %635 = vmatpush.msra.mxu0 %v410
        %636 = vmatpush.msra.mxu0 %v408
        %637 = vmatpush.msra.mxu0 %v406
        %638 = vmatpush.msra.mxu0 %v404
        %639 = vmatpush.msra.mxu0 %v402
        %640 = vmatpush.msra.mxu0 %v400
        %641 = vmatpush.msra.mxu0 %v398
        %642 = vmatpush.msra.mxu0 %v396
        %643 = vmatpush.msra.mxu0 %v394
        %644 = vmatpush.msra.mxu0 %v392
        %645 = vmatpush.msra.mxu0 %v390
        %646 = vmatmul.f32.gmra.mxu0 %v342
        %v647 = vpop.f32.mrf.mxu0
        %v648 = vadd.f32 %v619, %v647
        %649 = vmatmul.f32.gmra.mxu0 %v346
        %v650 = vpop.f32.mrf.mxu0
        %v651 = vadd.f32 %v622, %v650
        %652 = vmatmul.f32.gmra.mxu0 %v350
        %v653 = vpop.f32.mrf.mxu0
        %v654 = vadd.f32 %v625, %v653
        %655 = vmatmul.f32.gmra.mxu0 %v354
        %v656 = vpop.f32.mrf.mxu0
        %v657 = vadd.f32 %v628, %v656
        %658 = vdwg.mxu0
        %659 = vmatpush.msra.mxu0 %v452
        %660 = vmatpush.msra.mxu0 %v450
        %661 = vmatpush.msra.mxu0 %v448
        %662 = vmatpush.msra.mxu0 %v446
        %663 = vmatpush.msra.mxu0 %v444
        %664 = vmatpush.msra.mxu0 %v442
        %665 = vmatpush.msra.mxu0 %v440
        %666 = vmatpush.msra.mxu0 %v438
        %667 = vmatpush.msra.mxu0 %v436
        %668 = vmatpush.msra.mxu0 %v434
        %669 = vmatpush.msra.mxu0 %v432
        %670 = vmatpush.msra.mxu0 %v430
        %671 = vmatpush.msra.mxu0 %v428
        %672 = vmatpush.msra.mxu0 %v426
        %673 = vmatpush.msra.mxu0 %v424
        %674 = vmatpush.msra.mxu0 %v422
        %675 = vmatmul.f32.gmra.mxu0 %v343
        %v676 = vpop.f32.mrf.mxu0
        %v677 = vadd.f32 %v648, %v676
        %678 = vmatmul.f32.gmra.mxu0 %v347
        %v679 = vpop.f32.mrf.mxu0
        %v680 = vadd.f32 %v651, %v679
        %681 = vmatmul.f32.gmra.mxu0 %v351
        %v682 = vpop.f32.mrf.mxu0
        %v683 = vadd.f32 %v654, %v682
        %684 = vmatmul.f32.gmra.mxu0 %v355
        %v685 = vpop.f32.mrf.mxu0
        %v686 = vadd.f32 %v657, %v685
        %687 = vdwg.mxu0
        %688 = vmatpush.msra.mxu0 %v484
        %689 = vmatpush.msra.mxu0 %v482
        %690 = vmatpush.msra.mxu0 %v480
        %691 = vmatpush.msra.mxu0 %v478
        %692 = vmatpush.msra.mxu0 %v476
        %693 = vmatpush.msra.mxu0 %v474
        %694 = vmatpush.msra.mxu0 %v472
        %695 = vmatpush.msra.mxu0 %v470
        %696 = vmatpush.msra.mxu0 %v468
        %697 = vmatpush.msra.mxu0 %v466
        %698 = vmatpush.msra.mxu0 %v464
        %699 = vmatpush.msra.mxu0 %v462
        %700 = vmatpush.msra.mxu0 %v460
        %701 = vmatpush.msra.mxu0 %v458
        %702 = vmatpush.msra.mxu0 %v456
        %703 = vmatpush.msra.mxu0 %v454
        %704 = vmatmul.f32.gmra.mxu0 %v344
        %v705 = vpop.f32.mrf.mxu0
        %v706 = vadd.f32 %v677, %v705
        %707 = vmatmul.f32.gmra.mxu0 %v348
        %v708 = vpop.f32.mrf.mxu0
        %v709 = vadd.f32 %v680, %v708
        %710 = vmatmul.f32.gmra.mxu0 %v352
        %v711 = vpop.f32.mrf.mxu0
        %v712 = vadd.f32 %v683, %v711
        %713 = vmatmul.f32.gmra.mxu0 %v356
        %v714 = vpop.f32.mrf.mxu0
        %v715 = vadd.f32 %v686, %v714
        %716 = vdwg.mxu0
        %v717 = vadd.f32 %v333, %v590
        %v718 = vadd.f32 %v334, %v706
        %v719 = vadd.f32 %v335, %v593
        %v720 = vadd.f32 %v336, %v709
        %v721 = vadd.f32 %v337, %v596
        %v722 = vadd.f32 %v338, %v712
        %v723 = vadd.f32 %v339, %v599
        %v724 = vadd.f32 %v340, %v715
        %725 = vst [vmem:[#allocation2] sm:$0xff] %v717
        %726 = vst [vmem:[#allocation2 + $0x8] sm:$0xff] %v718
        %727 = vst [vmem:[#allocation2 + $0x10] sm:$0xff] %v719
        %728 = vst [vmem:[#allocation2 + $0x18] sm:$0xff] %v720
        %729 = vst [vmem:[#allocation2 + $0x20] sm:$0xff] %v721
        %730 = vst [vmem:[#allocation2 + $0x28] sm:$0xff] %v722
        %731 = vst [vmem:[#allocation2 + $0x30] sm:$0xff] %v723
        %732 = vst [vmem:[#allocation2 + $0x38] sm:$0xff] %v724
        %p733 = scmp.eq.s32.totalorder %s21, 3
        // Predicated region
        $region60: #{_lambda_.6} parent=50 // pred_check
          %p734 = pneg %p733
        $region61: #{_lambda_.6} parent=50 // pred_check_branch
          %736 = sbr.rel (%p734) target = $region63
        $region62: #{_lambda_.6} parent=50 // pred_region
          %v737 = vld [vmem:[#allocation2] sm:$0xff]
          %v738 = vld [vmem:[#allocation2 + $0x8] sm:$0xff]
          %v739 = vld [vmem:[#allocation2 + $0x10] sm:$0xff]
          %v740 = vld [vmem:[#allocation2 + $0x18] sm:$0xff]
          %v741 = vld [vmem:[#allocation2 + $0x20] sm:$0xff]
          %v742 = vld [vmem:[#allocation2 + $0x28] sm:$0xff]
          %v743 = vld [vmem:[#allocation2 + $0x30] sm:$0xff]
          %v744 = vld [vmem:[#allocation2 + $0x38] sm:$0xff]
          %v745 = vld [vmem:[%s307] sm:$0x3]
          %v747 = vperm.slane %v745, 0
          %v748 = vperm.slane %v745, 1
          %v751 = vadd.f32 %v737, %v747
          %v752 = vadd.f32 %v738, %v748
          %v753 = vadd.f32 %v739, %v747
          %v754 = vadd.f32 %v740, %v748
          %v755 = vadd.f32 %v741, %v747
          %v756 = vadd.f32 %v742, %v748
          %v757 = vadd.f32 %v743, %v747
          %v758 = vadd.f32 %v744, %v748
          %v759 = vmax.f32 %v751, 0.0
          %v760 = vmax.f32 %v752, 0.0
          %v761 = vmax.f32 %v753, 0.0
          %v762 = vmax.f32 %v754, 0.0
          %v763 = vmax.f32 %v755, 0.0
          %v764 = vmax.f32 %v756, 0.0
          %v765 = vmax.f32 %v757, 0.0
          %v766 = vmax.f32 %v758, 0.0
          %767 = vst [vmem:[%s318] sm:$0xff] %v759
          %768 = vst [vmem:[%s318 + $0x8] sm:$0xff] %v760
          %769 = vst [vmem:[%s318 + $0x10] sm:$0xff] %v761
          %770 = vst [vmem:[%s318 + $0x18] sm:$0xff] %v762
          %771 = vst [vmem:[%s318 + $0x20] sm:$0xff] %v763
          %772 = vst [vmem:[%s318 + $0x28] sm:$0xff] %v764
          %773 = vst [vmem:[%s318 + $0x30] sm:$0xff] %v765
          %774 = vst [vmem:[%s318 + $0x38] sm:$0xff] %v766
        $region63: #{_lambda_.6} parent=50 // pred_fallthru
          _
        %s775 = smul.u32 4, %s19
        %s776 = smul.u32 2, %s20
        %p777 = scmp.lt.s32.totalorder %s775, 3
        %s778 = scalar_select %p777, %s775, 3
        %p779 = scmp.lt.s32.totalorder %s776, 1
        %s780 = scalar_select %p779, %s776, 1
        %s781 = smul.addr %s778, 2
        %s782 = sadd.s32 %s780, %s781
        %s783 = smul.addr %s782, 8
        %s784 = scalar_lea.vmem %s3, %s783
        // Predicated region
        $region64: #{_lambda_.6} parent=50 // pred_check
          %p785 = pneg %p135
        $region65: #{_lambda_.6} parent=50 // pred_check_branch
          %787 = sbr.rel (%p785) target = $region67
        $region66: #{_lambda_.6} parent=50 // pred_region
          %s788 = smul.u32 4, %s19
          %s789 = smul.u32 2, %s20
        $region67: #{_lambda_.6} parent=50 // pred_fallthru
          _
        // Predicated region
        $region68: #{_lambda_.6} parent=50 // pred_check
          %p790 = pneg %p135
        $region69: #{_lambda_.6} parent=50 // pred_check_branch
          %792 = sbr.rel (%p790) target = $region71
        $region70: #{_lambda_.6} parent=50 // pred_region
          %s793 = smul.u32 4, %s19
          %s794 = smul.u32 2, %s20
          %p795 = scmp.lt.s32.totalorder %s793, 3
          %s796 = scalar_select %p795, %s793, 3
          %p797 = scmp.lt.s32.totalorder %s794, 1
          %s798 = scalar_select %p797, %s794, 1
          %s799 = smul.addr %s796, 2
          %s800 = sadd.s32 %s798, %s799
          %s801 = smul.addr %s800, 8
          %s802 = scalar_lea.vmem %s3, %s801
        $region71: #{_lambda_.6} parent=50 // pred_fallthru
          _
      $region51: #{_lambda_.6} parent=5 // pred_fallthru
        _
      %p803 = scmp.le.s32.totalorder 2, %s9
      // Predicated region
      $region72: #{_lambda_.6} parent=5 // pred_check
        %p804 = pneg %p803
      $region73: #{_lambda_.6} parent=5 // pred_check_branch
        %806 = sbr.rel (%p804) target = $region75
      $region74: #{_lambda_.6} parent=5 // pred_region
        %s807 = ssub.s32 %s9, 2
      $region75: #{_lambda_.6} parent=5 // pred_fallthru
        _
    $region6: #{_lambda_.6} parent=1 // loop_footer
      %s13 = sadd.s32 1, %s9
    $region7: #{_lambda_.6} parent=1 // loop_footer_branch
      %8 = sbr.rel target = $region3
    $region8: #{_lambda_.6} parent=1 // loop_exit
      _

// kernel: _lambda_.7
$region0: #{_lambda_.7}
  #allocation0 [shape = 'u32[]', space=smem, size = 0x4, offset = 0x4, fixed_abs, tag = 'smem constant byte address 0x4 - core index']
  #allocation1 [shape = 'u32[72,128]{1,0:T(1,128)}', space=vmem, size = 0x9000, scoped, tag = 'internal scratch']
  %s0 = inlined_call_operand.vmem [shape: f32[2,16,256], index: 0, kind: input, shape index: {}]
  %s1 = inlined_call_operand.vmem [shape: f32[256,8], index: 1, kind: input, shape index: {}]
  %s2 = inlined_call_operand.vmem [shape: f32[1,8], index: 2, kind: input, shape index: {}]
  %s3 = inlined_call_operand.hbm [shape: f32[2,8], index: 3, kind: output, shape index: {}]
  %s4 = sld [smem:[#allocation0]]
  $region22: #{_lambda_.7} parent=0
    _
  %s6 = ssub.s32 1, %s4
  %s7 = scalar_select 0, %s6, %s4
  $region1: #{_lambda_.7} parent=0
    #allocation2 [shape = 'u8[1024]{0}', space=vmem, size = 0x400, scoped, tag = 'output window, operand 0, single buffered']
    #allocation3 [shape = 's32[1]{0}', space=sflag, size = 0x4, scoped, tag = 'scoped memory for _lambda_.7']
    %8 = vsyncpa [#allocation3], 0
    // Predicated region
    $region2: #{_lambda_.7} parent=1 // pred_check
      _
    $region3: #{_lambda_.7} parent=1 // pred_check_branch
      %10 = sbr.rel (0) target = $region5
    $region4: #{_lambda_.7} parent=1 // pred_region
      _
    $region5: #{_lambda_.7} parent=1 // pred_fallthru
      _
    // Predicated region
    $region6: #{_lambda_.7} parent=1 // pred_check
      _
    $region7: #{_lambda_.7} parent=1 // pred_check_branch
      %12 = sbr.rel (0) target = $region9
    $region8: #{_lambda_.7} parent=1 // pred_region
      _
    $region9: #{_lambda_.7} parent=1 // pred_fallthru
      _
    // Predicated region
    $region10: #{_lambda_.7} parent=1 // pred_check
      _
    $region11: #{_lambda_.7} parent=1 // pred_check_branch
      %14 = sbr.rel (0) target = $region13
    $region12: #{_lambda_.7} parent=1 // pred_region
      _
    $region13: #{_lambda_.7} parent=1 // pred_fallthru
      _
    %v15 = vld [vmem:[%s0] sm:$0xff]
    %v16 = vld [vmem:[%s0 + $0x8] sm:$0xff]
    %v17 = vld [vmem:[%s0 + $0x10] sm:$0xff]
    %v18 = vld [vmem:[%s0 + $0x18] sm:$0xff]
    %v19 = vld [vmem:[%s0 + $0x20] sm:$0xff]
    %v20 = vld [vmem:[%s0 + $0x28] sm:$0xff]
    %v21 = vld [vmem:[%s0 + $0x30] sm:$0xff]
    %v22 = vld [vmem:[%s0 + $0x38] sm:$0xff]
    %v23 = vadd.f32 %v15, %v17
    %v24 = vrot.slane %v23, 4
    %v25 = vadd.f32 %v23, %v24
    %v26 = vrot.slane %v25, 2
    %v27 = vadd.f32 %v25, %v26
    %v28 = vrot.slane %v27, 1
    %v29 = vadd.f32 %v27, %v28
    %v30 = vadd.f32 %v16, %v18
    %v31 = vrot.slane %v30, 4
    %v32 = vadd.f32 %v30, %v31
    %v33 = vrot.slane %v32, 2
    %v34 = vadd.f32 %v32, %v33
    %v35 = vrot.slane %v34, 1
    %v36 = vadd.f32 %v34, %v35
    %v37 = vadd.f32 %v19, %v21
    %v38 = vrot.slane %v37, 4
    %v39 = vadd.f32 %v37, %v38
    %v40 = vrot.slane %v39, 2
    %v41 = vadd.f32 %v39, %v40
    %v42 = vrot.slane %v41, 1
    %v43 = vadd.f32 %v41, %v42
    %v44 = vadd.f32 %v20, %v22
    %v45 = vrot.slane %v44, 4
    %v46 = vadd.f32 %v44, %v45
    %v47 = vrot.slane %v46, 2
    %v48 = vadd.f32 %v46, %v47
    %v49 = vrot.slane %v48, 1
    %v50 = vadd.f32 %v48, %v49
    %v51 = vmul.f32 %v29, 0.0625
    %v52 = vmul.f32 %v36, 0.0625
    %v53 = vmul.f32 %v43, 0.0625
    %v54 = vmul.f32 %v50, 0.0625
    %v55 = vld [vmem:[%s1] sm:$0xff]
    %v56 = vld [vmem:[%s1 + $0x8] sm:$0xff]
    %v57 = vld [vmem:[%s1 + $0x10] sm:$0xff]
    %v58 = vld [vmem:[%s1 + $0x18] sm:$0xff]
    %v59 = vld [vmem:[%s1 + $0x20] sm:$0xff]
    %v60 = vld [vmem:[%s1 + $0x28] sm:$0xff]
    %v61 = vld [vmem:[%s1 + $0x30] sm:$0xff]
    %v62 = vld [vmem:[%s1 + $0x38] sm:$0xff]
    %v63 = vld [vmem:[%s1 + $0x40] sm:$0xff]
    %v64 = vld [vmem:[%s1 + $0x48] sm:$0xff]
    %v65 = vld [vmem:[%s1 + $0x50] sm:$0xff]
    %v66 = vld [vmem:[%s1 + $0x58] sm:$0xff]
    %v67 = vld [vmem:[%s1 + $0x60] sm:$0xff]
    %v68 = vld [vmem:[%s1 + $0x68] sm:$0xff]
    %v69 = vld [vmem:[%s1 + $0x70] sm:$0xff]
    %v70 = vld [vmem:[%s1 + $0x78] sm:$0xff]
    %v71 = vld [vmem:[%s1 + $0x80] sm:$0xff]
    %v72 = vld [vmem:[%s1 + $0x88] sm:$0xff]
    %v73 = vld [vmem:[%s1 + $0x90] sm:$0xff]
    %v74 = vld [vmem:[%s1 + $0x98] sm:$0xff]
    %v75 = vld [vmem:[%s1 + $0xa0] sm:$0xff]
    %v76 = vld [vmem:[%s1 + $0xa8] sm:$0xff]
    %v77 = vld [vmem:[%s1 + $0xb0] sm:$0xff]
    %v78 = vld [vmem:[%s1 + $0xb8] sm:$0xff]
    %v79 = vld [vmem:[%s1 + $0xc0] sm:$0xff]
    %v80 = vld [vmem:[%s1 + $0xc8] sm:$0xff]
    %v81 = vld [vmem:[%s1 + $0xd0] sm:$0xff]
    %v82 = vld [vmem:[%s1 + $0xd8] sm:$0xff]
    %v83 = vld [vmem:[%s1 + $0xe0] sm:$0xff]
    %v84 = vld [vmem:[%s1 + $0xe8] sm:$0xff]
    %v85 = vld [vmem:[%s1 + $0xf0] sm:$0xff]
    %v86 = vld [vmem:[%s1 + $0xf8] sm:$0xff]
    %v87 = vld [vmem:[%s2] sm:$0x1]
    %v89 = vperm.slane %v87, 0
    %vm95 = vcmask 1041409
    %v96 = vsel %vm95, %v53, %v51
    %v97 = vsel %vm95, %v54, %v52
    %100 = vmatpush.msra.mxu0 %v70
    %101 = vmatpush.msra.mxu0 %v69
    %102 = vmatpush.msra.mxu0 %v68
    %103 = vmatpush.msra.mxu0 %v67
    %104 = vmatpush.msra.mxu0 %v66
    %105 = vmatpush.msra.mxu0 %v65
    %106 = vmatpush.msra.mxu0 %v64
    %107 = vmatpush.msra.mxu0 %v63
    %108 = vmatpush.msra.mxu0 %v62
    %109 = vmatpush.msra.mxu0 %v61
    %110 = vmatpush.msra.mxu0 %v60
    %111 = vmatpush.msra.mxu0 %v59
    %112 = vmatpush.msra.mxu0 %v58
    %113 = vmatpush.msra.mxu0 %v57
    %114 = vmatpush.msra.mxu0 %v56
    %115 = vmatpush.msra.mxu0 %v55
    %116 = vmatmul.f32.gmra.mxu0 %v96
    %v117 = vpop.f32.mrf.mxu0
    %v118 = vadd.f32 %v89, %v117
    %119 = vdwg.mxu0
    %120 = vmatpush.msra.mxu0 %v86
    %121 = vmatpush.msra.mxu0 %v85
    %122 = vmatpush.msra.mxu0 %v84
    %123 = vmatpush.msra.mxu0 %v83
    %124 = vmatpush.msra.mxu0 %v82
    %125 = vmatpush.msra.mxu0 %v81
    %126 = vmatpush.msra.mxu0 %v80
    %127 = vmatpush.msra.mxu0 %v79
    %128 = vmatpush.msra.mxu0 %v78
    %129 = vmatpush.msra.mxu0 %v77
    %130 = vmatpush.msra.mxu0 %v76
    %131 = vmatpush.msra.mxu0 %v75
    %132 = vmatpush.msra.mxu0 %v74
    %133 = vmatpush.msra.mxu0 %v73
    %134 = vmatpush.msra.mxu0 %v72
    %135 = vmatpush.msra.mxu0 %v71
    %136 = vmatmul.f32.gmra.mxu0 %v97
    %v137 = vpop.f32.mrf.mxu0
    %v138 = vadd.f32 %v118, %v137
    %139 = vdwg.mxu0
    %vm140 = vcmask 58368
    %141 = vst.msk [vmem:[#allocation2] sm:$0x3] %vm140, %v138
    // Predicated region
    $region14: #{_lambda_.7} parent=1 // pred_check
      _
    $region15: #{_lambda_.7} parent=1 // pred_check_branch
      %143 = sbr.rel (0) target = $region17
    $region16: #{_lambda_.7} parent=1 // pred_region
      %145 = vsyncadd [#allocation3], 0
      %s147 = sshll.u32 [#allocation2], 4
      %s148 = int_to_ptr.vmem [resolvable:$true] %s147
      %s149 = sshll.u32 %s3, 4
      %s150 = int_to_ptr.hbm [resolvable:$true] %s149
      %152 = dma.vmem_to_hbm [thread:$0]  %s148, 32, %s150, [#allocation3]
    $region17: #{_lambda_.7} parent=1 // pred_fallthru
      _
    // Predicated region
    $region18: #{_lambda_.7} parent=1 // pred_check
      _
    $region19: #{_lambda_.7} parent=1 // pred_check_branch
      %154 = sbr.rel (0) target = $region21
    $region20: #{_lambda_.7} parent=1 // pred_region
      %156 = dma.done [#allocation3], 32
    $region21: #{_lambda_.7} parent=1 // pred_fallthru
      _
    %157 = vsyncpa [#allocation3], 1

</llo_original>
